<compile_context>
chip_gen: v7x
topology: tpu7x:2x2x1
jax: 0.10.0
libtpu: 0.0.40
codegen_flags: <defaults>
</compile_context>

<pallas_src>
import functools

import jax
import jax.numpy as jnp
from jax import lax
from jax.experimental import pallas as pl
from jax.experimental.pallas import tpu as pltpu


# ---------------------------------------------------------------------------
# Encoder: conv(im2col matmul) + ReLU + GAP + Linear + ReLU + Dropout
# ---------------------------------------------------------------------------
def _encoder_kernel(patch_ref,   # (B_TILE*HW, CK_PAD)  bf16  lane-dense im2col patches
                    convw_ref,   # (CK_PAD, F)          bf16  conv weight, (kh,kw,c)-major rows
                    convb_ref,   # (1, F)               f32
                    fcw_ref,     # (F, E)               bf16  fc weight, pre-transposed
                    fcb_ref,     # (1, E)               f32
                    mask_ref,    # (B_TILE, E)          f32   dropout multiplier (1 or 0/2)
                    out_ref):    # (B_TILE, E)          f32
    bt = mask_ref.shape[0]
    hw = patch_ref.shape[0] // bt
    f = convw_ref.shape[1]

    # conv as ONE matmul, feature dim F in lanes, K padded to a full 128 lanes.
    fmap = jnp.dot(patch_ref[...], convw_ref[...],
                   preferred_element_type=jnp.float32)              # (bt*hw, F) f32
    fmap = jnp.maximum(fmap + convb_ref[...], 0.0)

    # global average pool: sublane reduction on the XLU (MXU-light kernel -> free slot).
    pooled = fmap.reshape(bt, hw, f).sum(axis=1) * (1.0 / hw)       # (bt, F) f32

    # head: Linear(feat -> embed) + ReLU + Dropout
    logits = jnp.dot(pooled.astype(jnp.bfloat16), fcw_ref[...],
                     preferred_element_type=jnp.float32) + fcb_ref[...]
    out_ref[...] = (jnp.maximum(logits, 0.0) * mask_ref[...]).astype(out_ref.dtype)


def _encoder_operands(params, C):
    """Host-side parameter plumbing shared by the kernel wrapper and the reference."""
    F = params["conv_w"].shape[0]
    E = params["fc_w"].shape[0]
    CK = 9 * C
    CK_PAD = max(128, -(-CK // 128) * 128)                     # pad contraction dim to 128 lanes
    wflat = params["conv_w"].transpose(2, 3, 1, 0).reshape(CK, F)          # (kh,kw,c)-major
    wflat = jnp.pad(wflat, ((0, CK_PAD - CK), (0, 0))).astype(jnp.bfloat16)
    convb = params["conv_b"].reshape(1, F).astype(jnp.float32)
    fcw = params["fc_w"].T.astype(jnp.bfloat16)                            # (F, E)
    fcb = params["fc_b"].reshape(1, E).astype(jnp.float32)
    return wflat, convb, fcw, fcb, CK_PAD, F, E


def _im2col_patches(images, ck_pad):
    """images [B, C, H, W] f32 -> lane-dense bf16 patches (B*H*W, CK_PAD). Layout plumbing."""
    B, C, H, W = images.shape
    x = jnp.pad(jnp.transpose(images, (0, 2, 3, 1)),
                ((0, 0), (1, 1), (1, 1), (0, 0)))                          # SAME pad, NHWC
    pieces = [x[:, kh:kh + H, kw:kw + W, :] for kh in range(3) for kw in range(3)]
    patches = jnp.concatenate(pieces, axis=-1).reshape(B * H * W, 9 * C)   # (kh,kw,c)-major cols
    patches = jnp.pad(patches, ((0, 0), (0, ck_pad - 9 * C)))
    return patches.astype(jnp.bfloat16)


def encoder_forward(images, params, dropout_mask, *, b_tile=16):
    """images: [B, C, H, W] f32 (NCHW).  Returns features [B, EMBED] f32."""
    B, C, H, W = images.shape
    B_TILE = min(b_tile, B)
    assert B % B_TILE == 0, "batch must be a multiple of the batch tile"
    wflat, convb, fcw, fcb, CK_PAD, F, E = _encoder_operands(params, C)
    HW = H * W
    patches = _im2col_patches(images, CK_PAD)                              # (B*HW, CK_PAD) bf16

    return pl.pallas_call(
        _encoder_kernel,
        out_shape=jax.ShapeDtypeStruct((B, E), jnp.float32),
        grid=(B // B_TILE,),
        in_specs=[
            pl.BlockSpec((B_TILE * HW, CK_PAD), lambda b: (b, 0)),
            pl.BlockSpec((CK_PAD, F), lambda b: (0, 0)),
            pl.BlockSpec((1, F), lambda b: (0, 0)),
            pl.BlockSpec((F, E), lambda b: (0, 0)),
            pl.BlockSpec((1, E), lambda b: (0, 0)),
            pl.BlockSpec((B_TILE, E), lambda b: (b, 0)),
        ],
        out_specs=pl.BlockSpec((B_TILE, E), lambda b: (b, 0)),
        compiler_params=pltpu.CompilerParams(
            dimension_semantics=("parallel",),
            vmem_limit_bytes=32 * 1024 * 1024),
    )(patches, wflat, convb, fcw, fcb, dropout_mask)


# ---------------------------------------------------------------------------
# Decoder: dropout(embeddings) -> stacked LSTM (in-kernel time loop) -> Linear(hidden, vocab)
# ---------------------------------------------------------------------------
def _decoder_kernel(xs_ref,    # (T1, B, E)        f32  features at t=0, caption embeddings after
                    mask_ref,  # (T1, B, E)        f32  dropout multiplier (ones at t=0)
                    wcat_ref,  # (L, E+H, 4H)      bf16 fused [w_ih.T ; w_hh.T]
                    b_ref,     # (L, 1, 4H)        f32  b_ih + b_hh
                    linw_ref,  # (H, V)            bf16
                    linb_ref,  # (1, V)            f32
                    out_ref,   # (T1, B, V)        f32
                    h_scr,     # VMEM (L, B, H)    f32
                    c_scr,     # VMEM (L, B, H)    f32
                    hall_scr,  # VMEM (T1, B, H)   f32  top-layer h for every timestep
                    *, num_layers, hidden):
    t1, b, _ = xs_ref.shape
    h_scr[...] = jnp.zeros_like(h_scr)
    c_scr[...] = jnp.zeros_like(c_scr)

    def step(t, carry):
        x = xs_ref[t] * mask_ref[t]                                   # (B, E) f32
        for layer in range(num_layers):                               # static unroll over layers
            # fused input+recurrent matmul: K = E+H = 256, bf16 operands, f32 accumulation
            xh = jnp.concatenate([x, h_scr[layer]], axis=-1).astype(jnp.bfloat16)
            gates = (jnp.dot(xh, wcat_ref[layer], preferred_element_type=jnp.float32)
                     + b_ref[layer])                                  # (B, 4H); PyTorch order i,f,g,o
            i_g = jax.nn.sigmoid(gates[:, 0 * hidden:1 * hidden])
            f_g = jax.nn.sigmoid(gates[:, 1 * hidden:2 * hidden])
            g_g = jnp.tanh(gates[:, 2 * hidden:3 * hidden])
            o_g = jax.nn.sigmoid(gates[:, 3 * hidden:4 * hidden])
            c_new = f_g * c_scr[layer] + i_g * g_g
            h_new = o_g * jnp.tanh(c_new)
            c_scr[layer] = c_new
            h_scr[layer] = h_new
            x = h_new
        hall_scr[t] = x
        return carry

    lax.fori_loop(0, t1, step, 0, unroll=(t1 <= 16))

    # one well-shaped vocab projection over ALL timesteps: M = T1*B
    hs = hall_scr[...].reshape(t1 * b, hidden).astype(jnp.bfloat16)
    logits = jnp.dot(hs, linw_ref[...], preferred_element_type=jnp.float32) + linb_ref[...]
    out_ref[...] = logits.reshape(t1, b, -1).astype(out_ref.dtype)    # lane-dense (T1, B, V)


def _decoder_operands(params):
    L = len(params["lstm"])
    E = params["embed"].shape[1]
    Hd = params["lstm"][0]["w_hh"].shape[1]
    assert E == Hd, "fused stacked-LSTM weights assume embed_size == hidden_size"
    wcat = jnp.stack(
        [jnp.concatenate([l["w_ih"].T, l["w_hh"].T], axis=0) for l in params["lstm"]],
        axis=0).astype(jnp.bfloat16)                                        # (L, E+H, 4H)
    bias = jnp.stack([(l["b_ih"] + l["b_hh"]).reshape(1, -1)
                      for l in params["lstm"]], axis=0).astype(jnp.float32)  # (L, 1, 4H)
    linw = params["lin_w"].T.astype(jnp.bfloat16)                            # (H, V)
    linb = params["lin_b"].reshape(1, -1).astype(jnp.float32)                # (1, V)
    return wcat, bias, linw, linb, L, E, Hd


def decoder_forward(features, captions, params, dropout_mask):
    """features: [B, E] f32; captions: [T, B] int32.  Returns logits [T+1, B, V] f32."""
    T, B = captions.shape
    wcat, bias, linw, linb, L, E, Hd = _decoder_operands(params)
    V = linw.shape[1]

    # Embedding gather + feature concat are wrapper-side layout plumbing / gather.
    emb = jnp.take(params["embed"], captions, axis=0)                        # (T, B, E)
    xs = jnp.concatenate([features[None], emb], axis=0)                      # (T+1, B, E)
    T1 = T + 1

    return pl.pallas_call(
        functools.partial(_decoder_kernel, num_layers=L, hidden=Hd),
        out_shape=jax.ShapeDtypeStruct((T1, B, V), jnp.float32),
        grid=(1,),                                     # single step: weights load once,
        in_specs=[                                     # recurrence loops inside the kernel
            pl.BlockSpec((T1, B, E), lambda i: (0, 0, 0)),
            pl.BlockSpec((T1, B, E), lambda i: (0, 0, 0)),
            pl.BlockSpec((L, E + Hd, 4 * Hd), lambda i: (0, 0, 0)),
            pl.BlockSpec((L, 1, 4 * Hd), lambda i: (0, 0, 0)),
            pl.BlockSpec((Hd, V), lambda i: (0, 0)),
            pl.BlockSpec((1, V), lambda i: (0, 0)),
        ],
        out_specs=pl.BlockSpec((T1, B, V), lambda i: (0, 0, 0)),
        scratch_shapes=[pltpu.VMEM((L, B, Hd), jnp.float32),
                        pltpu.VMEM((L, B, Hd), jnp.float32),
                        pltpu.VMEM((T1, B, Hd), jnp.float32)],
        compiler_params=pltpu.CompilerParams(
            dimension_semantics=("arbitrary",),
            vmem_limit_bytes=32 * 1024 * 1024),
    )(xs, dropout_mask, wcat, bias, linw, linb)


# ---------------------------------------------------------------------------
# Full module forward + dropout-mask plumbing
# ---------------------------------------------------------------------------
def make_dropout_masks(key, batch, embed, caption_len, training):
    """Inverted-dropout multipliers (p=0.5); eval mode -> all ones."""
    t1 = caption_len + 1
    if not training:
        return (jnp.ones((batch, embed), jnp.float32),
                jnp.ones((t1, batch, embed), jnp.float32))
    k_enc, k_dec = jax.random.split(key)
    enc = jax.random.bernoulli(k_enc, 0.5, (batch, embed)).astype(jnp.float32) * 2.0
    dec = jax.random.bernoulli(k_dec, 0.5, (caption_len, batch, embed)).astype(jnp.float32) * 2.0
    dec = jnp.concatenate([jnp.ones((1, batch, embed), jnp.float32), dec], axis=0)
    return enc, dec


def encoder_to_decoder_forward(images, captions, params, enc_mask, dec_mask):
    features = encoder_forward(images, params, enc_mask)
    return decoder_forward(features, captions, params, dec_mask)


# ---------------------------------------------------------------------------
# Pure-JAX references mirroring the kernel numerics (for correctness checks)
# ---------------------------------------------------------------------------
def _encoder_reference(images, params, mask):
    B, C, H, W = images.shape
    wflat, convb, fcw, fcb, CK_PAD, F, E = _encoder_operands(params, C)
    patches = _im2col_patches(images, CK_PAD)
    fmap = jnp.maximum(
        jnp.dot(patches, wflat, preferred_element_type=jnp.float32) + convb, 0.0)
    pooled = fmap.reshape(B, H * W, F).sum(axis=1) * (1.0 / (H * W))
    logits = jnp.dot(pooled.astype(jnp.bfloat16), fcw,
                     preferred_element_type=jnp.float32) + fcb
    return jnp.maximum(logits, 0.0) * mask


def _decoder_reference(features, captions, params, mask):
    wcat, bias, linw, linb, L, E, Hd = _decoder_operands(params)
    emb = jnp.take(params["embed"], captions, axis=0)
    xs = jnp.concatenate([features[None], emb], axis=0) * mask
    T1, B, _ = xs.shape
    h = jnp.zeros((L, B, Hd), jnp.float32)
    c = jnp.zeros((L, B, Hd), jnp.float32)
    hs = []
    for t in range(T1):
        x = xs[t]
        for layer in range(L):
            xh = jnp.concatenate([x, h[layer]], axis=-1).astype(jnp.bfloat16)
            gates = jnp.dot(xh, wcat[layer], preferred_element_type=jnp.float32) + bias[layer]
            i_g = jax.nn.sigmoid(gates[:, 0 * Hd:1 * Hd])
            f_g = jax.nn.sigmoid(gates[:, 1 * Hd:2 * Hd])
            g_g = jnp.tanh(gates[:, 2 * Hd:3 * Hd])
            o_g = jax.nn.sigmoid(gates[:, 3 * Hd:4 * Hd])
            c_new = f_g * c[layer] + i_g * g_g
            h_new = o_g * jnp.tanh(c_new)
            c = c.at[layer].set(c_new)
            h = h.at[layer].set(h_new)
            x = h_new
        hs.append(x)
    hcat = jnp.stack(hs, axis=0).reshape(T1 * B, Hd).astype(jnp.bfloat16)
    logits = jnp.dot(hcat, linw, preferred_element_type=jnp.float32) + linb
    return logits.reshape(T1, B, -1)


if __name__ == "__main__":
    # Small shapes consistent with the module (NCHW images, seq-first captions).
    B, C, H, W = 16, 3, 16, 16
    FEAT_DIM = 128     # stand-in for inception.fc.in_features
    EMBED = 128        # embed_size   (lane-dense: multiple of 128)
    HIDDEN = 128       # hidden_size
    VOCAB = 512        # vocab_size   (lane-dense: multiple of 128)
    LAYERS = 2         # num_layers
    T = 7              # caption length -> T+1 = 8 LSTM steps

    key = jax.random.PRNGKey(0)
    ks = jax.random.split(key, 12)

    images = jax.random.normal(ks[0], (B, C, H, W), jnp.float32)
    captions = jax.random.randint(ks[1], (T, B), 0, VOCAB, dtype=jnp.int32)

    def lstm_layer(k, in_dim):
        k1, k2, k3, k4 = jax.random.split(k, 4)
        return {"w_ih": 0.1 * jax.random.normal(k1, (4 * HIDDEN, in_dim), jnp.float32),
                "w_hh": 0.1 * jax.random.normal(k2, (4 * HIDDEN, HIDDEN), jnp.float32),
                "b_ih": 0.1 * jax.random.normal(k3, (4 * HIDDEN,), jnp.float32),
                "b_hh": 0.1 * jax.random.normal(k4, (4 * HIDDEN,), jnp.float32)}

    params = {
        "conv_w": 0.1 * jax.random.normal(ks[2], (FEAT_DIM, C, 3, 3), jnp.float32),
        "conv_b": 0.1 * jax.random.normal(ks[3], (FEAT_DIM,), jnp.float32),
        "fc_w":   0.1 * jax.random.normal(ks[4], (EMBED, FEAT_DIM), jnp.float32),
        "fc_b":   0.1 * jax.random.normal(ks[5], (EMBED,), jnp.float32),
        "embed":  0.1 * jax.random.normal(ks[6], (VOCAB, EMBED), jnp.float32),
        "lstm":   [lstm_layer(ks[7], EMBED), lstm_layer(ks[8], HIDDEN)][:LAYERS],
        "lin_w":  0.1 * jax.random.normal(ks[9], (VOCAB, HIDDEN), jnp.float32),
        "lin_b":  0.1 * jax.random.normal(ks[10], (VOCAB,), jnp.float32),
    }

    # ---- eval mode (dropout disabled): kernels vs pure-JAX reference ---------
    enc_mask, dec_mask = make_dropout_masks(ks[11], B, EMBED, T, training=False)
    out_eval = encoder_to_decoder_forward(images, captions, params, enc_mask, dec_mask)
    out_eval = jax.block_until_ready(out_eval)
    ref_eval = _decoder_reference(_encoder_reference(images, params, enc_mask),
                                  captions, params, dec_mask)
    assert out_eval.shape == (T + 1, B, VOCAB)
    assert jnp.allclose(out_eval, ref_eval, atol=5e-3, rtol=5e-3), "eval mismatch vs reference"

    # ---- train mode (Dropout(0.5) active; same masks fed to the reference) ---
    enc_mask, dec_mask = make_dropout_masks(ks[11], B, EMBED, T, training=True)
    out_train = encoder_to_decoder_forward(images, captions, params, enc_mask, dec_mask)
    out_train = jax.block_until_ready(out_train)
    ref_train = _decoder_reference(_encoder_reference(images, params, enc_mask),
                                   captions, params, dec_mask)
    assert out_train.shape == (T + 1, B, VOCAB)
    assert jnp.allclose(out_train, ref_train, atol=5e-3, rtol=5e-3), "train mismatch vs reference"

    print("KERNEL_OK")
</pallas_src>

<mosaic_0001>
module attributes {stable_mosaic.version = 11 : i64} {
  func.func @_encoder_kernel(%arg0: i32, %arg1: memref<4096x128xbf16, #tpu.memory_space<vmem>>, %arg2: memref<128x128xbf16, #tpu.memory_space<vmem>>, %arg3: memref<1x128xf32, #tpu.memory_space<vmem>>, %arg4: memref<128x128xbf16, #tpu.memory_space<vmem>>, %arg5: memref<1x128xf32, #tpu.memory_space<vmem>>, %arg6: memref<16x128xf32, #tpu.memory_space<vmem>>, %arg7: memref<16x128xf32, #tpu.memory_space<vmem>>) attributes {dimension_semantics = [#tpu.dimension_semantics<parallel>], iteration_bounds = array<i64: 1>, scalar_prefetch = 0 : i64, scratch_operands = 0 : i64, tpu.core_type = #tpu.core_type<tc>, window_params = [{transform_indices = @transform_0, window_bounds = array<i64: 4096, 128>}, {pipeline_mode = #tpu.pipeline_mode<synchronous>, transform_indices = @transform_1, window_bounds = array<i64: 128, 128>}, {pipeline_mode = #tpu.pipeline_mode<synchronous>, transform_indices = @transform_2, window_bounds = array<i64: 1, 128>}, {pipeline_mode = #tpu.pipeline_mode<synchronous>, transform_indices = @transform_3, window_bounds = array<i64: 128, 128>}, {pipeline_mode = #tpu.pipeline_mode<synchronous>, transform_indices = @transform_4, window_bounds = array<i64: 1, 128>}, {transform_indices = @transform_5, window_bounds = array<i64: 16, 128>}, {transform_indices = @transform_6, window_bounds = array<i64: 16, 128>}]} {
    %c0 = arith.constant 0 : index
    %c0_0 = arith.constant 0 : index
    %0 = vector.load %arg1[%c0, %c0_0] : memref<4096x128xbf16, #tpu.memory_space<vmem>>, vector<4096x128xbf16>
    %c0_1 = arith.constant 0 : index
    %c0_2 = arith.constant 0 : index
    %1 = vector.load %arg2[%c0_1, %c0_2] : memref<128x128xbf16, #tpu.memory_space<vmem>>, vector<128x128xbf16>
    %cst = arith.constant dense<0.000000e+00> : vector<4096x128xf32>
    %2 = tpu.matmul %0, %1, %cst {dimension_numbers = #tpu.dot_dimension_numbers<[1], [0], [0], [1], [0, 0, 1, 1], [], []>} : vector<4096x128xbf16>, vector<128x128xbf16>, vector<4096x128xf32> -> vector<4096x128xf32>
    %c0_3 = arith.constant 0 : index
    %c0_4 = arith.constant 0 : index
    %3 = vector.load %arg3[%c0_3, %c0_4] : memref<1x128xf32, #tpu.memory_space<vmem>>, vector<1x128xf32>
    %4 = vector.broadcast %3 : vector<1x128xf32> to vector<4096x128xf32>
    %5 = arith.addf %2, %4 : vector<4096x128xf32>
    %cst_5 = arith.constant 0.000000e+00 : f32
    %6 = vector.broadcast %cst_5 : f32 to vector<4096x128xf32>
    %7 = arith.maximumf %5, %6 : vector<4096x128xf32>
    %8 = vector.shape_cast %7 : vector<4096x128xf32> to vector<16x256x128xf32>
    %cst_6 = arith.constant dense<0.000000e+00> : vector<16x128xf32>
    %9 = vector.multi_reduction <add>, %8, %cst_6 [1] : vector<16x256x128xf32> to vector<16x128xf32>
    %cst_7 = arith.constant 3.906250e-03 : f32
    %10 = vector.broadcast %cst_7 : f32 to vector<16x128xf32>
    %11 = arith.mulf %9, %10 : vector<16x128xf32>
    %12 = arith.truncf %11 : vector<16x128xf32> to vector<16x128xbf16>
    %c0_8 = arith.constant 0 : index
    %c0_9 = arith.constant 0 : index
    %13 = vector.load %arg4[%c0_8, %c0_9] : memref<128x128xbf16, #tpu.memory_space<vmem>>, vector<128x128xbf16>
    %cst_10 = arith.constant dense<0.000000e+00> : vector<16x128xf32>
    %14 = tpu.matmul %12, %13, %cst_10 {dimension_numbers = #tpu.dot_dimension_numbers<[1], [0], [0], [1], [0, 0, 1, 1], [], []>} : vector<16x128xbf16>, vector<128x128xbf16>, vector<16x128xf32> -> vector<16x128xf32>
    %c0_11 = arith.constant 0 : index
    %c0_12 = arith.constant 0 : index
    %15 = vector.load %arg5[%c0_11, %c0_12] : memref<1x128xf32, #tpu.memory_space<vmem>>, vector<1x128xf32>
    %16 = vector.broadcast %15 : vector<1x128xf32> to vector<16x128xf32>
    %17 = arith.addf %14, %16 : vector<16x128xf32>
    %cst_13 = arith.constant 0.000000e+00 : f32
    %18 = vector.broadcast %cst_13 : f32 to vector<16x128xf32>
    %19 = arith.maximumf %17, %18 : vector<16x128xf32>
    %c0_14 = arith.constant 0 : index
    %c0_15 = arith.constant 0 : index
    %20 = vector.load %arg6[%c0_14, %c0_15] : memref<16x128xf32, #tpu.memory_space<vmem>>, vector<16x128xf32>
    %21 = arith.mulf %19, %20 : vector<16x128xf32>
    %c0_16 = arith.constant 0 : index
    %c0_17 = arith.constant 0 : index
    %22 = vector.load %arg7[%c0_16, %c0_17] : memref<16x128xf32, #tpu.memory_space<vmem>>, vector<16x128xf32>
    tpu.vector_store %arg7[%c0_16, %c0_17], %21 {strides = array<i32>} : memref<16x128xf32, #tpu.memory_space<vmem>>, vector<16x128xf32>,
    return
  }
  func.func @transform_0(%arg0: i32) -> (i32, i32) {
    %c0_i32 = arith.constant 0 : i32
    %c0_i32_0 = arith.constant 0 : i32
    return %arg0, %c0_i32 : i32, i32
  }
  func.func @transform_1(%arg0: i32) -> (i32, i32) {
    %c0_i32 = arith.constant 0 : i32
    %c0_i32_0 = arith.constant 0 : i32
    %c0_i32_1 = arith.constant 0 : i32
    return %c0_i32, %c0_i32_0 : i32, i32
  }
  func.func @transform_2(%arg0: i32) -> (i32, i32) {
    %c0_i32 = arith.constant 0 : i32
    %c0_i32_0 = arith.constant 0 : i32
    %c0_i32_1 = arith.constant 0 : i32
    return %c0_i32, %c0_i32_0 : i32, i32
  }
  func.func @transform_3(%arg0: i32) -> (i32, i32) {
    %c0_i32 = arith.constant 0 : i32
    %c0_i32_0 = arith.constant 0 : i32
    %c0_i32_1 = arith.constant 0 : i32
    return %c0_i32, %c0_i32_0 : i32, i32
  }
  func.func @transform_4(%arg0: i32) -> (i32, i32) {
    %c0_i32 = arith.constant 0 : i32
    %c0_i32_0 = arith.constant 0 : i32
    %c0_i32_1 = arith.constant 0 : i32
    return %c0_i32, %c0_i32_0 : i32, i32
  }
  func.func @transform_5(%arg0: i32) -> (i32, i32) {
    %c0_i32 = arith.constant 0 : i32
    %c0_i32_0 = arith.constant 0 : i32
    return %arg0, %c0_i32 : i32, i32
  }
  func.func @transform_6(%arg0: i32) -> (i32, i32) {
    %c0_i32 = arith.constant 0 : i32
    %c0_i32_0 = arith.constant 0 : i32
    return %arg0, %c0_i32 : i32, i32
  }
}

</mosaic_0001>

<llo_original>
// kernel: tpu_custom_call.1
$region0: #{tpu_custom_call.1}
  #allocation0 [shape = 'u32[]', space=smem, size = 0x4, offset = 0x4, fixed_abs, tag = 'smem constant byte address 0x4 - core index']
  #allocation1 [shape = 'u32[144,128]{1,0:T(1,128)}', space=vmem, size = 0x12000, scoped, tag = 'internal scratch']
  %s0 = inlined_call_operand.hbm [shape: bf16[4096,128], index: 0, kind: input, shape index: {}]
  %s1 = inlined_call_operand.hbm [shape: bf16[128,128], index: 1, kind: input, shape index: {}]
  %s2 = inlined_call_operand.vmem [shape: f32[1,128], index: 2, kind: input, shape index: {}]
  %s3 = inlined_call_operand.hbm [shape: bf16[128,128], index: 3, kind: input, shape index: {}]
  %s4 = inlined_call_operand.vmem [shape: f32[1,128], index: 4, kind: input, shape index: {}]
  %s5 = inlined_call_operand.vmem [shape: f32[16,128], index: 5, kind: input, shape index: {}]
  %s6 = inlined_call_operand.hbm [shape: f32[16,128], index: 6, kind: output, shape index: {}]
  %s7 = sld [smem:[#allocation0]]
  $region46: #{tpu_custom_call.1} parent=0
    _
  %s9 = ssub.s32 1, %s7
  %s10 = scalar_select 0, %s9, %s7
  $region1: #{tpu_custom_call.1} parent=0
    #allocation2 [shape = 'u8[1048576]{0}', space=vmem, size = 0x100000, scoped, tag = 'input window, operand 0, single buffered']
    #allocation3 [shape = 's32[1]{0}', space=sflag, size = 0x4, scoped, tag = 'scoped memory for tpu_custom_call.1']
    #allocation4 [shape = 's32[1]{0}', space=sflag, size = 0x4, scoped, tag = 'scoped memory for tpu_custom_call.1']
    #allocation5 [shape = 'u8[32768]{0}', space=vmem, size = 0x8000, scoped, tag = 'input window, operand 1, single buffered']
    #allocation6 [shape = 's32[1]{0}', space=sflag, size = 0x4, scoped, tag = 'scoped memory for tpu_custom_call.1']
    #allocation7 [shape = 'u8[32768]{0}', space=vmem, size = 0x8000, scoped, tag = 'input window, operand 3, single buffered']
    #allocation8 [shape = 'u8[8192]{0}', space=vmem, size = 0x2000, scoped, tag = 'output window, operand 0, single buffered']
    %11 = vsyncpa [#allocation3], 0
    %12 = vsyncpa [#allocation6], 0
    %13 = vsyncpa [#allocation4], 0
    // Predicated region
    $region2: #{tpu_custom_call.1} parent=1 // pred_check
      _
    $region3: #{tpu_custom_call.1} parent=1 // pred_check_branch
      %15 = sbr.rel (0) target = $region5
    $region4: #{tpu_custom_call.1} parent=1 // pred_region
      %s17 = ssub.s32 32768, 32768
      %18 = vsyncadd [#allocation3], %s17
      %s19 = sshll.u32 [#allocation2], 4
      %s20 = int_to_ptr.vmem [resolvable:$true] %s19
      %25 = dma.hbm_to_vmem [thread:$0]  %s0, 32768, %s20, [#allocation3], 64, 64, 4
    $region5: #{tpu_custom_call.1} parent=1 // pred_fallthru
      _
    // Predicated region
    $region6: #{tpu_custom_call.1} parent=1 // pred_check
      _
    $region7: #{tpu_custom_call.1} parent=1 // pred_check_branch
      %27 = sbr.rel (0) target = $region9
    $region8: #{tpu_custom_call.1} parent=1 // pred_region
      %s29 = ssub.s32 1024, 1024
      %30 = vsyncadd [#allocation6], %s29
      %s31 = sshll.u32 [#allocation5], 4
      %s32 = int_to_ptr.vmem [resolvable:$true] %s31
      %37 = dma.hbm_to_vmem [thread:$0]  %s1, 1024, %s32, [#allocation6], 64, 64, 4
    $region9: #{tpu_custom_call.1} parent=1 // pred_fallthru
      _
    // Predicated region
    $region10: #{tpu_custom_call.1} parent=1 // pred_check
      _
    $region11: #{tpu_custom_call.1} parent=1 // pred_check_branch
      %39 = sbr.rel (0) target = $region13
    $region12: #{tpu_custom_call.1} parent=1 // pred_region
      _
    $region13: #{tpu_custom_call.1} parent=1 // pred_fallthru
      _
    // Predicated region
    $region14: #{tpu_custom_call.1} parent=1 // pred_check
      _
    $region15: #{tpu_custom_call.1} parent=1 // pred_check_branch
      %41 = sbr.rel (0) target = $region17
    $region16: #{tpu_custom_call.1} parent=1 // pred_region
      %s43 = ssub.s32 1024, 1024
      %44 = vsyncadd [#allocation6], %s43
      %s45 = sshll.u32 [#allocation7], 4
      %s46 = int_to_ptr.vmem [resolvable:$true] %s45
      %51 = dma.hbm_to_vmem [thread:$0]  %s3, 1024, %s46, [#allocation6], 64, 64, 4
    $region17: #{tpu_custom_call.1} parent=1 // pred_fallthru
      _
    // Predicated region
    $region18: #{tpu_custom_call.1} parent=1 // pred_check
      _
    $region19: #{tpu_custom_call.1} parent=1 // pred_check_branch
      %53 = sbr.rel (0) target = $region21
    $region20: #{tpu_custom_call.1} parent=1 // pred_region
      _
    $region21: #{tpu_custom_call.1} parent=1 // pred_fallthru
      _
    // Predicated region
    $region22: #{tpu_custom_call.1} parent=1 // pred_check
      _
    $region23: #{tpu_custom_call.1} parent=1 // pred_check_branch
      %55 = sbr.rel (0) target = $region25
    $region24: #{tpu_custom_call.1} parent=1 // pred_region
      _
    $region25: #{tpu_custom_call.1} parent=1 // pred_fallthru
      _
    // Predicated region
    $region26: #{tpu_custom_call.1} parent=1 // pred_check
      _
    $region27: #{tpu_custom_call.1} parent=1 // pred_check_branch
      %57 = sbr.rel (0) target = $region29
    $region28: #{tpu_custom_call.1} parent=1 // pred_region
      %58 = dma.done [#allocation3], 32768
    $region29: #{tpu_custom_call.1} parent=1 // pred_fallthru
      _
    // Predicated region
    $region30: #{tpu_custom_call.1} parent=1 // pred_check
      _
    $region31: #{tpu_custom_call.1} parent=1 // pred_check_branch
      %60 = sbr.rel (0) target = $region33
    $region32: #{tpu_custom_call.1} parent=1 // pred_region
      %61 = dma.done [#allocation6], 1024
    $region33: #{tpu_custom_call.1} parent=1 // pred_fallthru
      _
    // Predicated region
    $region34: #{tpu_custom_call.1} parent=1 // pred_check
      _
    $region35: #{tpu_custom_call.1} parent=1 // pred_check_branch
      %63 = sbr.rel (0) target = $region37
    $region36: #{tpu_custom_call.1} parent=1 // pred_region
      %64 = dma.done [#allocation6], 1024
    $region37: #{tpu_custom_call.1} parent=1 // pred_fallthru
      _
    %v66 = vld [vmem:[#allocation2] sm:$0xf]
    %v67 = vld [vmem:[#allocation2 + $0x4] sm:$0xf]
    %v68 = vld [vmem:[#allocation2 + $0x8] sm:$0xf]
    %v69 = vld [vmem:[#allocation2 + $0xc] sm:$0xf]
    %v70 = vld [vmem:[#allocation2 + $0x10] sm:$0xf]
    %v71 = vld [vmem:[#allocation2 + $0x14] sm:$0xf]
    %v72 = vld [vmem:[#allocation2 + $0x18] sm:$0xf]
    %v73 = vld [vmem:[#allocation2 + $0x1c] sm:$0xf]
    %v74 = vld [vmem:[#allocation2 + $0x20] sm:$0xf]
    %v75 = vld [vmem:[#allocation2 + $0x24] sm:$0xf]
    %v76 = vld [vmem:[#allocation2 + $0x28] sm:$0xf]
    %v77 = vld [vmem:[#allocation2 + $0x2c] sm:$0xf]
    %v78 = vld [vmem:[#allocation2 + $0x30] sm:$0xf]
    %v79 = vld [vmem:[#allocation2 + $0x34] sm:$0xf]
    %v80 = vld [vmem:[#allocation2 + $0x38] sm:$0xf]
    %v81 = vld [vmem:[#allocation2 + $0x3c] sm:$0xf]
    %v82 = vld [vmem:[#allocation2 + $0x40] sm:$0xf]
    %v83 = vld [vmem:[#allocation2 + $0x44] sm:$0xf]
    %v84 = vld [vmem:[#allocation2 + $0x48] sm:$0xf]
    %v85 = vld [vmem:[#allocation2 + $0x4c] sm:$0xf]
    %v86 = vld [vmem:[#allocation2 + $0x50] sm:$0xf]
    %v87 = vld [vmem:[#allocation2 + $0x54] sm:$0xf]
    %v88 = vld [vmem:[#allocation2 + $0x58] sm:$0xf]
    %v89 = vld [vmem:[#allocation2 + $0x5c] sm:$0xf]
    %v90 = vld [vmem:[#allocation2 + $0x60] sm:$0xf]
    %v91 = vld [vmem:[#allocation2 + $0x64] sm:$0xf]
    %v92 = vld [vmem:[#allocation2 + $0x68] sm:$0xf]
    %v93 = vld [vmem:[#allocation2 + $0x6c] sm:$0xf]
    %v94 = vld [vmem:[#allocation2 + $0x70] sm:$0xf]
    %v95 = vld [vmem:[#allocation2 + $0x74] sm:$0xf]
    %v96 = vld [vmem:[#allocation2 + $0x78] sm:$0xf]
    %v97 = vld [vmem:[#allocation2 + $0x7c] sm:$0xf]
    %v98 = vld [vmem:[#allocation2 + $0x80] sm:$0xf]
    %v99 = vld [vmem:[#allocation2 + $0x84] sm:$0xf]
    %v100 = vld [vmem:[#allocation2 + $0x88] sm:$0xf]
    %v101 = vld [vmem:[#allocation2 + $0x8c] sm:$0xf]
    %v102 = vld [vmem:[#allocation2 + $0x90] sm:$0xf]
    %v103 = vld [vmem:[#allocation2 + $0x94] sm:$0xf]
    %v104 = vld [vmem:[#allocation2 + $0x98] sm:$0xf]
    %v105 = vld [vmem:[#allocation2 + $0x9c] sm:$0xf]
    %v106 = vld [vmem:[#allocation2 + $0xa0] sm:$0xf]
    %v107 = vld [vmem:[#allocation2 + $0xa4] sm:$0xf]
    %v108 = vld [vmem:[#allocation2 + $0xa8] sm:$0xf]
    %v109 = vld [vmem:[#allocation2 + $0xac] sm:$0xf]
    %v110 = vld [vmem:[#allocation2 + $0xb0] sm:$0xf]
    %v111 = vld [vmem:[#allocation2 + $0xb4] sm:$0xf]
    %v112 = vld [vmem:[#allocation2 + $0xb8] sm:$0xf]
    %v113 = vld [vmem:[#allocation2 + $0xbc] sm:$0xf]
    %v114 = vld [vmem:[#allocation2 + $0xc0] sm:$0xf]
    %v115 = vld [vmem:[#allocation2 + $0xc4] sm:$0xf]
    %v116 = vld [vmem:[#allocation2 + $0xc8] sm:$0xf]
    %v117 = vld [vmem:[#allocation2 + $0xcc] sm:$0xf]
    %v118 = vld [vmem:[#allocation2 + $0xd0] sm:$0xf]
    %v119 = vld [vmem:[#allocation2 + $0xd4] sm:$0xf]
    %v120 = vld [vmem:[#allocation2 + $0xd8] sm:$0xf]
    %v121 = vld [vmem:[#allocation2 + $0xdc] sm:$0xf]
    %v122 = vld [vmem:[#allocation2 + $0xe0] sm:$0xf]
    %v123 = vld [vmem:[#allocation2 + $0xe4] sm:$0xf]
    %v124 = vld [vmem:[#allocation2 + $0xe8] sm:$0xf]
    %v125 = vld [vmem:[#allocation2 + $0xec] sm:$0xf]
    %v126 = vld [vmem:[#allocation2 + $0xf0] sm:$0xf]
    %v127 = vld [vmem:[#allocation2 + $0xf4] sm:$0xf]
    %v128 = vld [vmem:[#allocation2 + $0xf8] sm:$0xf]
    %v129 = vld [vmem:[#allocation2 + $0xfc] sm:$0xf]
    %v130 = vld [vmem:[#allocation2 + $0x100] sm:$0xf]
    %v131 = vld [vmem:[#allocation2 + $0x104] sm:$0xf]
    %v132 = vld [vmem:[#allocation2 + $0x108] sm:$0xf]
    %v133 = vld [vmem:[#allocation2 + $0x10c] sm:$0xf]
    %v134 = vld [vmem:[#allocation2 + $0x110] sm:$0xf]
    %v135 = vld [vmem:[#allocation2 + $0x114] sm:$0xf]
    %v136 = vld [vmem:[#allocation2 + $0x118] sm:$0xf]
    %v137 = vld [vmem:[#allocation2 + $0x11c] sm:$0xf]
    %v138 = vld [vmem:[#allocation2 + $0x120] sm:$0xf]
    %v139 = vld [vmem:[#allocation2 + $0x124] sm:$0xf]
    %v140 = vld [vmem:[#allocation2 + $0x128] sm:$0xf]
    %v141 = vld [vmem:[#allocation2 + $0x12c] sm:$0xf]
    %v142 = vld [vmem:[#allocation2 + $0x130] sm:$0xf]
    %v143 = vld [vmem:[#allocation2 + $0x134] sm:$0xf]
    %v144 = vld [vmem:[#allocation2 + $0x138] sm:$0xf]
    %v145 = vld [vmem:[#allocation2 + $0x13c] sm:$0xf]
    %v146 = vld [vmem:[#allocation2 + $0x140] sm:$0xf]
    %v147 = vld [vmem:[#allocation2 + $0x144] sm:$0xf]
    %v148 = vld [vmem:[#allocation2 + $0x148] sm:$0xf]
    %v149 = vld [vmem:[#allocation2 + $0x14c] sm:$0xf]
    %v150 = vld [vmem:[#allocation2 + $0x150] sm:$0xf]
    %v151 = vld [vmem:[#allocation2 + $0x154] sm:$0xf]
    %v152 = vld [vmem:[#allocation2 + $0x158] sm:$0xf]
    %v153 = vld [vmem:[#allocation2 + $0x15c] sm:$0xf]
    %v154 = vld [vmem:[#allocation2 + $0x160] sm:$0xf]
    %v155 = vld [vmem:[#allocation2 + $0x164] sm:$0xf]
    %v156 = vld [vmem:[#allocation2 + $0x168] sm:$0xf]
    %v157 = vld [vmem:[#allocation2 + $0x16c] sm:$0xf]
    %v158 = vld [vmem:[#allocation2 + $0x170] sm:$0xf]
    %v159 = vld [vmem:[#allocation2 + $0x174] sm:$0xf]
    %v160 = vld [vmem:[#allocation2 + $0x178] sm:$0xf]
    %v161 = vld [vmem:[#allocation2 + $0x17c] sm:$0xf]
    %v162 = vld [vmem:[#allocation2 + $0x180] sm:$0xf]
    %v163 = vld [vmem:[#allocation2 + $0x184] sm:$0xf]
    %v164 = vld [vmem:[#allocation2 + $0x188] sm:$0xf]
    %v165 = vld [vmem:[#allocation2 + $0x18c] sm:$0xf]
    %v166 = vld [vmem:[#allocation2 + $0x190] sm:$0xf]
    %v167 = vld [vmem:[#allocation2 + $0x194] sm:$0xf]
    %v168 = vld [vmem:[#allocation2 + $0x198] sm:$0xf]
    %v169 = vld [vmem:[#allocation2 + $0x19c] sm:$0xf]
    %v170 = vld [vmem:[#allocation2 + $0x1a0] sm:$0xf]
    %v171 = vld [vmem:[#allocation2 + $0x1a4] sm:$0xf]
    %v172 = vld [vmem:[#allocation2 + $0x1a8] sm:$0xf]
    %v173 = vld [vmem:[#allocation2 + $0x1ac] sm:$0xf]
    %v174 = vld [vmem:[#allocation2 + $0x1b0] sm:$0xf]
    %v175 = vld [vmem:[#allocation2 + $0x1b4] sm:$0xf]
    %v176 = vld [vmem:[#allocation2 + $0x1b8] sm:$0xf]
    %v177 = vld [vmem:[#allocation2 + $0x1bc] sm:$0xf]
    %v178 = vld [vmem:[#allocation2 + $0x1c0] sm:$0xf]
    %v179 = vld [vmem:[#allocation2 + $0x1c4] sm:$0xf]
    %v180 = vld [vmem:[#allocation2 + $0x1c8] sm:$0xf]
    %v181 = vld [vmem:[#allocation2 + $0x1cc] sm:$0xf]
    %v182 = vld [vmem:[#allocation2 + $0x1d0] sm:$0xf]
    %v183 = vld [vmem:[#allocation2 + $0x1d4] sm:$0xf]
    %v184 = vld [vmem:[#allocation2 + $0x1d8] sm:$0xf]
    %v185 = vld [vmem:[#allocation2 + $0x1dc] sm:$0xf]
    %v186 = vld [vmem:[#allocation2 + $0x1e0] sm:$0xf]
    %v187 = vld [vmem:[#allocation2 + $0x1e4] sm:$0xf]
    %v188 = vld [vmem:[#allocation2 + $0x1e8] sm:$0xf]
    %v189 = vld [vmem:[#allocation2 + $0x1ec] sm:$0xf]
    %v190 = vld [vmem:[#allocation2 + $0x1f0] sm:$0xf]
    %v191 = vld [vmem:[#allocation2 + $0x1f4] sm:$0xf]
    %v192 = vld [vmem:[#allocation2 + $0x1f8] sm:$0xf]
    %v193 = vld [vmem:[#allocation2 + $0x1fc] sm:$0xf]
    %v194 = vld [vmem:[#allocation2 + $0x200] sm:$0xf]
    %v195 = vld [vmem:[#allocation2 + $0x204] sm:$0xf]
    %v196 = vld [vmem:[#allocation2 + $0x208] sm:$0xf]
    %v197 = vld [vmem:[#allocation2 + $0x20c] sm:$0xf]
    %v198 = vld [vmem:[#allocation2 + $0x210] sm:$0xf]
    %v199 = vld [vmem:[#allocation2 + $0x214] sm:$0xf]
    %v200 = vld [vmem:[#allocation2 + $0x218] sm:$0xf]
    %v201 = vld [vmem:[#allocation2 + $0x21c] sm:$0xf]
    %v202 = vld [vmem:[#allocation2 + $0x220] sm:$0xf]
    %v203 = vld [vmem:[#allocation2 + $0x224] sm:$0xf]
    %v204 = vld [vmem:[#allocation2 + $0x228] sm:$0xf]
    %v205 = vld [vmem:[#allocation2 + $0x22c] sm:$0xf]
    %v206 = vld [vmem:[#allocation2 + $0x230] sm:$0xf]
    %v207 = vld [vmem:[#allocation2 + $0x234] sm:$0xf]
    %v208 = vld [vmem:[#allocation2 + $0x238] sm:$0xf]
    %v209 = vld [vmem:[#allocation2 + $0x23c] sm:$0xf]
    %v210 = vld [vmem:[#allocation2 + $0x240] sm:$0xf]
    %v211 = vld [vmem:[#allocation2 + $0x244] sm:$0xf]
    %v212 = vld [vmem:[#allocation2 + $0x248] sm:$0xf]
    %v213 = vld [vmem:[#allocation2 + $0x24c] sm:$0xf]
    %v214 = vld [vmem:[#allocation2 + $0x250] sm:$0xf]
    %v215 = vld [vmem:[#allocation2 + $0x254] sm:$0xf]
    %v216 = vld [vmem:[#allocation2 + $0x258] sm:$0xf]
    %v217 = vld [vmem:[#allocation2 + $0x25c] sm:$0xf]
    %v218 = vld [vmem:[#allocation2 + $0x260] sm:$0xf]
    %v219 = vld [vmem:[#allocation2 + $0x264] sm:$0xf]
    %v220 = vld [vmem:[#allocation2 + $0x268] sm:$0xf]
    %v221 = vld [vmem:[#allocation2 + $0x26c] sm:$0xf]
    %v222 = vld [vmem:[#allocation2 + $0x270] sm:$0xf]
    %v223 = vld [vmem:[#allocation2 + $0x274] sm:$0xf]
    %v224 = vld [vmem:[#allocation2 + $0x278] sm:$0xf]
    %v225 = vld [vmem:[#allocation2 + $0x27c] sm:$0xf]
    %v226 = vld [vmem:[#allocation2 + $0x280] sm:$0xf]
    %v227 = vld [vmem:[#allocation2 + $0x284] sm:$0xf]
    %v228 = vld [vmem:[#allocation2 + $0x288] sm:$0xf]
    %v229 = vld [vmem:[#allocation2 + $0x28c] sm:$0xf]
    %v230 = vld [vmem:[#allocation2 + $0x290] sm:$0xf]
    %v231 = vld [vmem:[#allocation2 + $0x294] sm:$0xf]
    %v232 = vld [vmem:[#allocation2 + $0x298] sm:$0xf]
    %v233 = vld [vmem:[#allocation2 + $0x29c] sm:$0xf]
    %v234 = vld [vmem:[#allocation2 + $0x2a0] sm:$0xf]
    %v235 = vld [vmem:[#allocation2 + $0x2a4] sm:$0xf]
    %v236 = vld [vmem:[#allocation2 + $0x2a8] sm:$0xf]
    %v237 = vld [vmem:[#allocation2 + $0x2ac] sm:$0xf]
    %v238 = vld [vmem:[#allocation2 + $0x2b0] sm:$0xf]
    %v239 = vld [vmem:[#allocation2 + $0x2b4] sm:$0xf]
    %v240 = vld [vmem:[#allocation2 + $0x2b8] sm:$0xf]
    %v241 = vld [vmem:[#allocation2 + $0x2bc] sm:$0xf]
    %v242 = vld [vmem:[#allocation2 + $0x2c0] sm:$0xf]
    %v243 = vld [vmem:[#allocation2 + $0x2c4] sm:$0xf]
    %v244 = vld [vmem:[#allocation2 + $0x2c8] sm:$0xf]
    %v245 = vld [vmem:[#allocation2 + $0x2cc] sm:$0xf]
    %v246 = vld [vmem:[#allocation2 + $0x2d0] sm:$0xf]
    %v247 = vld [vmem:[#allocation2 + $0x2d4] sm:$0xf]
    %v248 = vld [vmem:[#allocation2 + $0x2d8] sm:$0xf]
    %v249 = vld [vmem:[#allocation2 + $0x2dc] sm:$0xf]
    %v250 = vld [vmem:[#allocation2 + $0x2e0] sm:$0xf]
    %v251 = vld [vmem:[#allocation2 + $0x2e4] sm:$0xf]
    %v252 = vld [vmem:[#allocation2 + $0x2e8] sm:$0xf]
    %v253 = vld [vmem:[#allocation2 + $0x2ec] sm:$0xf]
    %v254 = vld [vmem:[#allocation2 + $0x2f0] sm:$0xf]
    %v255 = vld [vmem:[#allocation2 + $0x2f4] sm:$0xf]
    %v256 = vld [vmem:[#allocation2 + $0x2f8] sm:$0xf]
    %v257 = vld [vmem:[#allocation2 + $0x2fc] sm:$0xf]
    %v258 = vld [vmem:[#allocation2 + $0x300] sm:$0xf]
    %v259 = vld [vmem:[#allocation2 + $0x304] sm:$0xf]
    %v260 = vld [vmem:[#allocation2 + $0x308] sm:$0xf]
    %v261 = vld [vmem:[#allocation2 + $0x30c] sm:$0xf]
    %v262 = vld [vmem:[#allocation2 + $0x310] sm:$0xf]
    %v263 = vld [vmem:[#allocation2 + $0x314] sm:$0xf]
    %v264 = vld [vmem:[#allocation2 + $0x318] sm:$0xf]
    %v265 = vld [vmem:[#allocation2 + $0x31c] sm:$0xf]
    %v266 = vld [vmem:[#allocation2 + $0x320] sm:$0xf]
    %v267 = vld [vmem:[#allocation2 + $0x324] sm:$0xf]
    %v268 = vld [vmem:[#allocation2 + $0x328] sm:$0xf]
    %v269 = vld [vmem:[#allocation2 + $0x32c] sm:$0xf]
    %v270 = vld [vmem:[#allocation2 + $0x330] sm:$0xf]
    %v271 = vld [vmem:[#allocation2 + $0x334] sm:$0xf]
    %v272 = vld [vmem:[#allocation2 + $0x338] sm:$0xf]
    %v273 = vld [vmem:[#allocation2 + $0x33c] sm:$0xf]
    %v274 = vld [vmem:[#allocation2 + $0x340] sm:$0xf]
    %v275 = vld [vmem:[#allocation2 + $0x344] sm:$0xf]
    %v276 = vld [vmem:[#allocation2 + $0x348] sm:$0xf]
    %v277 = vld [vmem:[#allocation2 + $0x34c] sm:$0xf]
    %v278 = vld [vmem:[#allocation2 + $0x350] sm:$0xf]
    %v279 = vld [vmem:[#allocation2 + $0x354] sm:$0xf]
    %v280 = vld [vmem:[#allocation2 + $0x358] sm:$0xf]
    %v281 = vld [vmem:[#allocation2 + $0x35c] sm:$0xf]
    %v282 = vld [vmem:[#allocation2 + $0x360] sm:$0xf]
    %v283 = vld [vmem:[#allocation2 + $0x364] sm:$0xf]
    %v284 = vld [vmem:[#allocation2 + $0x368] sm:$0xf]
    %v285 = vld [vmem:[#allocation2 + $0x36c] sm:$0xf]
    %v286 = vld [vmem:[#allocation2 + $0x370] sm:$0xf]
    %v287 = vld [vmem:[#allocation2 + $0x374] sm:$0xf]
    %v288 = vld [vmem:[#allocation2 + $0x378] sm:$0xf]
    %v289 = vld [vmem:[#allocation2 + $0x37c] sm:$0xf]
    %v290 = vld [vmem:[#allocation2 + $0x380] sm:$0xf]
    %v291 = vld [vmem:[#allocation2 + $0x384] sm:$0xf]
    %v292 = vld [vmem:[#allocation2 + $0x388] sm:$0xf]
    %v293 = vld [vmem:[#allocation2 + $0x38c] sm:$0xf]
    %v294 = vld [vmem:[#allocation2 + $0x390] sm:$0xf]
    %v295 = vld [vmem:[#allocation2 + $0x394] sm:$0xf]
    %v296 = vld [vmem:[#allocation2 + $0x398] sm:$0xf]
    %v297 = vld [vmem:[#allocation2 + $0x39c] sm:$0xf]
    %v298 = vld [vmem:[#allocation2 + $0x3a0] sm:$0xf]
    %v299 = vld [vmem:[#allocation2 + $0x3a4] sm:$0xf]
    %v300 = vld [vmem:[#allocation2 + $0x3a8] sm:$0xf]
    %v301 = vld [vmem:[#allocation2 + $0x3ac] sm:$0xf]
    %v302 = vld [vmem:[#allocation2 + $0x3b0] sm:$0xf]
    %v303 = vld [vmem:[#allocation2 + $0x3b4] sm:$0xf]
    %v304 = vld [vmem:[#allocation2 + $0x3b8] sm:$0xf]
    %v305 = vld [vmem:[#allocation2 + $0x3bc] sm:$0xf]
    %v306 = vld [vmem:[#allocation2 + $0x3c0] sm:$0xf]
    %v307 = vld [vmem:[#allocation2 + $0x3c4] sm:$0xf]
    %v308 = vld [vmem:[#allocation2 + $0x3c8] sm:$0xf]
    %v309 = vld [vmem:[#allocation2 + $0x3cc] sm:$0xf]
    %v310 = vld [vmem:[#allocation2 + $0x3d0] sm:$0xf]
    %v311 = vld [vmem:[#allocation2 + $0x3d4] sm:$0xf]
    %v312 = vld [vmem:[#allocation2 + $0x3d8] sm:$0xf]
    %v313 = vld [vmem:[#allocation2 + $0x3dc] sm:$0xf]
    %v314 = vld [vmem:[#allocation2 + $0x3e0] sm:$0xf]
    %v315 = vld [vmem:[#allocation2 + $0x3e4] sm:$0xf]
    %v316 = vld [vmem:[#allocation2 + $0x3e8] sm:$0xf]
    %v317 = vld [vmem:[#allocation2 + $0x3ec] sm:$0xf]
    %v318 = vld [vmem:[#allocation2 + $0x3f0] sm:$0xf]
    %v319 = vld [vmem:[#allocation2 + $0x3f4] sm:$0xf]
    %v320 = vld [vmem:[#allocation2 + $0x3f8] sm:$0xf]
    %v321 = vld [vmem:[#allocation2 + $0x3fc] sm:$0xf]
    %v322 = vld [vmem:[#allocation2 + $0x400] sm:$0xf]
    %v323 = vld [vmem:[#allocation2 + $0x404] sm:$0xf]
    %v324 = vld [vmem:[#allocation2 + $0x408] sm:$0xf]
    %v325 = vld [vmem:[#allocation2 + $0x40c] sm:$0xf]
    %v326 = vld [vmem:[#allocation2 + $0x410] sm:$0xf]
    %v327 = vld [vmem:[#allocation2 + $0x414] sm:$0xf]
    %v328 = vld [vmem:[#allocation2 + $0x418] sm:$0xf]
    %v329 = vld [vmem:[#allocation2 + $0x41c] sm:$0xf]
    %v330 = vld [vmem:[#allocation2 + $0x420] sm:$0xf]
    %v331 = vld [vmem:[#allocation2 + $0x424] sm:$0xf]
    %v332 = vld [vmem:[#allocation2 + $0x428] sm:$0xf]
    %v333 = vld [vmem:[#allocation2 + $0x42c] sm:$0xf]
    %v334 = vld [vmem:[#allocation2 + $0x430] sm:$0xf]
    %v335 = vld [vmem:[#allocation2 + $0x434] sm:$0xf]
    %v336 = vld [vmem:[#allocation2 + $0x438] sm:$0xf]
    %v337 = vld [vmem:[#allocation2 + $0x43c] sm:$0xf]
    %v338 = vld [vmem:[#allocation2 + $0x440] sm:$0xf]
    %v339 = vld [vmem:[#allocation2 + $0x444] sm:$0xf]
    %v340 = vld [vmem:[#allocation2 + $0x448] sm:$0xf]
    %v341 = vld [vmem:[#allocation2 + $0x44c] sm:$0xf]
    %v342 = vld [vmem:[#allocation2 + $0x450] sm:$0xf]
    %v343 = vld [vmem:[#allocation2 + $0x454] sm:$0xf]
    %v344 = vld [vmem:[#allocation2 + $0x458] sm:$0xf]
    %v345 = vld [vmem:[#allocation2 + $0x45c] sm:$0xf]
    %v346 = vld [vmem:[#allocation2 + $0x460] sm:$0xf]
    %v347 = vld [vmem:[#allocation2 + $0x464] sm:$0xf]
    %v348 = vld [vmem:[#allocation2 + $0x468] sm:$0xf]
    %v349 = vld [vmem:[#allocation2 + $0x46c] sm:$0xf]
    %v350 = vld [vmem:[#allocation2 + $0x470] sm:$0xf]
    %v351 = vld [vmem:[#allocation2 + $0x474] sm:$0xf]
    %v352 = vld [vmem:[#allocation2 + $0x478] sm:$0xf]
    %v353 = vld [vmem:[#allocation2 + $0x47c] sm:$0xf]
    %v354 = vld [vmem:[#allocation2 + $0x480] sm:$0xf]
    %v355 = vld [vmem:[#allocation2 + $0x484] sm:$0xf]
    %v356 = vld [vmem:[#allocation2 + $0x488] sm:$0xf]
    %v357 = vld [vmem:[#allocation2 + $0x48c] sm:$0xf]
    %v358 = vld [vmem:[#allocation2 + $0x490] sm:$0xf]
    %v359 = vld [vmem:[#allocation2 + $0x494] sm:$0xf]
    %v360 = vld [vmem:[#allocation2 + $0x498] sm:$0xf]
    %v361 = vld [vmem:[#allocation2 + $0x49c] sm:$0xf]
    %v362 = vld [vmem:[#allocation2 + $0x4a0] sm:$0xf]
    %v363 = vld [vmem:[#allocation2 + $0x4a4] sm:$0xf]
    %v364 = vld [vmem:[#allocation2 + $0x4a8] sm:$0xf]
    %v365 = vld [vmem:[#allocation2 + $0x4ac] sm:$0xf]
    %v366 = vld [vmem:[#allocation2 + $0x4b0] sm:$0xf]
    %v367 = vld [vmem:[#allocation2 + $0x4b4] sm:$0xf]
    %v368 = vld [vmem:[#allocation2 + $0x4b8] sm:$0xf]
    %v369 = vld [vmem:[#allocation2 + $0x4bc] sm:$0xf]
    %v370 = vld [vmem:[#allocation2 + $0x4c0] sm:$0xf]
    %v371 = vld [vmem:[#allocation2 + $0x4c4] sm:$0xf]
    %v372 = vld [vmem:[#allocation2 + $0x4c8] sm:$0xf]
    %v373 = vld [vmem:[#allocation2 + $0x4cc] sm:$0xf]
    %v374 = vld [vmem:[#allocation2 + $0x4d0] sm:$0xf]
    %v375 = vld [vmem:[#allocation2 + $0x4d4] sm:$0xf]
    %v376 = vld [vmem:[#allocation2 + $0x4d8] sm:$0xf]
    %v377 = vld [vmem:[#allocation2 + $0x4dc] sm:$0xf]
    %v378 = vld [vmem:[#allocation2 + $0x4e0] sm:$0xf]
    %v379 = vld [vmem:[#allocation2 + $0x4e4] sm:$0xf]
    %v380 = vld [vmem:[#allocation2 + $0x4e8] sm:$0xf]
    %v381 = vld [vmem:[#allocation2 + $0x4ec] sm:$0xf]
    %v382 = vld [vmem:[#allocation2 + $0x4f0] sm:$0xf]
    %v383 = vld [vmem:[#allocation2 + $0x4f4] sm:$0xf]
    %v384 = vld [vmem:[#allocation2 + $0x4f8] sm:$0xf]
    %v385 = vld [vmem:[#allocation2 + $0x4fc] sm:$0xf]
    %v386 = vld [vmem:[#allocation2 + $0x500] sm:$0xf]
    %v387 = vld [vmem:[#allocation2 + $0x504] sm:$0xf]
    %v388 = vld [vmem:[#allocation2 + $0x508] sm:$0xf]
    %v389 = vld [vmem:[#allocation2 + $0x50c] sm:$0xf]
    %v390 = vld [vmem:[#allocation2 + $0x510] sm:$0xf]
    %v391 = vld [vmem:[#allocation2 + $0x514] sm:$0xf]
    %v392 = vld [vmem:[#allocation2 + $0x518] sm:$0xf]
    %v393 = vld [vmem:[#allocation2 + $0x51c] sm:$0xf]
    %v394 = vld [vmem:[#allocation2 + $0x520] sm:$0xf]
    %v395 = vld [vmem:[#allocation2 + $0x524] sm:$0xf]
    %v396 = vld [vmem:[#allocation2 + $0x528] sm:$0xf]
    %v397 = vld [vmem:[#allocation2 + $0x52c] sm:$0xf]
    %v398 = vld [vmem:[#allocation2 + $0x530] sm:$0xf]
    %v399 = vld [vmem:[#allocation2 + $0x534] sm:$0xf]
    %v400 = vld [vmem:[#allocation2 + $0x538] sm:$0xf]
    %v401 = vld [vmem:[#allocation2 + $0x53c] sm:$0xf]
    %v402 = vld [vmem:[#allocation2 + $0x540] sm:$0xf]
    %v403 = vld [vmem:[#allocation2 + $0x544] sm:$0xf]
    %v404 = vld [vmem:[#allocation2 + $0x548] sm:$0xf]
    %v405 = vld [vmem:[#allocation2 + $0x54c] sm:$0xf]
    %v406 = vld [vmem:[#allocation2 + $0x550] sm:$0xf]
    %v407 = vld [vmem:[#allocation2 + $0x554] sm:$0xf]
    %v408 = vld [vmem:[#allocation2 + $0x558] sm:$0xf]
    %v409 = vld [vmem:[#allocation2 + $0x55c] sm:$0xf]
    %v410 = vld [vmem:[#allocation2 + $0x560] sm:$0xf]
    %v411 = vld [vmem:[#allocation2 + $0x564] sm:$0xf]
    %v412 = vld [vmem:[#allocation2 + $0x568] sm:$0xf]
    %v413 = vld [vmem:[#allocation2 + $0x56c] sm:$0xf]
    %v414 = vld [vmem:[#allocation2 + $0x570] sm:$0xf]
    %v415 = vld [vmem:[#allocation2 + $0x574] sm:$0xf]
    %v416 = vld [vmem:[#allocation2 + $0x578] sm:$0xf]
    %v417 = vld [vmem:[#allocation2 + $0x57c] sm:$0xf]
    %v418 = vld [vmem:[#allocation2 + $0x580] sm:$0xf]
    %v419 = vld [vmem:[#allocation2 + $0x584] sm:$0xf]
    %v420 = vld [vmem:[#allocation2 + $0x588] sm:$0xf]
    %v421 = vld [vmem:[#allocation2 + $0x58c] sm:$0xf]
    %v422 = vld [vmem:[#allocation2 + $0x590] sm:$0xf]
    %v423 = vld [vmem:[#allocation2 + $0x594] sm:$0xf]
    %v424 = vld [vmem:[#allocation2 + $0x598] sm:$0xf]
    %v425 = vld [vmem:[#allocation2 + $0x59c] sm:$0xf]
    %v426 = vld [vmem:[#allocation2 + $0x5a0] sm:$0xf]
    %v427 = vld [vmem:[#allocation2 + $0x5a4] sm:$0xf]
    %v428 = vld [vmem:[#allocation2 + $0x5a8] sm:$0xf]
    %v429 = vld [vmem:[#allocation2 + $0x5ac] sm:$0xf]
    %v430 = vld [vmem:[#allocation2 + $0x5b0] sm:$0xf]
    %v431 = vld [vmem:[#allocation2 + $0x5b4] sm:$0xf]
    %v432 = vld [vmem:[#allocation2 + $0x5b8] sm:$0xf]
    %v433 = vld [vmem:[#allocation2 + $0x5bc] sm:$0xf]
    %v434 = vld [vmem:[#allocation2 + $0x5c0] sm:$0xf]
    %v435 = vld [vmem:[#allocation2 + $0x5c4] sm:$0xf]
    %v436 = vld [vmem:[#allocation2 + $0x5c8] sm:$0xf]
    %v437 = vld [vmem:[#allocation2 + $0x5cc] sm:$0xf]
    %v438 = vld [vmem:[#allocation2 + $0x5d0] sm:$0xf]
    %v439 = vld [vmem:[#allocation2 + $0x5d4] sm:$0xf]
    %v440 = vld [vmem:[#allocation2 + $0x5d8] sm:$0xf]
    %v441 = vld [vmem:[#allocation2 + $0x5dc] sm:$0xf]
    %v442 = vld [vmem:[#allocation2 + $0x5e0] sm:$0xf]
    %v443 = vld [vmem:[#allocation2 + $0x5e4] sm:$0xf]
    %v444 = vld [vmem:[#allocation2 + $0x5e8] sm:$0xf]
    %v445 = vld [vmem:[#allocation2 + $0x5ec] sm:$0xf]
    %v446 = vld [vmem:[#allocation2 + $0x5f0] sm:$0xf]
    %v447 = vld [vmem:[#allocation2 + $0x5f4] sm:$0xf]
    %v448 = vld [vmem:[#allocation2 + $0x5f8] sm:$0xf]
    %v449 = vld [vmem:[#allocation2 + $0x5fc] sm:$0xf]
    %v450 = vld [vmem:[#allocation2 + $0x600] sm:$0xf]
    %v451 = vld [vmem:[#allocation2 + $0x604] sm:$0xf]
    %v452 = vld [vmem:[#allocation2 + $0x608] sm:$0xf]
    %v453 = vld [vmem:[#allocation2 + $0x60c] sm:$0xf]
    %v454 = vld [vmem:[#allocation2 + $0x610] sm:$0xf]
    %v455 = vld [vmem:[#allocation2 + $0x614] sm:$0xf]
    %v456 = vld [vmem:[#allocation2 + $0x618] sm:$0xf]
    %v457 = vld [vmem:[#allocation2 + $0x61c] sm:$0xf]
    %v458 = vld [vmem:[#allocation2 + $0x620] sm:$0xf]
    %v459 = vld [vmem:[#allocation2 + $0x624] sm:$0xf]
    %v460 = vld [vmem:[#allocation2 + $0x628] sm:$0xf]
    %v461 = vld [vmem:[#allocation2 + $0x62c] sm:$0xf]
    %v462 = vld [vmem:[#allocation2 + $0x630] sm:$0xf]
    %v463 = vld [vmem:[#allocation2 + $0x634] sm:$0xf]
    %v464 = vld [vmem:[#allocation2 + $0x638] sm:$0xf]
    %v465 = vld [vmem:[#allocation2 + $0x63c] sm:$0xf]
    %v466 = vld [vmem:[#allocation2 + $0x640] sm:$0xf]
    %v467 = vld [vmem:[#allocation2 + $0x644] sm:$0xf]
    %v468 = vld [vmem:[#allocation2 + $0x648] sm:$0xf]
    %v469 = vld [vmem:[#allocation2 + $0x64c] sm:$0xf]
    %v470 = vld [vmem:[#allocation2 + $0x650] sm:$0xf]
    %v471 = vld [vmem:[#allocation2 + $0x654] sm:$0xf]
    %v472 = vld [vmem:[#allocation2 + $0x658] sm:$0xf]
    %v473 = vld [vmem:[#allocation2 + $0x65c] sm:$0xf]
    %v474 = vld [vmem:[#allocation2 + $0x660] sm:$0xf]
    %v475 = vld [vmem:[#allocation2 + $0x664] sm:$0xf]
    %v476 = vld [vmem:[#allocation2 + $0x668] sm:$0xf]
    %v477 = vld [vmem:[#allocation2 + $0x66c] sm:$0xf]
    %v478 = vld [vmem:[#allocation2 + $0x670] sm:$0xf]
    %v479 = vld [vmem:[#allocation2 + $0x674] sm:$0xf]
    %v480 = vld [vmem:[#allocation2 + $0x678] sm:$0xf]
    %v481 = vld [vmem:[#allocation2 + $0x67c] sm:$0xf]
    %v482 = vld [vmem:[#allocation2 + $0x680] sm:$0xf]
    %v483 = vld [vmem:[#allocation2 + $0x684] sm:$0xf]
    %v484 = vld [vmem:[#allocation2 + $0x688] sm:$0xf]
    %v485 = vld [vmem:[#allocation2 + $0x68c] sm:$0xf]
    %v486 = vld [vmem:[#allocation2 + $0x690] sm:$0xf]
    %v487 = vld [vmem:[#allocation2 + $0x694] sm:$0xf]
    %v488 = vld [vmem:[#allocation2 + $0x698] sm:$0xf]
    %v489 = vld [vmem:[#allocation2 + $0x69c] sm:$0xf]
    %v490 = vld [vmem:[#allocation2 + $0x6a0] sm:$0xf]
    %v491 = vld [vmem:[#allocation2 + $0x6a4] sm:$0xf]
    %v492 = vld [vmem:[#allocation2 + $0x6a8] sm:$0xf]
    %v493 = vld [vmem:[#allocation2 + $0x6ac] sm:$0xf]
    %v494 = vld [vmem:[#allocation2 + $0x6b0] sm:$0xf]
    %v495 = vld [vmem:[#allocation2 + $0x6b4] sm:$0xf]
    %v496 = vld [vmem:[#allocation2 + $0x6b8] sm:$0xf]
    %v497 = vld [vmem:[#allocation2 + $0x6bc] sm:$0xf]
    %v498 = vld [vmem:[#allocation2 + $0x6c0] sm:$0xf]
    %v499 = vld [vmem:[#allocation2 + $0x6c4] sm:$0xf]
    %v500 = vld [vmem:[#allocation2 + $0x6c8] sm:$0xf]
    %v501 = vld [vmem:[#allocation2 + $0x6cc] sm:$0xf]
    %v502 = vld [vmem:[#allocation2 + $0x6d0] sm:$0xf]
    %v503 = vld [vmem:[#allocation2 + $0x6d4] sm:$0xf]
    %v504 = vld [vmem:[#allocation2 + $0x6d8] sm:$0xf]
    %v505 = vld [vmem:[#allocation2 + $0x6dc] sm:$0xf]
    %v506 = vld [vmem:[#allocation2 + $0x6e0] sm:$0xf]
    %v507 = vld [vmem:[#allocation2 + $0x6e4] sm:$0xf]
    %v508 = vld [vmem:[#allocation2 + $0x6e8] sm:$0xf]
    %v509 = vld [vmem:[#allocation2 + $0x6ec] sm:$0xf]
    %v510 = vld [vmem:[#allocation2 + $0x6f0] sm:$0xf]
    %v511 = vld [vmem:[#allocation2 + $0x6f4] sm:$0xf]
    %v512 = vld [vmem:[#allocation2 + $0x6f8] sm:$0xf]
    %v513 = vld [vmem:[#allocation2 + $0x6fc] sm:$0xf]
    %v514 = vld [vmem:[#allocation2 + $0x700] sm:$0xf]
    %v515 = vld [vmem:[#allocation2 + $0x704] sm:$0xf]
    %v516 = vld [vmem:[#allocation2 + $0x708] sm:$0xf]
    %v517 = vld [vmem:[#allocation2 + $0x70c] sm:$0xf]
    %v518 = vld [vmem:[#allocation2 + $0x710] sm:$0xf]
    %v519 = vld [vmem:[#allocation2 + $0x714] sm:$0xf]
    %v520 = vld [vmem:[#allocation2 + $0x718] sm:$0xf]
    %v521 = vld [vmem:[#allocation2 + $0x71c] sm:$0xf]
    %v522 = vld [vmem:[#allocation2 + $0x720] sm:$0xf]
    %v523 = vld [vmem:[#allocation2 + $0x724] sm:$0xf]
    %v524 = vld [vmem:[#allocation2 + $0x728] sm:$0xf]
    %v525 = vld [vmem:[#allocation2 + $0x72c] sm:$0xf]
    %v526 = vld [vmem:[#allocation2 + $0x730] sm:$0xf]
    %v527 = vld [vmem:[#allocation2 + $0x734] sm:$0xf]
    %v528 = vld [vmem:[#allocation2 + $0x738] sm:$0xf]
    %v529 = vld [vmem:[#allocation2 + $0x73c] sm:$0xf]
    %v530 = vld [vmem:[#allocation2 + $0x740] sm:$0xf]
    %v531 = vld [vmem:[#allocation2 + $0x744] sm:$0xf]
    %v532 = vld [vmem:[#allocation2 + $0x748] sm:$0xf]
    %v533 = vld [vmem:[#allocation2 + $0x74c] sm:$0xf]
    %v534 = vld [vmem:[#allocation2 + $0x750] sm:$0xf]
    %v535 = vld [vmem:[#allocation2 + $0x754] sm:$0xf]
    %v536 = vld [vmem:[#allocation2 + $0x758] sm:$0xf]
    %v537 = vld [vmem:[#allocation2 + $0x75c] sm:$0xf]
    %v538 = vld [vmem:[#allocation2 + $0x760] sm:$0xf]
    %v539 = vld [vmem:[#allocation2 + $0x764] sm:$0xf]
    %v540 = vld [vmem:[#allocation2 + $0x768] sm:$0xf]
    %v541 = vld [vmem:[#allocation2 + $0x76c] sm:$0xf]
    %v542 = vld [vmem:[#allocation2 + $0x770] sm:$0xf]
    %v543 = vld [vmem:[#allocation2 + $0x774] sm:$0xf]
    %v544 = vld [vmem:[#allocation2 + $0x778] sm:$0xf]
    %v545 = vld [vmem:[#allocation2 + $0x77c] sm:$0xf]
    %v546 = vld [vmem:[#allocation2 + $0x780] sm:$0xf]
    %v547 = vld [vmem:[#allocation2 + $0x784] sm:$0xf]
    %v548 = vld [vmem:[#allocation2 + $0x788] sm:$0xf]
    %v549 = vld [vmem:[#allocation2 + $0x78c] sm:$0xf]
    %v550 = vld [vmem:[#allocation2 + $0x790] sm:$0xf]
    %v551 = vld [vmem:[#allocation2 + $0x794] sm:$0xf]
    %v552 = vld [vmem:[#allocation2 + $0x798] sm:$0xf]
    %v553 = vld [vmem:[#allocation2 + $0x79c] sm:$0xf]
    %v554 = vld [vmem:[#allocation2 + $0x7a0] sm:$0xf]
    %v555 = vld [vmem:[#allocation2 + $0x7a4] sm:$0xf]
    %v556 = vld [vmem:[#allocation2 + $0x7a8] sm:$0xf]
    %v557 = vld [vmem:[#allocation2 + $0x7ac] sm:$0xf]
    %v558 = vld [vmem:[#allocation2 + $0x7b0] sm:$0xf]
    %v559 = vld [vmem:[#allocation2 + $0x7b4] sm:$0xf]
    %v560 = vld [vmem:[#allocation2 + $0x7b8] sm:$0xf]
    %v561 = vld [vmem:[#allocation2 + $0x7bc] sm:$0xf]
    %v562 = vld [vmem:[#allocation2 + $0x7c0] sm:$0xf]
    %v563 = vld [vmem:[#allocation2 + $0x7c4] sm:$0xf]
    %v564 = vld [vmem:[#allocation2 + $0x7c8] sm:$0xf]
    %v565 = vld [vmem:[#allocation2 + $0x7cc] sm:$0xf]
    %v566 = vld [vmem:[#allocation2 + $0x7d0] sm:$0xf]
    %v567 = vld [vmem:[#allocation2 + $0x7d4] sm:$0xf]
    %v568 = vld [vmem:[#allocation2 + $0x7d8] sm:$0xf]
    %v569 = vld [vmem:[#allocation2 + $0x7dc] sm:$0xf]
    %v570 = vld [vmem:[#allocation2 + $0x7e0] sm:$0xf]
    %v571 = vld [vmem:[#allocation2 + $0x7e4] sm:$0xf]
    %v572 = vld [vmem:[#allocation2 + $0x7e8] sm:$0xf]
    %v573 = vld [vmem:[#allocation2 + $0x7ec] sm:$0xf]
    %v574 = vld [vmem:[#allocation2 + $0x7f0] sm:$0xf]
    %v575 = vld [vmem:[#allocation2 + $0x7f4] sm:$0xf]
    %v576 = vld [vmem:[#allocation2 + $0x7f8] sm:$0xf]
    %v577 = vld [vmem:[#allocation2 + $0x7fc] sm:$0xf]
    %v578 = vld [vmem:[#allocation5] sm:$0xf]
    %v579 = vld [vmem:[#allocation5 + $0x4] sm:$0xf]
    %v580 = vld [vmem:[#allocation5 + $0x8] sm:$0xf]
    %v581 = vld [vmem:[#allocation5 + $0xc] sm:$0xf]
    %v582 = vld [vmem:[#allocation5 + $0x10] sm:$0xf]
    %v583 = vld [vmem:[#allocation5 + $0x14] sm:$0xf]
    %v584 = vld [vmem:[#allocation5 + $0x18] sm:$0xf]
    %v585 = vld [vmem:[#allocation5 + $0x1c] sm:$0xf]
    %v586 = vld [vmem:[#allocation5 + $0x20] sm:$0xf]
    %v587 = vld [vmem:[#allocation5 + $0x24] sm:$0xf]
    %v588 = vld [vmem:[#allocation5 + $0x28] sm:$0xf]
    %v589 = vld [vmem:[#allocation5 + $0x2c] sm:$0xf]
    %v590 = vld [vmem:[#allocation5 + $0x30] sm:$0xf]
    %v591 = vld [vmem:[#allocation5 + $0x34] sm:$0xf]
    %v592 = vld [vmem:[#allocation5 + $0x38] sm:$0xf]
    %v593 = vld [vmem:[#allocation5 + $0x3c] sm:$0xf]
    %v594 = vld [vmem:[%s2] sm:$0x1]
    %v596 = vlaneseq
    %v597 = vshrl.u32 %v596, 7
    %v598 = vsub.s32 0, %v597
    %v599 = vrot.slane %v594, %v598
    %v1113 = vunpack.c.l.b16 %v66
    %v1114 = vunpack.c.l.b16 %v67
    %v1115 = vunpack.c.l.b16 %v68
    %v1116 = vunpack.c.l.b16 %v69
    %v1117 = vunpack.c.l.b16 %v70
    %v1118 = vunpack.c.l.b16 %v71
    %v1119 = vunpack.c.l.b16 %v72
    %v1120 = vunpack.c.l.b16 %v73
    %v1121 = vunpack.c.l.b16 %v74
    %v1122 = vunpack.c.l.b16 %v75
    %v1123 = vunpack.c.l.b16 %v76
    %v1124 = vunpack.c.l.b16 %v77
    %v1125 = vunpack.c.l.b16 %v78
    %v1126 = vunpack.c.l.b16 %v79
    %v1127 = vunpack.c.l.b16 %v80
    %v1128 = vunpack.c.l.b16 %v81
    %v1129 = vunpack.c.l.b16 %v82
    %v1130 = vunpack.c.l.b16 %v83
    %v1131 = vunpack.c.l.b16 %v84
    %v1132 = vunpack.c.l.b16 %v85
    %v1133 = vunpack.c.l.b16 %v86
    %v1134 = vunpack.c.l.b16 %v87
    %v1135 = vunpack.c.l.b16 %v88
    %v1136 = vunpack.c.l.b16 %v89
    %v1137 = vunpack.c.l.b16 %v90
    %v1138 = vunpack.c.l.b16 %v91
    %v1139 = vunpack.c.l.b16 %v92
    %v1140 = vunpack.c.l.b16 %v93
    %v1141 = vunpack.c.l.b16 %v94
    %v1142 = vunpack.c.l.b16 %v95
    %v1143 = vunpack.c.l.b16 %v96
    %v1144 = vunpack.c.l.b16 %v97
    %v1145 = vunpack.c.l.b16 %v98
    %v1146 = vunpack.c.l.b16 %v99
    %v1147 = vunpack.c.l.b16 %v100
    %v1148 = vunpack.c.l.b16 %v101
    %v1149 = vunpack.c.l.b16 %v102
    %v1150 = vunpack.c.l.b16 %v103
    %v1151 = vunpack.c.l.b16 %v104
    %v1152 = vunpack.c.l.b16 %v105
    %v1153 = vunpack.c.l.b16 %v106
    %v1154 = vunpack.c.l.b16 %v107
    %v1155 = vunpack.c.l.b16 %v108
    %v1156 = vunpack.c.l.b16 %v109
    %v1157 = vunpack.c.l.b16 %v110
    %v1158 = vunpack.c.l.b16 %v111
    %v1159 = vunpack.c.l.b16 %v112
    %v1160 = vunpack.c.l.b16 %v113
    %v1161 = vunpack.c.l.b16 %v114
    %v1162 = vunpack.c.l.b16 %v115
    %v1163 = vunpack.c.l.b16 %v116
    %v1164 = vunpack.c.l.b16 %v117
    %v1165 = vunpack.c.l.b16 %v118
    %v1166 = vunpack.c.l.b16 %v119
    %v1167 = vunpack.c.l.b16 %v120
    %v1168 = vunpack.c.l.b16 %v121
    %v1169 = vunpack.c.l.b16 %v122
    %v1170 = vunpack.c.l.b16 %v123
    %v1171 = vunpack.c.l.b16 %v124
    %v1172 = vunpack.c.l.b16 %v125
    %v1173 = vunpack.c.l.b16 %v126
    %v1174 = vunpack.c.l.b16 %v127
    %v1175 = vunpack.c.l.b16 %v128
    %v1176 = vunpack.c.l.b16 %v129
    %v1177 = vunpack.c.l.b16 %v130
    %v1178 = vunpack.c.l.b16 %v131
    %v1179 = vunpack.c.l.b16 %v132
    %v1180 = vunpack.c.l.b16 %v133
    %v1181 = vunpack.c.l.b16 %v134
    %v1182 = vunpack.c.l.b16 %v135
    %v1183 = vunpack.c.l.b16 %v136
    %v1184 = vunpack.c.l.b16 %v137
    %v1185 = vunpack.c.l.b16 %v138
    %v1186 = vunpack.c.l.b16 %v139
    %v1187 = vunpack.c.l.b16 %v140
    %v1188 = vunpack.c.l.b16 %v141
    %v1189 = vunpack.c.l.b16 %v142
    %v1190 = vunpack.c.l.b16 %v143
    %v1191 = vunpack.c.l.b16 %v144
    %v1192 = vunpack.c.l.b16 %v145
    %v1193 = vunpack.c.l.b16 %v146
    %v1194 = vunpack.c.l.b16 %v147
    %v1195 = vunpack.c.l.b16 %v148
    %v1196 = vunpack.c.l.b16 %v149
    %v1197 = vunpack.c.l.b16 %v150
    %v1198 = vunpack.c.l.b16 %v151
    %v1199 = vunpack.c.l.b16 %v152
    %v1200 = vunpack.c.l.b16 %v153
    %v1201 = vunpack.c.l.b16 %v154
    %v1202 = vunpack.c.l.b16 %v155
    %v1203 = vunpack.c.l.b16 %v156
    %v1204 = vunpack.c.l.b16 %v157
    %v1205 = vunpack.c.l.b16 %v158
    %v1206 = vunpack.c.l.b16 %v159
    %v1207 = vunpack.c.l.b16 %v160
    %v1208 = vunpack.c.l.b16 %v161
    %v1209 = vunpack.c.l.b16 %v162
    %v1210 = vunpack.c.l.b16 %v163
    %v1211 = vunpack.c.l.b16 %v164
    %v1212 = vunpack.c.l.b16 %v165
    %v1213 = vunpack.c.l.b16 %v166
    %v1214 = vunpack.c.l.b16 %v167
    %v1215 = vunpack.c.l.b16 %v168
    %v1216 = vunpack.c.l.b16 %v169
    %v1217 = vunpack.c.l.b16 %v170
    %v1218 = vunpack.c.l.b16 %v171
    %v1219 = vunpack.c.l.b16 %v172
    %v1220 = vunpack.c.l.b16 %v173
    %v1221 = vunpack.c.l.b16 %v174
    %v1222 = vunpack.c.l.b16 %v175
    %v1223 = vunpack.c.l.b16 %v176
    %v1224 = vunpack.c.l.b16 %v177
    %v1225 = vunpack.c.l.b16 %v178
    %v1226 = vunpack.c.l.b16 %v179
    %v1227 = vunpack.c.l.b16 %v180
    %v1228 = vunpack.c.l.b16 %v181
    %v1229 = vunpack.c.l.b16 %v182
    %v1230 = vunpack.c.l.b16 %v183
    %v1231 = vunpack.c.l.b16 %v184
    %v1232 = vunpack.c.l.b16 %v185
    %v1233 = vunpack.c.l.b16 %v186
    %v1234 = vunpack.c.l.b16 %v187
    %v1235 = vunpack.c.l.b16 %v188
    %v1236 = vunpack.c.l.b16 %v189
    %v1237 = vunpack.c.l.b16 %v190
    %v1238 = vunpack.c.l.b16 %v191
    %v1239 = vunpack.c.l.b16 %v192
    %v1240 = vunpack.c.l.b16 %v193
    %v1241 = vunpack.c.l.b16 %v194
    %v1242 = vunpack.c.l.b16 %v195
    %v1243 = vunpack.c.l.b16 %v196
    %v1244 = vunpack.c.l.b16 %v197
    %v1245 = vunpack.c.l.b16 %v198
    %v1246 = vunpack.c.l.b16 %v199
    %v1247 = vunpack.c.l.b16 %v200
    %v1248 = vunpack.c.l.b16 %v201
    %v1249 = vunpack.c.l.b16 %v202
    %v1250 = vunpack.c.l.b16 %v203
    %v1251 = vunpack.c.l.b16 %v204
    %v1252 = vunpack.c.l.b16 %v205
    %v1253 = vunpack.c.l.b16 %v206
    %v1254 = vunpack.c.l.b16 %v207
    %v1255 = vunpack.c.l.b16 %v208
    %v1256 = vunpack.c.l.b16 %v209
    %v1257 = vunpack.c.l.b16 %v210
    %v1258 = vunpack.c.l.b16 %v211
    %v1259 = vunpack.c.l.b16 %v212
    %v1260 = vunpack.c.l.b16 %v213
    %v1261 = vunpack.c.l.b16 %v214
    %v1262 = vunpack.c.l.b16 %v215
    %v1263 = vunpack.c.l.b16 %v216
    %v1264 = vunpack.c.l.b16 %v217
    %v1265 = vunpack.c.l.b16 %v218
    %v1266 = vunpack.c.l.b16 %v219
    %v1267 = vunpack.c.l.b16 %v220
    %v1268 = vunpack.c.l.b16 %v221
    %v1269 = vunpack.c.l.b16 %v222
    %v1270 = vunpack.c.l.b16 %v223
    %v1271 = vunpack.c.l.b16 %v224
    %v1272 = vunpack.c.l.b16 %v225
    %v1273 = vunpack.c.l.b16 %v226
    %v1274 = vunpack.c.l.b16 %v227
    %v1275 = vunpack.c.l.b16 %v228
    %v1276 = vunpack.c.l.b16 %v229
    %v1277 = vunpack.c.l.b16 %v230
    %v1278 = vunpack.c.l.b16 %v231
    %v1279 = vunpack.c.l.b16 %v232
    %v1280 = vunpack.c.l.b16 %v233
    %v1281 = vunpack.c.l.b16 %v234
    %v1282 = vunpack.c.l.b16 %v235
    %v1283 = vunpack.c.l.b16 %v236
    %v1284 = vunpack.c.l.b16 %v237
    %v1285 = vunpack.c.l.b16 %v238
    %v1286 = vunpack.c.l.b16 %v239
    %v1287 = vunpack.c.l.b16 %v240
    %v1288 = vunpack.c.l.b16 %v241
    %v1289 = vunpack.c.l.b16 %v242
    %v1290 = vunpack.c.l.b16 %v243
    %v1291 = vunpack.c.l.b16 %v244
    %v1292 = vunpack.c.l.b16 %v245
    %v1293 = vunpack.c.l.b16 %v246
    %v1294 = vunpack.c.l.b16 %v247
    %v1295 = vunpack.c.l.b16 %v248
    %v1296 = vunpack.c.l.b16 %v249
    %v1297 = vunpack.c.l.b16 %v250
    %v1298 = vunpack.c.l.b16 %v251
    %v1299 = vunpack.c.l.b16 %v252
    %v1300 = vunpack.c.l.b16 %v253
    %v1301 = vunpack.c.l.b16 %v254
    %v1302 = vunpack.c.l.b16 %v255
    %v1303 = vunpack.c.l.b16 %v256
    %v1304 = vunpack.c.l.b16 %v257
    %v1305 = vunpack.c.l.b16 %v258
    %v1306 = vunpack.c.l.b16 %v259
    %v1307 = vunpack.c.l.b16 %v260
    %v1308 = vunpack.c.l.b16 %v261
    %v1309 = vunpack.c.l.b16 %v262
    %v1310 = vunpack.c.l.b16 %v263
    %v1311 = vunpack.c.l.b16 %v264
    %v1312 = vunpack.c.l.b16 %v265
    %v1313 = vunpack.c.l.b16 %v266
    %v1314 = vunpack.c.l.b16 %v267
    %v1315 = vunpack.c.l.b16 %v268
    %v1316 = vunpack.c.l.b16 %v269
    %v1317 = vunpack.c.l.b16 %v270
    %v1318 = vunpack.c.l.b16 %v271
    %v1319 = vunpack.c.l.b16 %v272
    %v1320 = vunpack.c.l.b16 %v273
    %v1321 = vunpack.c.l.b16 %v274
    %v1322 = vunpack.c.l.b16 %v275
    %v1323 = vunpack.c.l.b16 %v276
    %v1324 = vunpack.c.l.b16 %v277
    %v1325 = vunpack.c.l.b16 %v278
    %v1326 = vunpack.c.l.b16 %v279
    %v1327 = vunpack.c.l.b16 %v280
    %v1328 = vunpack.c.l.b16 %v281
    %v1329 = vunpack.c.l.b16 %v282
    %v1330 = vunpack.c.l.b16 %v283
    %v1331 = vunpack.c.l.b16 %v284
    %v1332 = vunpack.c.l.b16 %v285
    %v1333 = vunpack.c.l.b16 %v286
    %v1334 = vunpack.c.l.b16 %v287
    %v1335 = vunpack.c.l.b16 %v288
    %v1336 = vunpack.c.l.b16 %v289
    %v1337 = vunpack.c.l.b16 %v290
    %v1338 = vunpack.c.l.b16 %v291
    %v1339 = vunpack.c.l.b16 %v292
    %v1340 = vunpack.c.l.b16 %v293
    %v1341 = vunpack.c.l.b16 %v294
    %v1342 = vunpack.c.l.b16 %v295
    %v1343 = vunpack.c.l.b16 %v296
    %v1344 = vunpack.c.l.b16 %v297
    %v1345 = vunpack.c.l.b16 %v298
    %v1346 = vunpack.c.l.b16 %v299
    %v1347 = vunpack.c.l.b16 %v300
    %v1348 = vunpack.c.l.b16 %v301
    %v1349 = vunpack.c.l.b16 %v302
    %v1350 = vunpack.c.l.b16 %v303
    %v1351 = vunpack.c.l.b16 %v304
    %v1352 = vunpack.c.l.b16 %v305
    %v1353 = vunpack.c.l.b16 %v306
    %v1354 = vunpack.c.l.b16 %v307
    %v1355 = vunpack.c.l.b16 %v308
    %v1356 = vunpack.c.l.b16 %v309
    %v1357 = vunpack.c.l.b16 %v310
    %v1358 = vunpack.c.l.b16 %v311
    %v1359 = vunpack.c.l.b16 %v312
    %v1360 = vunpack.c.l.b16 %v313
    %v1361 = vunpack.c.l.b16 %v314
    %v1362 = vunpack.c.l.b16 %v315
    %v1363 = vunpack.c.l.b16 %v316
    %v1364 = vunpack.c.l.b16 %v317
    %v1365 = vunpack.c.l.b16 %v318
    %v1366 = vunpack.c.l.b16 %v319
    %v1367 = vunpack.c.l.b16 %v320
    %v1368 = vunpack.c.l.b16 %v321
    %v1369 = vunpack.c.l.b16 %v322
    %v1370 = vunpack.c.l.b16 %v323
    %v1371 = vunpack.c.l.b16 %v324
    %v1372 = vunpack.c.l.b16 %v325
    %v1373 = vunpack.c.l.b16 %v326
    %v1374 = vunpack.c.l.b16 %v327
    %v1375 = vunpack.c.l.b16 %v328
    %v1376 = vunpack.c.l.b16 %v329
    %v1377 = vunpack.c.l.b16 %v330
    %v1378 = vunpack.c.l.b16 %v331
    %v1379 = vunpack.c.l.b16 %v332
    %v1380 = vunpack.c.l.b16 %v333
    %v1381 = vunpack.c.l.b16 %v334
    %v1382 = vunpack.c.l.b16 %v335
    %v1383 = vunpack.c.l.b16 %v336
    %v1384 = vunpack.c.l.b16 %v337
    %v1385 = vunpack.c.l.b16 %v338
    %v1386 = vunpack.c.l.b16 %v339
    %v1387 = vunpack.c.l.b16 %v340
    %v1388 = vunpack.c.l.b16 %v341
    %v1389 = vunpack.c.l.b16 %v342
    %v1390 = vunpack.c.l.b16 %v343
    %v1391 = vunpack.c.l.b16 %v344
    %v1392 = vunpack.c.l.b16 %v345
    %v1393 = vunpack.c.l.b16 %v346
    %v1394 = vunpack.c.l.b16 %v347
    %v1395 = vunpack.c.l.b16 %v348
    %v1396 = vunpack.c.l.b16 %v349
    %v1397 = vunpack.c.l.b16 %v350
    %v1398 = vunpack.c.l.b16 %v351
    %v1399 = vunpack.c.l.b16 %v352
    %v1400 = vunpack.c.l.b16 %v353
    %v1401 = vunpack.c.l.b16 %v354
    %v1402 = vunpack.c.l.b16 %v355
    %v1403 = vunpack.c.l.b16 %v356
    %v1404 = vunpack.c.l.b16 %v357
    %v1405 = vunpack.c.l.b16 %v358
    %v1406 = vunpack.c.l.b16 %v359
    %v1407 = vunpack.c.l.b16 %v360
    %v1408 = vunpack.c.l.b16 %v361
    %v1409 = vunpack.c.l.b16 %v362
    %v1410 = vunpack.c.l.b16 %v363
    %v1411 = vunpack.c.l.b16 %v364
    %v1412 = vunpack.c.l.b16 %v365
    %v1413 = vunpack.c.l.b16 %v366
    %v1414 = vunpack.c.l.b16 %v367
    %v1415 = vunpack.c.l.b16 %v368
    %v1416 = vunpack.c.l.b16 %v369
    %v1417 = vunpack.c.l.b16 %v370
    %v1418 = vunpack.c.l.b16 %v371
    %v1419 = vunpack.c.l.b16 %v372
    %v1420 = vunpack.c.l.b16 %v373
    %v1421 = vunpack.c.l.b16 %v374
    %v1422 = vunpack.c.l.b16 %v375
    %v1423 = vunpack.c.l.b16 %v376
    %v1424 = vunpack.c.l.b16 %v377
    %v1425 = vunpack.c.l.b16 %v378
    %v1426 = vunpack.c.l.b16 %v379
    %v1427 = vunpack.c.l.b16 %v380
    %v1428 = vunpack.c.l.b16 %v381
    %v1429 = vunpack.c.l.b16 %v382
    %v1430 = vunpack.c.l.b16 %v383
    %v1431 = vunpack.c.l.b16 %v384
    %v1432 = vunpack.c.l.b16 %v385
    %v1433 = vunpack.c.l.b16 %v386
    %v1434 = vunpack.c.l.b16 %v387
    %v1435 = vunpack.c.l.b16 %v388
    %v1436 = vunpack.c.l.b16 %v389
    %v1437 = vunpack.c.l.b16 %v390
    %v1438 = vunpack.c.l.b16 %v391
    %v1439 = vunpack.c.l.b16 %v392
    %v1440 = vunpack.c.l.b16 %v393
    %v1441 = vunpack.c.l.b16 %v394
    %v1442 = vunpack.c.l.b16 %v395
    %v1443 = vunpack.c.l.b16 %v396
    %v1444 = vunpack.c.l.b16 %v397
    %v1445 = vunpack.c.l.b16 %v398
    %v1446 = vunpack.c.l.b16 %v399
    %v1447 = vunpack.c.l.b16 %v400
    %v1448 = vunpack.c.l.b16 %v401
    %v1449 = vunpack.c.l.b16 %v402
    %v1450 = vunpack.c.l.b16 %v403
    %v1451 = vunpack.c.l.b16 %v404
    %v1452 = vunpack.c.l.b16 %v405
    %v1453 = vunpack.c.l.b16 %v406
    %v1454 = vunpack.c.l.b16 %v407
    %v1455 = vunpack.c.l.b16 %v408
    %v1456 = vunpack.c.l.b16 %v409
    %v1457 = vunpack.c.l.b16 %v410
    %v1458 = vunpack.c.l.b16 %v411
    %v1459 = vunpack.c.l.b16 %v412
    %v1460 = vunpack.c.l.b16 %v413
    %v1461 = vunpack.c.l.b16 %v414
    %v1462 = vunpack.c.l.b16 %v415
    %v1463 = vunpack.c.l.b16 %v416
    %v1464 = vunpack.c.l.b16 %v417
    %v1465 = vunpack.c.l.b16 %v418
    %v1466 = vunpack.c.l.b16 %v419
    %v1467 = vunpack.c.l.b16 %v420
    %v1468 = vunpack.c.l.b16 %v421
    %v1469 = vunpack.c.l.b16 %v422
    %v1470 = vunpack.c.l.b16 %v423
    %v1471 = vunpack.c.l.b16 %v424
    %v1472 = vunpack.c.l.b16 %v425
    %v1473 = vunpack.c.l.b16 %v426
    %v1474 = vunpack.c.l.b16 %v427
    %v1475 = vunpack.c.l.b16 %v428
    %v1476 = vunpack.c.l.b16 %v429
    %v1477 = vunpack.c.l.b16 %v430
    %v1478 = vunpack.c.l.b16 %v431
    %v1479 = vunpack.c.l.b16 %v432
    %v1480 = vunpack.c.l.b16 %v433
    %v1481 = vunpack.c.l.b16 %v434
    %v1482 = vunpack.c.l.b16 %v435
    %v1483 = vunpack.c.l.b16 %v436
    %v1484 = vunpack.c.l.b16 %v437
    %v1485 = vunpack.c.l.b16 %v438
    %v1486 = vunpack.c.l.b16 %v439
    %v1487 = vunpack.c.l.b16 %v440
    %v1488 = vunpack.c.l.b16 %v441
    %v1489 = vunpack.c.l.b16 %v442
    %v1490 = vunpack.c.l.b16 %v443
    %v1491 = vunpack.c.l.b16 %v444
    %v1492 = vunpack.c.l.b16 %v445
    %v1493 = vunpack.c.l.b16 %v446
    %v1494 = vunpack.c.l.b16 %v447
    %v1495 = vunpack.c.l.b16 %v448
    %v1496 = vunpack.c.l.b16 %v449
    %v1497 = vunpack.c.l.b16 %v450
    %v1498 = vunpack.c.l.b16 %v451
    %v1499 = vunpack.c.l.b16 %v452
    %v1500 = vunpack.c.l.b16 %v453
    %v1501 = vunpack.c.l.b16 %v454
    %v1502 = vunpack.c.l.b16 %v455
    %v1503 = vunpack.c.l.b16 %v456
    %v1504 = vunpack.c.l.b16 %v457
    %v1505 = vunpack.c.l.b16 %v458
    %v1506 = vunpack.c.l.b16 %v459
    %v1507 = vunpack.c.l.b16 %v460
    %v1508 = vunpack.c.l.b16 %v461
    %v1509 = vunpack.c.l.b16 %v462
    %v1510 = vunpack.c.l.b16 %v463
    %v1511 = vunpack.c.l.b16 %v464
    %v1512 = vunpack.c.l.b16 %v465
    %v1513 = vunpack.c.l.b16 %v466
    %v1514 = vunpack.c.l.b16 %v467
    %v1515 = vunpack.c.l.b16 %v468
    %v1516 = vunpack.c.l.b16 %v469
    %v1517 = vunpack.c.l.b16 %v470
    %v1518 = vunpack.c.l.b16 %v471
    %v1519 = vunpack.c.l.b16 %v472
    %v1520 = vunpack.c.l.b16 %v473
    %v1521 = vunpack.c.l.b16 %v474
    %v1522 = vunpack.c.l.b16 %v475
    %v1523 = vunpack.c.l.b16 %v476
    %v1524 = vunpack.c.l.b16 %v477
    %v1525 = vunpack.c.l.b16 %v478
    %v1526 = vunpack.c.l.b16 %v479
    %v1527 = vunpack.c.l.b16 %v480
    %v1528 = vunpack.c.l.b16 %v481
    %v1529 = vunpack.c.l.b16 %v482
    %v1530 = vunpack.c.l.b16 %v483
    %v1531 = vunpack.c.l.b16 %v484
    %v1532 = vunpack.c.l.b16 %v485
    %v1533 = vunpack.c.l.b16 %v486
    %v1534 = vunpack.c.l.b16 %v487
    %v1535 = vunpack.c.l.b16 %v488
    %v1536 = vunpack.c.l.b16 %v489
    %v1537 = vunpack.c.l.b16 %v490
    %v1538 = vunpack.c.l.b16 %v491
    %v1539 = vunpack.c.l.b16 %v492
    %v1540 = vunpack.c.l.b16 %v493
    %v1541 = vunpack.c.l.b16 %v494
    %v1542 = vunpack.c.l.b16 %v495
    %v1543 = vunpack.c.l.b16 %v496
    %v1544 = vunpack.c.l.b16 %v497
    %v1545 = vunpack.c.l.b16 %v498
    %v1546 = vunpack.c.l.b16 %v499
    %v1547 = vunpack.c.l.b16 %v500
    %v1548 = vunpack.c.l.b16 %v501
    %v1549 = vunpack.c.l.b16 %v502
    %v1550 = vunpack.c.l.b16 %v503
    %v1551 = vunpack.c.l.b16 %v504
    %v1552 = vunpack.c.l.b16 %v505
    %v1553 = vunpack.c.l.b16 %v506
    %v1554 = vunpack.c.l.b16 %v507
    %v1555 = vunpack.c.l.b16 %v508
    %v1556 = vunpack.c.l.b16 %v509
    %v1557 = vunpack.c.l.b16 %v510
    %v1558 = vunpack.c.l.b16 %v511
    %v1559 = vunpack.c.l.b16 %v512
    %v1560 = vunpack.c.l.b16 %v513
    %v1561 = vunpack.c.l.b16 %v514
    %v1562 = vunpack.c.l.b16 %v515
    %v1563 = vunpack.c.l.b16 %v516
    %v1564 = vunpack.c.l.b16 %v517
    %v1565 = vunpack.c.l.b16 %v518
    %v1566 = vunpack.c.l.b16 %v519
    %v1567 = vunpack.c.l.b16 %v520
    %v1568 = vunpack.c.l.b16 %v521
    %v1569 = vunpack.c.l.b16 %v522
    %v1570 = vunpack.c.l.b16 %v523
    %v1571 = vunpack.c.l.b16 %v524
    %v1572 = vunpack.c.l.b16 %v525
    %v1573 = vunpack.c.l.b16 %v526
    %v1574 = vunpack.c.l.b16 %v527
    %v1575 = vunpack.c.l.b16 %v528
    %v1576 = vunpack.c.l.b16 %v529
    %v1577 = vunpack.c.l.b16 %v530
    %v1578 = vunpack.c.l.b16 %v531
    %v1579 = vunpack.c.l.b16 %v532
    %v1580 = vunpack.c.l.b16 %v533
    %v1581 = vunpack.c.l.b16 %v534
    %v1582 = vunpack.c.l.b16 %v535
    %v1583 = vunpack.c.l.b16 %v536
    %v1584 = vunpack.c.l.b16 %v537
    %v1585 = vunpack.c.l.b16 %v538
    %v1586 = vunpack.c.l.b16 %v539
    %v1587 = vunpack.c.l.b16 %v540
    %v1588 = vunpack.c.l.b16 %v541
    %v1589 = vunpack.c.l.b16 %v542
    %v1590 = vunpack.c.l.b16 %v543
    %v1591 = vunpack.c.l.b16 %v544
    %v1592 = vunpack.c.l.b16 %v545
    %v1593 = vunpack.c.l.b16 %v546
    %v1594 = vunpack.c.l.b16 %v547
    %v1595 = vunpack.c.l.b16 %v548
    %v1596 = vunpack.c.l.b16 %v549
    %v1597 = vunpack.c.l.b16 %v550
    %v1598 = vunpack.c.l.b16 %v551
    %v1599 = vunpack.c.l.b16 %v552
    %v1600 = vunpack.c.l.b16 %v553
    %v1601 = vunpack.c.l.b16 %v554
    %v1602 = vunpack.c.l.b16 %v555
    %v1603 = vunpack.c.l.b16 %v556
    %v1604 = vunpack.c.l.b16 %v557
    %v1605 = vunpack.c.l.b16 %v558
    %v1606 = vunpack.c.l.b16 %v559
    %v1607 = vunpack.c.l.b16 %v560
    %v1608 = vunpack.c.l.b16 %v561
    %v1609 = vunpack.c.l.b16 %v562
    %v1610 = vunpack.c.l.b16 %v563
    %v1611 = vunpack.c.l.b16 %v564
    %v1612 = vunpack.c.l.b16 %v565
    %v1613 = vunpack.c.l.b16 %v566
    %v1614 = vunpack.c.l.b16 %v567
    %v1615 = vunpack.c.l.b16 %v568
    %v1616 = vunpack.c.l.b16 %v569
    %v1617 = vunpack.c.l.b16 %v570
    %v1618 = vunpack.c.l.b16 %v571
    %v1619 = vunpack.c.l.b16 %v572
    %v1620 = vunpack.c.l.b16 %v573
    %v1621 = vunpack.c.l.b16 %v574
    %v1622 = vunpack.c.l.b16 %v575
    %v1623 = vunpack.c.l.b16 %v576
    %v1624 = vunpack.c.l.b16 %v577
    %v1625 = vpack.c.b16 %v1114, %v1113
    %v1626 = vpack.c.b16 %v1116, %v1115
    %v1627 = vpack.c.b16 %v1118, %v1117
    %v1628 = vpack.c.b16 %v1120, %v1119
    %v1629 = vpack.c.b16 %v1122, %v1121
    %v1630 = vpack.c.b16 %v1124, %v1123
    %v1631 = vpack.c.b16 %v1126, %v1125
    %v1632 = vpack.c.b16 %v1128, %v1127
    %v1633 = vpack.c.b16 %v1130, %v1129
    %v1634 = vpack.c.b16 %v1132, %v1131
    %v1635 = vpack.c.b16 %v1134, %v1133
    %v1636 = vpack.c.b16 %v1136, %v1135
    %v1637 = vpack.c.b16 %v1138, %v1137
    %v1638 = vpack.c.b16 %v1140, %v1139
    %v1639 = vpack.c.b16 %v1142, %v1141
    %v1640 = vpack.c.b16 %v1144, %v1143
    %v1641 = vpack.c.b16 %v1146, %v1145
    %v1642 = vpack.c.b16 %v1148, %v1147
    %v1643 = vpack.c.b16 %v1150, %v1149
    %v1644 = vpack.c.b16 %v1152, %v1151
    %v1645 = vpack.c.b16 %v1154, %v1153
    %v1646 = vpack.c.b16 %v1156, %v1155
    %v1647 = vpack.c.b16 %v1158, %v1157
    %v1648 = vpack.c.b16 %v1160, %v1159
    %v1649 = vpack.c.b16 %v1162, %v1161
    %v1650 = vpack.c.b16 %v1164, %v1163
    %v1651 = vpack.c.b16 %v1166, %v1165
    %v1652 = vpack.c.b16 %v1168, %v1167
    %v1653 = vpack.c.b16 %v1170, %v1169
    %v1654 = vpack.c.b16 %v1172, %v1171
    %v1655 = vpack.c.b16 %v1174, %v1173
    %v1656 = vpack.c.b16 %v1176, %v1175
    %v1657 = vpack.c.b16 %v1178, %v1177
    %v1658 = vpack.c.b16 %v1180, %v1179
    %v1659 = vpack.c.b16 %v1182, %v1181
    %v1660 = vpack.c.b16 %v1184, %v1183
    %v1661 = vpack.c.b16 %v1186, %v1185
    %v1662 = vpack.c.b16 %v1188, %v1187
    %v1663 = vpack.c.b16 %v1190, %v1189
    %v1664 = vpack.c.b16 %v1192, %v1191
    %v1665 = vpack.c.b16 %v1194, %v1193
    %v1666 = vpack.c.b16 %v1196, %v1195
    %v1667 = vpack.c.b16 %v1198, %v1197
    %v1668 = vpack.c.b16 %v1200, %v1199
    %v1669 = vpack.c.b16 %v1202, %v1201
    %v1670 = vpack.c.b16 %v1204, %v1203
    %v1671 = vpack.c.b16 %v1206, %v1205
    %v1672 = vpack.c.b16 %v1208, %v1207
    %v1673 = vpack.c.b16 %v1210, %v1209
    %v1674 = vpack.c.b16 %v1212, %v1211
    %v1675 = vpack.c.b16 %v1214, %v1213
    %v1676 = vpack.c.b16 %v1216, %v1215
    %v1677 = vpack.c.b16 %v1218, %v1217
    %v1678 = vpack.c.b16 %v1220, %v1219
    %v1679 = vpack.c.b16 %v1222, %v1221
    %v1680 = vpack.c.b16 %v1224, %v1223
    %v1681 = vpack.c.b16 %v1226, %v1225
    %v1682 = vpack.c.b16 %v1228, %v1227
    %v1683 = vpack.c.b16 %v1230, %v1229
    %v1684 = vpack.c.b16 %v1232, %v1231
    %v1685 = vpack.c.b16 %v1234, %v1233
    %v1686 = vpack.c.b16 %v1236, %v1235
    %v1687 = vpack.c.b16 %v1238, %v1237
    %v1688 = vpack.c.b16 %v1240, %v1239
    %v1689 = vpack.c.b16 %v1242, %v1241
    %v1690 = vpack.c.b16 %v1244, %v1243
    %v1691 = vpack.c.b16 %v1246, %v1245
    %v1692 = vpack.c.b16 %v1248, %v1247
    %v1693 = vpack.c.b16 %v1250, %v1249
    %v1694 = vpack.c.b16 %v1252, %v1251
    %v1695 = vpack.c.b16 %v1254, %v1253
    %v1696 = vpack.c.b16 %v1256, %v1255
    %v1697 = vpack.c.b16 %v1258, %v1257
    %v1698 = vpack.c.b16 %v1260, %v1259
    %v1699 = vpack.c.b16 %v1262, %v1261
    %v1700 = vpack.c.b16 %v1264, %v1263
    %v1701 = vpack.c.b16 %v1266, %v1265
    %v1702 = vpack.c.b16 %v1268, %v1267
    %v1703 = vpack.c.b16 %v1270, %v1269
    %v1704 = vpack.c.b16 %v1272, %v1271
    %v1705 = vpack.c.b16 %v1274, %v1273
    %v1706 = vpack.c.b16 %v1276, %v1275
    %v1707 = vpack.c.b16 %v1278, %v1277
    %v1708 = vpack.c.b16 %v1280, %v1279
    %v1709 = vpack.c.b16 %v1282, %v1281
    %v1710 = vpack.c.b16 %v1284, %v1283
    %v1711 = vpack.c.b16 %v1286, %v1285
    %v1712 = vpack.c.b16 %v1288, %v1287
    %v1713 = vpack.c.b16 %v1290, %v1289
    %v1714 = vpack.c.b16 %v1292, %v1291
    %v1715 = vpack.c.b16 %v1294, %v1293
    %v1716 = vpack.c.b16 %v1296, %v1295
    %v1717 = vpack.c.b16 %v1298, %v1297
    %v1718 = vpack.c.b16 %v1300, %v1299
    %v1719 = vpack.c.b16 %v1302, %v1301
    %v1720 = vpack.c.b16 %v1304, %v1303
    %v1721 = vpack.c.b16 %v1306, %v1305
    %v1722 = vpack.c.b16 %v1308, %v1307
    %v1723 = vpack.c.b16 %v1310, %v1309
    %v1724 = vpack.c.b16 %v1312, %v1311
    %v1725 = vpack.c.b16 %v1314, %v1313
    %v1726 = vpack.c.b16 %v1316, %v1315
    %v1727 = vpack.c.b16 %v1318, %v1317
    %v1728 = vpack.c.b16 %v1320, %v1319
    %v1729 = vpack.c.b16 %v1322, %v1321
    %v1730 = vpack.c.b16 %v1324, %v1323
    %v1731 = vpack.c.b16 %v1326, %v1325
    %v1732 = vpack.c.b16 %v1328, %v1327
    %v1733 = vpack.c.b16 %v1330, %v1329
    %v1734 = vpack.c.b16 %v1332, %v1331
    %v1735 = vpack.c.b16 %v1334, %v1333
    %v1736 = vpack.c.b16 %v1336, %v1335
    %v1737 = vpack.c.b16 %v1338, %v1337
    %v1738 = vpack.c.b16 %v1340, %v1339
    %v1739 = vpack.c.b16 %v1342, %v1341
    %v1740 = vpack.c.b16 %v1344, %v1343
    %v1741 = vpack.c.b16 %v1346, %v1345
    %v1742 = vpack.c.b16 %v1348, %v1347
    %v1743 = vpack.c.b16 %v1350, %v1349
    %v1744 = vpack.c.b16 %v1352, %v1351
    %v1745 = vpack.c.b16 %v1354, %v1353
    %v1746 = vpack.c.b16 %v1356, %v1355
    %v1747 = vpack.c.b16 %v1358, %v1357
    %v1748 = vpack.c.b16 %v1360, %v1359
    %v1749 = vpack.c.b16 %v1362, %v1361
    %v1750 = vpack.c.b16 %v1364, %v1363
    %v1751 = vpack.c.b16 %v1366, %v1365
    %v1752 = vpack.c.b16 %v1368, %v1367
    %v1753 = vpack.c.b16 %v1370, %v1369
    %v1754 = vpack.c.b16 %v1372, %v1371
    %v1755 = vpack.c.b16 %v1374, %v1373
    %v1756 = vpack.c.b16 %v1376, %v1375
    %v1757 = vpack.c.b16 %v1378, %v1377
    %v1758 = vpack.c.b16 %v1380, %v1379
    %v1759 = vpack.c.b16 %v1382, %v1381
    %v1760 = vpack.c.b16 %v1384, %v1383
    %v1761 = vpack.c.b16 %v1386, %v1385
    %v1762 = vpack.c.b16 %v1388, %v1387
    %v1763 = vpack.c.b16 %v1390, %v1389
    %v1764 = vpack.c.b16 %v1392, %v1391
    %v1765 = vpack.c.b16 %v1394, %v1393
    %v1766 = vpack.c.b16 %v1396, %v1395
    %v1767 = vpack.c.b16 %v1398, %v1397
    %v1768 = vpack.c.b16 %v1400, %v1399
    %v1769 = vpack.c.b16 %v1402, %v1401
    %v1770 = vpack.c.b16 %v1404, %v1403
    %v1771 = vpack.c.b16 %v1406, %v1405
    %v1772 = vpack.c.b16 %v1408, %v1407
    %v1773 = vpack.c.b16 %v1410, %v1409
    %v1774 = vpack.c.b16 %v1412, %v1411
    %v1775 = vpack.c.b16 %v1414, %v1413
    %v1776 = vpack.c.b16 %v1416, %v1415
    %v1777 = vpack.c.b16 %v1418, %v1417
    %v1778 = vpack.c.b16 %v1420, %v1419
    %v1779 = vpack.c.b16 %v1422, %v1421
    %v1780 = vpack.c.b16 %v1424, %v1423
    %v1781 = vpack.c.b16 %v1426, %v1425
    %v1782 = vpack.c.b16 %v1428, %v1427
    %v1783 = vpack.c.b16 %v1430, %v1429
    %v1784 = vpack.c.b16 %v1432, %v1431
    %v1785 = vpack.c.b16 %v1434, %v1433
    %v1786 = vpack.c.b16 %v1436, %v1435
    %v1787 = vpack.c.b16 %v1438, %v1437
    %v1788 = vpack.c.b16 %v1440, %v1439
    %v1789 = vpack.c.b16 %v1442, %v1441
    %v1790 = vpack.c.b16 %v1444, %v1443
    %v1791 = vpack.c.b16 %v1446, %v1445
    %v1792 = vpack.c.b16 %v1448, %v1447
    %v1793 = vpack.c.b16 %v1450, %v1449
    %v1794 = vpack.c.b16 %v1452, %v1451
    %v1795 = vpack.c.b16 %v1454, %v1453
    %v1796 = vpack.c.b16 %v1456, %v1455
    %v1797 = vpack.c.b16 %v1458, %v1457
    %v1798 = vpack.c.b16 %v1460, %v1459
    %v1799 = vpack.c.b16 %v1462, %v1461
    %v1800 = vpack.c.b16 %v1464, %v1463
    %v1801 = vpack.c.b16 %v1466, %v1465
    %v1802 = vpack.c.b16 %v1468, %v1467
    %v1803 = vpack.c.b16 %v1470, %v1469
    %v1804 = vpack.c.b16 %v1472, %v1471
    %v1805 = vpack.c.b16 %v1474, %v1473
    %v1806 = vpack.c.b16 %v1476, %v1475
    %v1807 = vpack.c.b16 %v1478, %v1477
    %v1808 = vpack.c.b16 %v1480, %v1479
    %v1809 = vpack.c.b16 %v1482, %v1481
    %v1810 = vpack.c.b16 %v1484, %v1483
    %v1811 = vpack.c.b16 %v1486, %v1485
    %v1812 = vpack.c.b16 %v1488, %v1487
    %v1813 = vpack.c.b16 %v1490, %v1489
    %v1814 = vpack.c.b16 %v1492, %v1491
    %v1815 = vpack.c.b16 %v1494, %v1493
    %v1816 = vpack.c.b16 %v1496, %v1495
    %v1817 = vpack.c.b16 %v1498, %v1497
    %v1818 = vpack.c.b16 %v1500, %v1499
    %v1819 = vpack.c.b16 %v1502, %v1501
    %v1820 = vpack.c.b16 %v1504, %v1503
    %v1821 = vpack.c.b16 %v1506, %v1505
    %v1822 = vpack.c.b16 %v1508, %v1507
    %v1823 = vpack.c.b16 %v1510, %v1509
    %v1824 = vpack.c.b16 %v1512, %v1511
    %v1825 = vpack.c.b16 %v1514, %v1513
    %v1826 = vpack.c.b16 %v1516, %v1515
    %v1827 = vpack.c.b16 %v1518, %v1517
    %v1828 = vpack.c.b16 %v1520, %v1519
    %v1829 = vpack.c.b16 %v1522, %v1521
    %v1830 = vpack.c.b16 %v1524, %v1523
    %v1831 = vpack.c.b16 %v1526, %v1525
    %v1832 = vpack.c.b16 %v1528, %v1527
    %v1833 = vpack.c.b16 %v1530, %v1529
    %v1834 = vpack.c.b16 %v1532, %v1531
    %v1835 = vpack.c.b16 %v1534, %v1533
    %v1836 = vpack.c.b16 %v1536, %v1535
    %v1837 = vpack.c.b16 %v1538, %v1537
    %v1838 = vpack.c.b16 %v1540, %v1539
    %v1839 = vpack.c.b16 %v1542, %v1541
    %v1840 = vpack.c.b16 %v1544, %v1543
    %v1841 = vpack.c.b16 %v1546, %v1545
    %v1842 = vpack.c.b16 %v1548, %v1547
    %v1843 = vpack.c.b16 %v1550, %v1549
    %v1844 = vpack.c.b16 %v1552, %v1551
    %v1845 = vpack.c.b16 %v1554, %v1553
    %v1846 = vpack.c.b16 %v1556, %v1555
    %v1847 = vpack.c.b16 %v1558, %v1557
    %v1848 = vpack.c.b16 %v1560, %v1559
    %v1849 = vpack.c.b16 %v1562, %v1561
    %v1850 = vpack.c.b16 %v1564, %v1563
    %v1851 = vpack.c.b16 %v1566, %v1565
    %v1852 = vpack.c.b16 %v1568, %v1567
    %v1853 = vpack.c.b16 %v1570, %v1569
    %v1854 = vpack.c.b16 %v1572, %v1571
    %v1855 = vpack.c.b16 %v1574, %v1573
    %v1856 = vpack.c.b16 %v1576, %v1575
    %v1857 = vpack.c.b16 %v1578, %v1577
    %v1858 = vpack.c.b16 %v1580, %v1579
    %v1859 = vpack.c.b16 %v1582, %v1581
    %v1860 = vpack.c.b16 %v1584, %v1583
    %v1861 = vpack.c.b16 %v1586, %v1585
    %v1862 = vpack.c.b16 %v1588, %v1587
    %v1863 = vpack.c.b16 %v1590, %v1589
    %v1864 = vpack.c.b16 %v1592, %v1591
    %v1865 = vpack.c.b16 %v1594, %v1593
    %v1866 = vpack.c.b16 %v1596, %v1595
    %v1867 = vpack.c.b16 %v1598, %v1597
    %v1868 = vpack.c.b16 %v1600, %v1599
    %v1869 = vpack.c.b16 %v1602, %v1601
    %v1870 = vpack.c.b16 %v1604, %v1603
    %v1871 = vpack.c.b16 %v1606, %v1605
    %v1872 = vpack.c.b16 %v1608, %v1607
    %v1873 = vpack.c.b16 %v1610, %v1609
    %v1874 = vpack.c.b16 %v1612, %v1611
    %v1875 = vpack.c.b16 %v1614, %v1613
    %v1876 = vpack.c.b16 %v1616, %v1615
    %v1877 = vpack.c.b16 %v1618, %v1617
    %v1878 = vpack.c.b16 %v1620, %v1619
    %v1879 = vpack.c.b16 %v1622, %v1621
    %v1880 = vpack.c.b16 %v1624, %v1623
    %v2153 = vunpack.c.l.b16 %v578
    %v2154 = vunpack.c.l.b16 %v579
    %v2155 = vunpack.c.l.b16 %v580
    %v2156 = vunpack.c.l.b16 %v581
    %v2157 = vunpack.c.l.b16 %v582
    %v2158 = vunpack.c.l.b16 %v583
    %v2159 = vunpack.c.l.b16 %v584
    %v2160 = vunpack.c.l.b16 %v585
    %v2161 = vunpack.c.l.b16 %v586
    %v2162 = vunpack.c.l.b16 %v587
    %v2163 = vunpack.c.l.b16 %v588
    %v2164 = vunpack.c.l.b16 %v589
    %v2165 = vunpack.c.l.b16 %v590
    %v2166 = vunpack.c.l.b16 %v591
    %v2167 = vunpack.c.l.b16 %v592
    %v2168 = vunpack.c.l.b16 %v593
    %v2169 = vpack.c.b16 %v2154, %v2153
    %v2170 = vpack.c.b16 %v2156, %v2155
    %v2171 = vpack.c.b16 %v2158, %v2157
    %v2172 = vpack.c.b16 %v2160, %v2159
    %v2173 = vpack.c.b16 %v2162, %v2161
    %v2174 = vpack.c.b16 %v2164, %v2163
    %v2175 = vpack.c.b16 %v2166, %v2165
    %v2176 = vpack.c.b16 %v2168, %v2167
    %2185 = vmatprep.subr.bf16.mxu0 0
    %2186 = vmatpush1.bf16.msra.mxu0 %v2169
    %2187 = vmatprep.subr.bf16.mxu0 0
    %2188 = vmatpush1.bf16.msra.mxu0 %v2170
    %2189 = vmatprep.subr.bf16.mxu0 0
    %2190 = vmatpush1.bf16.msra.mxu0 %v2171
    %2191 = vmatprep.subr.bf16.mxu0 0
    %2192 = vmatpush1.bf16.msra.mxu0 %v2172
    %2193 = vmatprep.subr.bf16.mxu0 0
    %2194 = vmatpush1.bf16.msra.mxu0 %v2173
    %2195 = vmatprep.subr.bf16.mxu0 0
    %2196 = vmatpush1.bf16.msra.mxu0 %v2174
    %2197 = vmatprep.subr.bf16.mxu0 0
    %2198 = vmatpush1.bf16.msra.mxu0 %v2175
    %2199 = vmatprep.subr.bf16.mxu0 0
    %2200 = vmatpush1.bf16.msra.mxu0 %v2176
    %2201 = vmatprep.subr.bf16.mxu0 0
    %2202 = vmatpush1.bf16.msra.mxu0 0
    %2203 = vmatprep.subr.bf16.mxu0 0
    %2204 = vmatpush1.bf16.msra.mxu0 0
    %2205 = vmatprep.subr.bf16.mxu0 0
    %2206 = vmatpush1.bf16.msra.mxu0 0
    %2207 = vmatprep.subr.bf16.mxu0 0
    %2208 = vmatpush1.bf16.msra.mxu0 0
    %2209 = vmatprep.subr.bf16.mxu0 0
    %2210 = vmatpush1.bf16.msra.mxu0 0
    %2211 = vmatprep.subr.bf16.mxu0 0
    %2212 = vmatpush1.bf16.msra.mxu0 0
    %2213 = vmatprep.subr.bf16.mxu0 0
    %2214 = vmatpush1.bf16.msra.mxu0 0
    %2215 = vmatprep.subr.bf16.mxu0 0
    %2216 = vmatpush1.bf16.msra.mxu0 0
    %2217 = vmatprep.mubr.bf16.mxu0 0
    %2218 = vmatmul.mubr.bf16.gmra.mrb[0].mxu0 %v1625
    %v2219 = vpop.f32.mrb[0].mxu0
    %v2220 = vadd.f32 %v599, %v2219
    %v2221 = vpop.f32.mrb[0].mxu0
    %v2222 = vpop.f32.mrb[0].mxu0
    %v2223 = vadd.f32 %v599, %v2222
    %v2224 = vpop.f32.mrb[0].mxu0
    %2225 = vmatprep.mubr.bf16.mxu0 0
    %2226 = vmatmul.mubr.bf16.gmra.mrb[0].mxu0 %v1626
    %v2227 = vpop.f32.mrb[0].mxu0
    %v2228 = vadd.f32 %v599, %v2227
    %v2229 = vpop.f32.mrb[0].mxu0
    %v2230 = vpop.f32.mrb[0].mxu0
    %v2231 = vadd.f32 %v599, %v2230
    %v2232 = vpop.f32.mrb[0].mxu0
    %2233 = vmatprep.mubr.bf16.mxu0 0
    %2234 = vmatmul.mubr.bf16.gmra.mrb[0].mxu0 %v1627
    %v2235 = vpop.f32.mrb[0].mxu0
    %v2236 = vadd.f32 %v599, %v2235
    %v2237 = vpop.f32.mrb[0].mxu0
    %v2238 = vpop.f32.mrb[0].mxu0
    %v2239 = vadd.f32 %v599, %v2238
    %v2240 = vpop.f32.mrb[0].mxu0
    %2241 = vmatprep.mubr.bf16.mxu0 0
    %2242 = vmatmul.mubr.bf16.gmra.mrb[0].mxu0 %v1628
    %v2243 = vpop.f32.mrb[0].mxu0
    %v2244 = vadd.f32 %v599, %v2243
    %v2245 = vpop.f32.mrb[0].mxu0
    %v2246 = vpop.f32.mrb[0].mxu0
    %v2247 = vadd.f32 %v599, %v2246
    %v2248 = vpop.f32.mrb[0].mxu0
    %2249 = vmatprep.mubr.bf16.mxu0 0
    %2250 = vmatmul.mubr.bf16.gmra.mrb[0].mxu0 %v1629
    %v2251 = vpop.f32.mrb[0].mxu0
    %v2252 = vadd.f32 %v599, %v2251
    %v2253 = vpop.f32.mrb[0].mxu0
    %v2254 = vpop.f32.mrb[0].mxu0
    %v2255 = vadd.f32 %v599, %v2254
    %v2256 = vpop.f32.mrb[0].mxu0
    %2257 = vmatprep.mubr.bf16.mxu0 0
    %2258 = vmatmul.mubr.bf16.gmra.mrb[0].mxu0 %v1630
    %v2259 = vpop.f32.mrb[0].mxu0
    %v2260 = vadd.f32 %v599, %v2259
    %v2261 = vpop.f32.mrb[0].mxu0
    %v2262 = vpop.f32.mrb[0].mxu0
    %v2263 = vadd.f32 %v599, %v2262
    %v2264 = vpop.f32.mrb[0].mxu0
    %2265 = vmatprep.mubr.bf16.mxu0 0
    %2266 = vmatmul.mubr.bf16.gmra.mrb[0].mxu0 %v1631
    %v2267 = vpop.f32.mrb[0].mxu0
    %v2268 = vadd.f32 %v599, %v2267
    %v2269 = vpop.f32.mrb[0].mxu0
    %v2270 = vpop.f32.mrb[0].mxu0
    %v2271 = vadd.f32 %v599, %v2270
    %v2272 = vpop.f32.mrb[0].mxu0
    %2273 = vmatprep.mubr.bf16.mxu0 0
    %2274 = vmatmul.mubr.bf16.gmra.mrb[0].mxu0 %v1632
    %v2275 = vpop.f32.mrb[0].mxu0
    %v2276 = vadd.f32 %v599, %v2275
    %v2277 = vpop.f32.mrb[0].mxu0
    %v2278 = vpop.f32.mrb[0].mxu0
    %v2279 = vadd.f32 %v599, %v2278
    %v2280 = vpop.f32.mrb[0].mxu0
    %2281 = vmatprep.mubr.bf16.mxu0 0
    %2282 = vmatmul.mubr.bf16.gmra.mrb[0].mxu0 %v1633
    %v2283 = vpop.f32.mrb[0].mxu0
    %v2284 = vadd.f32 %v599, %v2283
    %v2285 = vpop.f32.mrb[0].mxu0
    %v2286 = vpop.f32.mrb[0].mxu0
    %v2287 = vadd.f32 %v599, %v2286
    %v2288 = vpop.f32.mrb[0].mxu0
    %2289 = vmatprep.mubr.bf16.mxu0 0
    %2290 = vmatmul.mubr.bf16.gmra.mrb[0].mxu0 %v1634
    %v2291 = vpop.f32.mrb[0].mxu0
    %v2292 = vadd.f32 %v599, %v2291
    %v2293 = vpop.f32.mrb[0].mxu0
    %v2294 = vpop.f32.mrb[0].mxu0
    %v2295 = vadd.f32 %v599, %v2294
    %v2296 = vpop.f32.mrb[0].mxu0
    %2297 = vmatprep.mubr.bf16.mxu0 0
    %2298 = vmatmul.mubr.bf16.gmra.mrb[0].mxu0 %v1635
    %v2299 = vpop.f32.mrb[0].mxu0
    %v2300 = vadd.f32 %v599, %v2299
    %v2301 = vpop.f32.mrb[0].mxu0
    %v2302 = vpop.f32.mrb[0].mxu0
    %v2303 = vadd.f32 %v599, %v2302
    %v2304 = vpop.f32.mrb[0].mxu0
    %2305 = vmatprep.mubr.bf16.mxu0 0
    %2306 = vmatmul.mubr.bf16.gmra.mrb[0].mxu0 %v1636
    %v2307 = vpop.f32.mrb[0].mxu0
    %v2308 = vadd.f32 %v599, %v2307
    %v2309 = vpop.f32.mrb[0].mxu0
    %v2310 = vpop.f32.mrb[0].mxu0
    %v2311 = vadd.f32 %v599, %v2310
    %v2312 = vpop.f32.mrb[0].mxu0
    %2313 = vmatprep.mubr.bf16.mxu0 0
    %2314 = vmatmul.mubr.bf16.gmra.mrb[0].mxu0 %v1637
    %v2315 = vpop.f32.mrb[0].mxu0
    %v2316 = vadd.f32 %v599, %v2315
    %v2317 = vpop.f32.mrb[0].mxu0
    %v2318 = vpop.f32.mrb[0].mxu0
    %v2319 = vadd.f32 %v599, %v2318
    %v2320 = vpop.f32.mrb[0].mxu0
    %2321 = vmatprep.mubr.bf16.mxu0 0
    %2322 = vmatmul.mubr.bf16.gmra.mrb[0].mxu0 %v1638
    %v2323 = vpop.f32.mrb[0].mxu0
    %v2324 = vadd.f32 %v599, %v2323
    %v2325 = vpop.f32.mrb[0].mxu0
    %v2326 = vpop.f32.mrb[0].mxu0
    %v2327 = vadd.f32 %v599, %v2326
    %v2328 = vpop.f32.mrb[0].mxu0
    %2329 = vmatprep.mubr.bf16.mxu0 0
    %2330 = vmatmul.mubr.bf16.gmra.mrb[0].mxu0 %v1639
    %v2331 = vpop.f32.mrb[0].mxu0
    %v2332 = vadd.f32 %v599, %v2331
    %v2333 = vpop.f32.mrb[0].mxu0
    %v2334 = vpop.f32.mrb[0].mxu0
    %v2335 = vadd.f32 %v599, %v2334
    %v2336 = vpop.f32.mrb[0].mxu0
    %2337 = vmatprep.mubr.bf16.mxu0 0
    %2338 = vmatmul.mubr.bf16.gmra.mrb[0].mxu0 %v1640
    %v2339 = vpop.f32.mrb[0].mxu0
    %v2340 = vadd.f32 %v599, %v2339
    %v2341 = vpop.f32.mrb[0].mxu0
    %v2342 = vpop.f32.mrb[0].mxu0
    %v2343 = vadd.f32 %v599, %v2342
    %v2344 = vpop.f32.mrb[0].mxu0
    %2345 = vmatprep.mubr.bf16.mxu0 0
    %2346 = vmatmul.mubr.bf16.gmra.mrb[0].mxu0 %v1641
    %v2347 = vpop.f32.mrb[0].mxu0
    %v2348 = vadd.f32 %v599, %v2347
    %v2349 = vpop.f32.mrb[0].mxu0
    %v2350 = vpop.f32.mrb[0].mxu0
    %v2351 = vadd.f32 %v599, %v2350
    %v2352 = vpop.f32.mrb[0].mxu0
    %2353 = vmatprep.mubr.bf16.mxu0 0
    %2354 = vmatmul.mubr.bf16.gmra.mrb[0].mxu0 %v1642
    %v2355 = vpop.f32.mrb[0].mxu0
    %v2356 = vadd.f32 %v599, %v2355
    %v2357 = vpop.f32.mrb[0].mxu0
    %v2358 = vpop.f32.mrb[0].mxu0
    %v2359 = vadd.f32 %v599, %v2358
    %v2360 = vpop.f32.mrb[0].mxu0
    %2361 = vmatprep.mubr.bf16.mxu0 0
    %2362 = vmatmul.mubr.bf16.gmra.mrb[0].mxu0 %v1643
    %v2363 = vpop.f32.mrb[0].mxu0
    %v2364 = vadd.f32 %v599, %v2363
    %v2365 = vpop.f32.mrb[0].mxu0
    %v2366 = vpop.f32.mrb[0].mxu0
    %v2367 = vadd.f32 %v599, %v2366
    %v2368 = vpop.f32.mrb[0].mxu0
    %2369 = vmatprep.mubr.bf16.mxu0 0
    %2370 = vmatmul.mubr.bf16.gmra.mrb[0].mxu0 %v1644
    %v2371 = vpop.f32.mrb[0].mxu0
    %v2372 = vadd.f32 %v599, %v2371
    %v2373 = vpop.f32.mrb[0].mxu0
    %v2374 = vpop.f32.mrb[0].mxu0
    %v2375 = vadd.f32 %v599, %v2374
    %v2376 = vpop.f32.mrb[0].mxu0
    %2377 = vmatprep.mubr.bf16.mxu0 0
    %2378 = vmatmul.mubr.bf16.gmra.mrb[0].mxu0 %v1645
    %v2379 = vpop.f32.mrb[0].mxu0
    %v2380 = vadd.f32 %v599, %v2379
    %v2381 = vpop.f32.mrb[0].mxu0
    %v2382 = vpop.f32.mrb[0].mxu0
    %v2383 = vadd.f32 %v599, %v2382
    %v2384 = vpop.f32.mrb[0].mxu0
    %2385 = vmatprep.mubr.bf16.mxu0 0
    %2386 = vmatmul.mubr.bf16.gmra.mrb[0].mxu0 %v1646
    %v2387 = vpop.f32.mrb[0].mxu0
    %v2388 = vadd.f32 %v599, %v2387
    %v2389 = vpop.f32.mrb[0].mxu0
    %v2390 = vpop.f32.mrb[0].mxu0
    %v2391 = vadd.f32 %v599, %v2390
    %v2392 = vpop.f32.mrb[0].mxu0
    %2393 = vmatprep.mubr.bf16.mxu0 0
    %2394 = vmatmul.mubr.bf16.gmra.mrb[0].mxu0 %v1647
    %v2395 = vpop.f32.mrb[0].mxu0
    %v2396 = vadd.f32 %v599, %v2395
    %v2397 = vpop.f32.mrb[0].mxu0
    %v2398 = vpop.f32.mrb[0].mxu0
    %v2399 = vadd.f32 %v599, %v2398
    %v2400 = vpop.f32.mrb[0].mxu0
    %2401 = vmatprep.mubr.bf16.mxu0 0
    %2402 = vmatmul.mubr.bf16.gmra.mrb[0].mxu0 %v1648
    %v2403 = vpop.f32.mrb[0].mxu0
    %v2404 = vadd.f32 %v599, %v2403
    %v2405 = vpop.f32.mrb[0].mxu0
    %v2406 = vpop.f32.mrb[0].mxu0
    %v2407 = vadd.f32 %v599, %v2406
    %v2408 = vpop.f32.mrb[0].mxu0
    %2409 = vmatprep.mubr.bf16.mxu0 0
    %2410 = vmatmul.mubr.bf16.gmra.mrb[0].mxu0 %v1649
    %v2411 = vpop.f32.mrb[0].mxu0
    %v2412 = vadd.f32 %v599, %v2411
    %v2413 = vpop.f32.mrb[0].mxu0
    %v2414 = vpop.f32.mrb[0].mxu0
    %v2415 = vadd.f32 %v599, %v2414
    %v2416 = vpop.f32.mrb[0].mxu0
    %2417 = vmatprep.mubr.bf16.mxu0 0
    %2418 = vmatmul.mubr.bf16.gmra.mrb[0].mxu0 %v1650
    %v2419 = vpop.f32.mrb[0].mxu0
    %v2420 = vadd.f32 %v599, %v2419
    %v2421 = vpop.f32.mrb[0].mxu0
    %v2422 = vpop.f32.mrb[0].mxu0
    %v2423 = vadd.f32 %v599, %v2422
    %v2424 = vpop.f32.mrb[0].mxu0
    %2425 = vmatprep.mubr.bf16.mxu0 0
    %2426 = vmatmul.mubr.bf16.gmra.mrb[0].mxu0 %v1651
    %v2427 = vpop.f32.mrb[0].mxu0
    %v2428 = vadd.f32 %v599, %v2427
    %v2429 = vpop.f32.mrb[0].mxu0
    %v2430 = vpop.f32.mrb[0].mxu0
    %v2431 = vadd.f32 %v599, %v2430
    %v2432 = vpop.f32.mrb[0].mxu0
    %2433 = vmatprep.mubr.bf16.mxu0 0
    %2434 = vmatmul.mubr.bf16.gmra.mrb[0].mxu0 %v1652
    %v2435 = vpop.f32.mrb[0].mxu0
    %v2436 = vadd.f32 %v599, %v2435
    %v2437 = vpop.f32.mrb[0].mxu0
    %v2438 = vpop.f32.mrb[0].mxu0
    %v2439 = vadd.f32 %v599, %v2438
    %v2440 = vpop.f32.mrb[0].mxu0
    %2441 = vmatprep.mubr.bf16.mxu0 0
    %2442 = vmatmul.mubr.bf16.gmra.mrb[0].mxu0 %v1653
    %v2443 = vpop.f32.mrb[0].mxu0
    %v2444 = vadd.f32 %v599, %v2443
    %v2445 = vpop.f32.mrb[0].mxu0
    %v2446 = vpop.f32.mrb[0].mxu0
    %v2447 = vadd.f32 %v599, %v2446
    %v2448 = vpop.f32.mrb[0].mxu0
    %2449 = vmatprep.mubr.bf16.mxu0 0
    %2450 = vmatmul.mubr.bf16.gmra.mrb[0].mxu0 %v1654
    %v2451 = vpop.f32.mrb[0].mxu0
    %v2452 = vadd.f32 %v599, %v2451
    %v2453 = vpop.f32.mrb[0].mxu0
    %v2454 = vpop.f32.mrb[0].mxu0
    %v2455 = vadd.f32 %v599, %v2454
    %v2456 = vpop.f32.mrb[0].mxu0
    %2457 = vmatprep.mubr.bf16.mxu0 0
    %2458 = vmatmul.mubr.bf16.gmra.mrb[0].mxu0 %v1655
    %v2459 = vpop.f32.mrb[0].mxu0
    %v2460 = vadd.f32 %v599, %v2459
    %v2461 = vpop.f32.mrb[0].mxu0
    %v2462 = vpop.f32.mrb[0].mxu0
    %v2463 = vadd.f32 %v599, %v2462
    %v2464 = vpop.f32.mrb[0].mxu0
    %2465 = vmatprep.mubr.bf16.mxu0 0
    %2466 = vmatmul.mubr.bf16.gmra.mrb[0].mxu0 %v1656
    %v2467 = vpop.f32.mrb[0].mxu0
    %v2468 = vadd.f32 %v599, %v2467
    %v2469 = vpop.f32.mrb[0].mxu0
    %v2470 = vpop.f32.mrb[0].mxu0
    %v2471 = vadd.f32 %v599, %v2470
    %v2472 = vpop.f32.mrb[0].mxu0
    %2473 = vmatprep.mubr.bf16.mxu0 0
    %2474 = vmatmul.mubr.bf16.gmra.mrb[0].mxu0 %v1657
    %v2475 = vpop.f32.mrb[0].mxu0
    %v2476 = vadd.f32 %v599, %v2475
    %v2477 = vpop.f32.mrb[0].mxu0
    %v2478 = vpop.f32.mrb[0].mxu0
    %v2479 = vadd.f32 %v599, %v2478
    %v2480 = vpop.f32.mrb[0].mxu0
    %2481 = vmatprep.mubr.bf16.mxu0 0
    %2482 = vmatmul.mubr.bf16.gmra.mrb[0].mxu0 %v1658
    %v2483 = vpop.f32.mrb[0].mxu0
    %v2484 = vadd.f32 %v599, %v2483
    %v2485 = vpop.f32.mrb[0].mxu0
    %v2486 = vpop.f32.mrb[0].mxu0
    %v2487 = vadd.f32 %v599, %v2486
    %v2488 = vpop.f32.mrb[0].mxu0
    %2489 = vmatprep.mubr.bf16.mxu0 0
    %2490 = vmatmul.mubr.bf16.gmra.mrb[0].mxu0 %v1659
    %v2491 = vpop.f32.mrb[0].mxu0
    %v2492 = vadd.f32 %v599, %v2491
    %v2493 = vpop.f32.mrb[0].mxu0
    %v2494 = vpop.f32.mrb[0].mxu0
    %v2495 = vadd.f32 %v599, %v2494
    %v2496 = vpop.f32.mrb[0].mxu0
    %2497 = vmatprep.mubr.bf16.mxu0 0
    %2498 = vmatmul.mubr.bf16.gmra.mrb[0].mxu0 %v1660
    %v2499 = vpop.f32.mrb[0].mxu0
    %v2500 = vadd.f32 %v599, %v2499
    %v2501 = vpop.f32.mrb[0].mxu0
    %v2502 = vpop.f32.mrb[0].mxu0
    %v2503 = vadd.f32 %v599, %v2502
    %v2504 = vpop.f32.mrb[0].mxu0
    %2505 = vmatprep.mubr.bf16.mxu0 0
    %2506 = vmatmul.mubr.bf16.gmra.mrb[0].mxu0 %v1661
    %v2507 = vpop.f32.mrb[0].mxu0
    %v2508 = vadd.f32 %v599, %v2507
    %v2509 = vpop.f32.mrb[0].mxu0
    %v2510 = vpop.f32.mrb[0].mxu0
    %v2511 = vadd.f32 %v599, %v2510
    %v2512 = vpop.f32.mrb[0].mxu0
    %2513 = vmatprep.mubr.bf16.mxu0 0
    %2514 = vmatmul.mubr.bf16.gmra.mrb[0].mxu0 %v1662
    %v2515 = vpop.f32.mrb[0].mxu0
    %v2516 = vadd.f32 %v599, %v2515
    %v2517 = vpop.f32.mrb[0].mxu0
    %v2518 = vpop.f32.mrb[0].mxu0
    %v2519 = vadd.f32 %v599, %v2518
    %v2520 = vpop.f32.mrb[0].mxu0
    %2521 = vmatprep.mubr.bf16.mxu0 0
    %2522 = vmatmul.mubr.bf16.gmra.mrb[0].mxu0 %v1663
    %v2523 = vpop.f32.mrb[0].mxu0
    %v2524 = vadd.f32 %v599, %v2523
    %v2525 = vpop.f32.mrb[0].mxu0
    %v2526 = vpop.f32.mrb[0].mxu0
    %v2527 = vadd.f32 %v599, %v2526
    %v2528 = vpop.f32.mrb[0].mxu0
    %2529 = vmatprep.mubr.bf16.mxu0 0
    %2530 = vmatmul.mubr.bf16.gmra.mrb[0].mxu0 %v1664
    %v2531 = vpop.f32.mrb[0].mxu0
    %v2532 = vadd.f32 %v599, %v2531
    %v2533 = vpop.f32.mrb[0].mxu0
    %v2534 = vpop.f32.mrb[0].mxu0
    %v2535 = vadd.f32 %v599, %v2534
    %v2536 = vpop.f32.mrb[0].mxu0
    %2537 = vmatprep.mubr.bf16.mxu0 0
    %2538 = vmatmul.mubr.bf16.gmra.mrb[0].mxu0 %v1665
    %v2539 = vpop.f32.mrb[0].mxu0
    %v2540 = vadd.f32 %v599, %v2539
    %v2541 = vpop.f32.mrb[0].mxu0
    %v2542 = vpop.f32.mrb[0].mxu0
    %v2543 = vadd.f32 %v599, %v2542
    %v2544 = vpop.f32.mrb[0].mxu0
    %2545 = vmatprep.mubr.bf16.mxu0 0
    %2546 = vmatmul.mubr.bf16.gmra.mrb[0].mxu0 %v1666
    %v2547 = vpop.f32.mrb[0].mxu0
    %v2548 = vadd.f32 %v599, %v2547
    %v2549 = vpop.f32.mrb[0].mxu0
    %v2550 = vpop.f32.mrb[0].mxu0
    %v2551 = vadd.f32 %v599, %v2550
    %v2552 = vpop.f32.mrb[0].mxu0
    %2553 = vmatprep.mubr.bf16.mxu0 0
    %2554 = vmatmul.mubr.bf16.gmra.mrb[0].mxu0 %v1667
    %v2555 = vpop.f32.mrb[0].mxu0
    %v2556 = vadd.f32 %v599, %v2555
    %v2557 = vpop.f32.mrb[0].mxu0
    %v2558 = vpop.f32.mrb[0].mxu0
    %v2559 = vadd.f32 %v599, %v2558
    %v2560 = vpop.f32.mrb[0].mxu0
    %2561 = vmatprep.mubr.bf16.mxu0 0
    %2562 = vmatmul.mubr.bf16.gmra.mrb[0].mxu0 %v1668
    %v2563 = vpop.f32.mrb[0].mxu0
    %v2564 = vadd.f32 %v599, %v2563
    %v2565 = vpop.f32.mrb[0].mxu0
    %v2566 = vpop.f32.mrb[0].mxu0
    %v2567 = vadd.f32 %v599, %v2566
    %v2568 = vpop.f32.mrb[0].mxu0
    %2569 = vmatprep.mubr.bf16.mxu0 0
    %2570 = vmatmul.mubr.bf16.gmra.mrb[0].mxu0 %v1669
    %v2571 = vpop.f32.mrb[0].mxu0
    %v2572 = vadd.f32 %v599, %v2571
    %v2573 = vpop.f32.mrb[0].mxu0
    %v2574 = vpop.f32.mrb[0].mxu0
    %v2575 = vadd.f32 %v599, %v2574
    %v2576 = vpop.f32.mrb[0].mxu0
    %2577 = vmatprep.mubr.bf16.mxu0 0
    %2578 = vmatmul.mubr.bf16.gmra.mrb[0].mxu0 %v1670
    %v2579 = vpop.f32.mrb[0].mxu0
    %v2580 = vadd.f32 %v599, %v2579
    %v2581 = vpop.f32.mrb[0].mxu0
    %v2582 = vpop.f32.mrb[0].mxu0
    %v2583 = vadd.f32 %v599, %v2582
    %v2584 = vpop.f32.mrb[0].mxu0
    %2585 = vmatprep.mubr.bf16.mxu0 0
    %2586 = vmatmul.mubr.bf16.gmra.mrb[0].mxu0 %v1671
    %v2587 = vpop.f32.mrb[0].mxu0
    %v2588 = vadd.f32 %v599, %v2587
    %v2589 = vpop.f32.mrb[0].mxu0
    %v2590 = vpop.f32.mrb[0].mxu0
    %v2591 = vadd.f32 %v599, %v2590
    %v2592 = vpop.f32.mrb[0].mxu0
    %2593 = vmatprep.mubr.bf16.mxu0 0
    %2594 = vmatmul.mubr.bf16.gmra.mrb[0].mxu0 %v1672
    %v2595 = vpop.f32.mrb[0].mxu0
    %v2596 = vadd.f32 %v599, %v2595
    %v2597 = vpop.f32.mrb[0].mxu0
    %v2598 = vpop.f32.mrb[0].mxu0
    %v2599 = vadd.f32 %v599, %v2598
    %v2600 = vpop.f32.mrb[0].mxu0
    %2601 = vmatprep.mubr.bf16.mxu0 0
    %2602 = vmatmul.mubr.bf16.gmra.mrb[0].mxu0 %v1673
    %v2603 = vpop.f32.mrb[0].mxu0
    %v2604 = vadd.f32 %v599, %v2603
    %v2605 = vpop.f32.mrb[0].mxu0
    %v2606 = vpop.f32.mrb[0].mxu0
    %v2607 = vadd.f32 %v599, %v2606
    %v2608 = vpop.f32.mrb[0].mxu0
    %2609 = vmatprep.mubr.bf16.mxu0 0
    %2610 = vmatmul.mubr.bf16.gmra.mrb[0].mxu0 %v1674
    %v2611 = vpop.f32.mrb[0].mxu0
    %v2612 = vadd.f32 %v599, %v2611
    %v2613 = vpop.f32.mrb[0].mxu0
    %v2614 = vpop.f32.mrb[0].mxu0
    %v2615 = vadd.f32 %v599, %v2614
    %v2616 = vpop.f32.mrb[0].mxu0
    %2617 = vmatprep.mubr.bf16.mxu0 0
    %2618 = vmatmul.mubr.bf16.gmra.mrb[0].mxu0 %v1675
    %v2619 = vpop.f32.mrb[0].mxu0
    %v2620 = vadd.f32 %v599, %v2619
    %v2621 = vpop.f32.mrb[0].mxu0
    %v2622 = vpop.f32.mrb[0].mxu0
    %v2623 = vadd.f32 %v599, %v2622
    %v2624 = vpop.f32.mrb[0].mxu0
    %2625 = vmatprep.mubr.bf16.mxu0 0
    %2626 = vmatmul.mubr.bf16.gmra.mrb[0].mxu0 %v1676
    %v2627 = vpop.f32.mrb[0].mxu0
    %v2628 = vadd.f32 %v599, %v2627
    %v2629 = vpop.f32.mrb[0].mxu0
    %v2630 = vpop.f32.mrb[0].mxu0
    %v2631 = vadd.f32 %v599, %v2630
    %v2632 = vpop.f32.mrb[0].mxu0
    %2633 = vmatprep.mubr.bf16.mxu0 0
    %2634 = vmatmul.mubr.bf16.gmra.mrb[0].mxu0 %v1677
    %v2635 = vpop.f32.mrb[0].mxu0
    %v2636 = vadd.f32 %v599, %v2635
    %v2637 = vpop.f32.mrb[0].mxu0
    %v2638 = vpop.f32.mrb[0].mxu0
    %v2639 = vadd.f32 %v599, %v2638
    %v2640 = vpop.f32.mrb[0].mxu0
    %2641 = vmatprep.mubr.bf16.mxu0 0
    %2642 = vmatmul.mubr.bf16.gmra.mrb[0].mxu0 %v1678
    %v2643 = vpop.f32.mrb[0].mxu0
    %v2644 = vadd.f32 %v599, %v2643
    %v2645 = vpop.f32.mrb[0].mxu0
    %v2646 = vpop.f32.mrb[0].mxu0
    %v2647 = vadd.f32 %v599, %v2646
    %v2648 = vpop.f32.mrb[0].mxu0
    %2649 = vmatprep.mubr.bf16.mxu0 0
    %2650 = vmatmul.mubr.bf16.gmra.mrb[0].mxu0 %v1679
    %v2651 = vpop.f32.mrb[0].mxu0
    %v2652 = vadd.f32 %v599, %v2651
    %v2653 = vpop.f32.mrb[0].mxu0
    %v2654 = vpop.f32.mrb[0].mxu0
    %v2655 = vadd.f32 %v599, %v2654
    %v2656 = vpop.f32.mrb[0].mxu0
    %2657 = vmatprep.mubr.bf16.mxu0 0
    %2658 = vmatmul.mubr.bf16.gmra.mrb[0].mxu0 %v1680
    %v2659 = vpop.f32.mrb[0].mxu0
    %v2660 = vadd.f32 %v599, %v2659
    %v2661 = vpop.f32.mrb[0].mxu0
    %v2662 = vpop.f32.mrb[0].mxu0
    %v2663 = vadd.f32 %v599, %v2662
    %v2664 = vpop.f32.mrb[0].mxu0
    %2665 = vmatprep.mubr.bf16.mxu0 0
    %2666 = vmatmul.mubr.bf16.gmra.mrb[0].mxu0 %v1681
    %v2667 = vpop.f32.mrb[0].mxu0
    %v2668 = vadd.f32 %v599, %v2667
    %v2669 = vpop.f32.mrb[0].mxu0
    %v2670 = vpop.f32.mrb[0].mxu0
    %v2671 = vadd.f32 %v599, %v2670
    %v2672 = vpop.f32.mrb[0].mxu0
    %2673 = vmatprep.mubr.bf16.mxu0 0
    %2674 = vmatmul.mubr.bf16.gmra.mrb[0].mxu0 %v1682
    %v2675 = vpop.f32.mrb[0].mxu0
    %v2676 = vadd.f32 %v599, %v2675
    %v2677 = vpop.f32.mrb[0].mxu0
    %v2678 = vpop.f32.mrb[0].mxu0
    %v2679 = vadd.f32 %v599, %v2678
    %v2680 = vpop.f32.mrb[0].mxu0
    %2681 = vmatprep.mubr.bf16.mxu0 0
    %2682 = vmatmul.mubr.bf16.gmra.mrb[0].mxu0 %v1683
    %v2683 = vpop.f32.mrb[0].mxu0
    %v2684 = vadd.f32 %v599, %v2683
    %v2685 = vpop.f32.mrb[0].mxu0
    %v2686 = vpop.f32.mrb[0].mxu0
    %v2687 = vadd.f32 %v599, %v2686
    %v2688 = vpop.f32.mrb[0].mxu0
    %2689 = vmatprep.mubr.bf16.mxu0 0
    %2690 = vmatmul.mubr.bf16.gmra.mrb[0].mxu0 %v1684
    %v2691 = vpop.f32.mrb[0].mxu0
    %v2692 = vadd.f32 %v599, %v2691
    %v2693 = vpop.f32.mrb[0].mxu0
    %v2694 = vpop.f32.mrb[0].mxu0
    %v2695 = vadd.f32 %v599, %v2694
    %v2696 = vpop.f32.mrb[0].mxu0
    %2697 = vmatprep.mubr.bf16.mxu0 0
    %2698 = vmatmul.mubr.bf16.gmra.mrb[0].mxu0 %v1685
    %v2699 = vpop.f32.mrb[0].mxu0
    %v2700 = vadd.f32 %v599, %v2699
    %v2701 = vpop.f32.mrb[0].mxu0
    %v2702 = vpop.f32.mrb[0].mxu0
    %v2703 = vadd.f32 %v599, %v2702
    %v2704 = vpop.f32.mrb[0].mxu0
    %2705 = vmatprep.mubr.bf16.mxu0 0
    %2706 = vmatmul.mubr.bf16.gmra.mrb[0].mxu0 %v1686
    %v2707 = vpop.f32.mrb[0].mxu0
    %v2708 = vadd.f32 %v599, %v2707
    %v2709 = vpop.f32.mrb[0].mxu0
    %v2710 = vpop.f32.mrb[0].mxu0
    %v2711 = vadd.f32 %v599, %v2710
    %v2712 = vpop.f32.mrb[0].mxu0
    %2713 = vmatprep.mubr.bf16.mxu0 0
    %2714 = vmatmul.mubr.bf16.gmra.mrb[0].mxu0 %v1687
    %v2715 = vpop.f32.mrb[0].mxu0
    %v2716 = vadd.f32 %v599, %v2715
    %v2717 = vpop.f32.mrb[0].mxu0
    %v2718 = vpop.f32.mrb[0].mxu0
    %v2719 = vadd.f32 %v599, %v2718
    %v2720 = vpop.f32.mrb[0].mxu0
    %2721 = vmatprep.mubr.bf16.mxu0 0
    %2722 = vmatmul.mubr.bf16.gmra.mrb[0].mxu0 %v1688
    %v2723 = vpop.f32.mrb[0].mxu0
    %v2724 = vadd.f32 %v599, %v2723
    %v2725 = vpop.f32.mrb[0].mxu0
    %v2726 = vpop.f32.mrb[0].mxu0
    %v2727 = vadd.f32 %v599, %v2726
    %v2728 = vpop.f32.mrb[0].mxu0
    %2729 = vmatprep.mubr.bf16.mxu0 0
    %2730 = vmatmul.mubr.bf16.gmra.mrb[0].mxu0 %v1689
    %v2731 = vpop.f32.mrb[0].mxu0
    %v2732 = vadd.f32 %v599, %v2731
    %v2733 = vpop.f32.mrb[0].mxu0
    %v2734 = vpop.f32.mrb[0].mxu0
    %v2735 = vadd.f32 %v599, %v2734
    %v2736 = vpop.f32.mrb[0].mxu0
    %2737 = vmatprep.mubr.bf16.mxu0 0
    %2738 = vmatmul.mubr.bf16.gmra.mrb[0].mxu0 %v1690
    %v2739 = vpop.f32.mrb[0].mxu0
    %v2740 = vadd.f32 %v599, %v2739
    %v2741 = vpop.f32.mrb[0].mxu0
    %v2742 = vpop.f32.mrb[0].mxu0
    %v2743 = vadd.f32 %v599, %v2742
    %v2744 = vpop.f32.mrb[0].mxu0
    %2745 = vmatprep.mubr.bf16.mxu0 0
    %2746 = vmatmul.mubr.bf16.gmra.mrb[0].mxu0 %v1691
    %v2747 = vpop.f32.mrb[0].mxu0
    %v2748 = vadd.f32 %v599, %v2747
    %v2749 = vpop.f32.mrb[0].mxu0
    %v2750 = vpop.f32.mrb[0].mxu0
    %v2751 = vadd.f32 %v599, %v2750
    %v2752 = vpop.f32.mrb[0].mxu0
    %2753 = vmatprep.mubr.bf16.mxu0 0
    %2754 = vmatmul.mubr.bf16.gmra.mrb[0].mxu0 %v1692
    %v2755 = vpop.f32.mrb[0].mxu0
    %v2756 = vadd.f32 %v599, %v2755
    %v2757 = vpop.f32.mrb[0].mxu0
    %v2758 = vpop.f32.mrb[0].mxu0
    %v2759 = vadd.f32 %v599, %v2758
    %v2760 = vpop.f32.mrb[0].mxu0
    %2761 = vmatprep.mubr.bf16.mxu0 0
    %2762 = vmatmul.mubr.bf16.gmra.mrb[0].mxu0 %v1693
    %v2763 = vpop.f32.mrb[0].mxu0
    %v2764 = vadd.f32 %v599, %v2763
    %v2765 = vpop.f32.mrb[0].mxu0
    %v2766 = vpop.f32.mrb[0].mxu0
    %v2767 = vadd.f32 %v599, %v2766
    %v2768 = vpop.f32.mrb[0].mxu0
    %2769 = vmatprep.mubr.bf16.mxu0 0
    %2770 = vmatmul.mubr.bf16.gmra.mrb[0].mxu0 %v1694
    %v2771 = vpop.f32.mrb[0].mxu0
    %v2772 = vadd.f32 %v599, %v2771
    %v2773 = vpop.f32.mrb[0].mxu0
    %v2774 = vpop.f32.mrb[0].mxu0
    %v2775 = vadd.f32 %v599, %v2774
    %v2776 = vpop.f32.mrb[0].mxu0
    %2777 = vmatprep.mubr.bf16.mxu0 0
    %2778 = vmatmul.mubr.bf16.gmra.mrb[0].mxu0 %v1695
    %v2779 = vpop.f32.mrb[0].mxu0
    %v2780 = vadd.f32 %v599, %v2779
    %v2781 = vpop.f32.mrb[0].mxu0
    %v2782 = vpop.f32.mrb[0].mxu0
    %v2783 = vadd.f32 %v599, %v2782
    %v2784 = vpop.f32.mrb[0].mxu0
    %2785 = vmatprep.mubr.bf16.mxu0 0
    %2786 = vmatmul.mubr.bf16.gmra.mrb[0].mxu0 %v1696
    %v2787 = vpop.f32.mrb[0].mxu0
    %v2788 = vadd.f32 %v599, %v2787
    %v2789 = vpop.f32.mrb[0].mxu0
    %v2790 = vpop.f32.mrb[0].mxu0
    %v2791 = vadd.f32 %v599, %v2790
    %v2792 = vpop.f32.mrb[0].mxu0
    %2793 = vmatprep.mubr.bf16.mxu0 0
    %2794 = vmatmul.mubr.bf16.gmra.mrb[0].mxu0 %v1697
    %v2795 = vpop.f32.mrb[0].mxu0
    %v2796 = vadd.f32 %v599, %v2795
    %v2797 = vpop.f32.mrb[0].mxu0
    %v2798 = vpop.f32.mrb[0].mxu0
    %v2799 = vadd.f32 %v599, %v2798
    %v2800 = vpop.f32.mrb[0].mxu0
    %2801 = vmatprep.mubr.bf16.mxu0 0
    %2802 = vmatmul.mubr.bf16.gmra.mrb[0].mxu0 %v1698
    %v2803 = vpop.f32.mrb[0].mxu0
    %v2804 = vadd.f32 %v599, %v2803
    %v2805 = vpop.f32.mrb[0].mxu0
    %v2806 = vpop.f32.mrb[0].mxu0
    %v2807 = vadd.f32 %v599, %v2806
    %v2808 = vpop.f32.mrb[0].mxu0
    %2809 = vmatprep.mubr.bf16.mxu0 0
    %2810 = vmatmul.mubr.bf16.gmra.mrb[0].mxu0 %v1699
    %v2811 = vpop.f32.mrb[0].mxu0
    %v2812 = vadd.f32 %v599, %v2811
    %v2813 = vpop.f32.mrb[0].mxu0
    %v2814 = vpop.f32.mrb[0].mxu0
    %v2815 = vadd.f32 %v599, %v2814
    %v2816 = vpop.f32.mrb[0].mxu0
    %2817 = vmatprep.mubr.bf16.mxu0 0
    %2818 = vmatmul.mubr.bf16.gmra.mrb[0].mxu0 %v1700
    %v2819 = vpop.f32.mrb[0].mxu0
    %v2820 = vadd.f32 %v599, %v2819
    %v2821 = vpop.f32.mrb[0].mxu0
    %v2822 = vpop.f32.mrb[0].mxu0
    %v2823 = vadd.f32 %v599, %v2822
    %v2824 = vpop.f32.mrb[0].mxu0
    %2825 = vmatprep.mubr.bf16.mxu0 0
    %2826 = vmatmul.mubr.bf16.gmra.mrb[0].mxu0 %v1701
    %v2827 = vpop.f32.mrb[0].mxu0
    %v2828 = vadd.f32 %v599, %v2827
    %v2829 = vpop.f32.mrb[0].mxu0
    %v2830 = vpop.f32.mrb[0].mxu0
    %v2831 = vadd.f32 %v599, %v2830
    %v2832 = vpop.f32.mrb[0].mxu0
    %2833 = vmatprep.mubr.bf16.mxu0 0
    %2834 = vmatmul.mubr.bf16.gmra.mrb[0].mxu0 %v1702
    %v2835 = vpop.f32.mrb[0].mxu0
    %v2836 = vadd.f32 %v599, %v2835
    %v2837 = vpop.f32.mrb[0].mxu0
    %v2838 = vpop.f32.mrb[0].mxu0
    %v2839 = vadd.f32 %v599, %v2838
    %v2840 = vpop.f32.mrb[0].mxu0
    %2841 = vmatprep.mubr.bf16.mxu0 0
    %2842 = vmatmul.mubr.bf16.gmra.mrb[0].mxu0 %v1703
    %v2843 = vpop.f32.mrb[0].mxu0
    %v2844 = vadd.f32 %v599, %v2843
    %v2845 = vpop.f32.mrb[0].mxu0
    %v2846 = vpop.f32.mrb[0].mxu0
    %v2847 = vadd.f32 %v599, %v2846
    %v2848 = vpop.f32.mrb[0].mxu0
    %2849 = vmatprep.mubr.bf16.mxu0 0
    %2850 = vmatmul.mubr.bf16.gmra.mrb[0].mxu0 %v1704
    %v2851 = vpop.f32.mrb[0].mxu0
    %v2852 = vadd.f32 %v599, %v2851
    %v2853 = vpop.f32.mrb[0].mxu0
    %v2854 = vpop.f32.mrb[0].mxu0
    %v2855 = vadd.f32 %v599, %v2854
    %v2856 = vpop.f32.mrb[0].mxu0
    %2857 = vmatprep.mubr.bf16.mxu0 0
    %2858 = vmatmul.mubr.bf16.gmra.mrb[0].mxu0 %v1705
    %v2859 = vpop.f32.mrb[0].mxu0
    %v2860 = vadd.f32 %v599, %v2859
    %v2861 = vpop.f32.mrb[0].mxu0
    %v2862 = vpop.f32.mrb[0].mxu0
    %v2863 = vadd.f32 %v599, %v2862
    %v2864 = vpop.f32.mrb[0].mxu0
    %2865 = vmatprep.mubr.bf16.mxu0 0
    %2866 = vmatmul.mubr.bf16.gmra.mrb[0].mxu0 %v1706
    %v2867 = vpop.f32.mrb[0].mxu0
    %v2868 = vadd.f32 %v599, %v2867
    %v2869 = vpop.f32.mrb[0].mxu0
    %v2870 = vpop.f32.mrb[0].mxu0
    %v2871 = vadd.f32 %v599, %v2870
    %v2872 = vpop.f32.mrb[0].mxu0
    %2873 = vmatprep.mubr.bf16.mxu0 0
    %2874 = vmatmul.mubr.bf16.gmra.mrb[0].mxu0 %v1707
    %v2875 = vpop.f32.mrb[0].mxu0
    %v2876 = vadd.f32 %v599, %v2875
    %v2877 = vpop.f32.mrb[0].mxu0
    %v2878 = vpop.f32.mrb[0].mxu0
    %v2879 = vadd.f32 %v599, %v2878
    %v2880 = vpop.f32.mrb[0].mxu0
    %2881 = vmatprep.mubr.bf16.mxu0 0
    %2882 = vmatmul.mubr.bf16.gmra.mrb[0].mxu0 %v1708
    %v2883 = vpop.f32.mrb[0].mxu0
    %v2884 = vadd.f32 %v599, %v2883
    %v2885 = vpop.f32.mrb[0].mxu0
    %v2886 = vpop.f32.mrb[0].mxu0
    %v2887 = vadd.f32 %v599, %v2886
    %v2888 = vpop.f32.mrb[0].mxu0
    %2889 = vmatprep.mubr.bf16.mxu0 0
    %2890 = vmatmul.mubr.bf16.gmra.mrb[0].mxu0 %v1709
    %v2891 = vpop.f32.mrb[0].mxu0
    %v2892 = vadd.f32 %v599, %v2891
    %v2893 = vpop.f32.mrb[0].mxu0
    %v2894 = vpop.f32.mrb[0].mxu0
    %v2895 = vadd.f32 %v599, %v2894
    %v2896 = vpop.f32.mrb[0].mxu0
    %2897 = vmatprep.mubr.bf16.mxu0 0
    %2898 = vmatmul.mubr.bf16.gmra.mrb[0].mxu0 %v1710
    %v2899 = vpop.f32.mrb[0].mxu0
    %v2900 = vadd.f32 %v599, %v2899
    %v2901 = vpop.f32.mrb[0].mxu0
    %v2902 = vpop.f32.mrb[0].mxu0
    %v2903 = vadd.f32 %v599, %v2902
    %v2904 = vpop.f32.mrb[0].mxu0
    %2905 = vmatprep.mubr.bf16.mxu0 0
    %2906 = vmatmul.mubr.bf16.gmra.mrb[0].mxu0 %v1711
    %v2907 = vpop.f32.mrb[0].mxu0
    %v2908 = vadd.f32 %v599, %v2907
    %v2909 = vpop.f32.mrb[0].mxu0
    %v2910 = vpop.f32.mrb[0].mxu0
    %v2911 = vadd.f32 %v599, %v2910
    %v2912 = vpop.f32.mrb[0].mxu0
    %2913 = vmatprep.mubr.bf16.mxu0 0
    %2914 = vmatmul.mubr.bf16.gmra.mrb[0].mxu0 %v1712
    %v2915 = vpop.f32.mrb[0].mxu0
    %v2916 = vadd.f32 %v599, %v2915
    %v2917 = vpop.f32.mrb[0].mxu0
    %v2918 = vpop.f32.mrb[0].mxu0
    %v2919 = vadd.f32 %v599, %v2918
    %v2920 = vpop.f32.mrb[0].mxu0
    %2921 = vmatprep.mubr.bf16.mxu0 0
    %2922 = vmatmul.mubr.bf16.gmra.mrb[0].mxu0 %v1713
    %v2923 = vpop.f32.mrb[0].mxu0
    %v2924 = vadd.f32 %v599, %v2923
    %v2925 = vpop.f32.mrb[0].mxu0
    %v2926 = vpop.f32.mrb[0].mxu0
    %v2927 = vadd.f32 %v599, %v2926
    %v2928 = vpop.f32.mrb[0].mxu0
    %2929 = vmatprep.mubr.bf16.mxu0 0
    %2930 = vmatmul.mubr.bf16.gmra.mrb[0].mxu0 %v1714
    %v2931 = vpop.f32.mrb[0].mxu0
    %v2932 = vadd.f32 %v599, %v2931
    %v2933 = vpop.f32.mrb[0].mxu0
    %v2934 = vpop.f32.mrb[0].mxu0
    %v2935 = vadd.f32 %v599, %v2934
    %v2936 = vpop.f32.mrb[0].mxu0
    %2937 = vmatprep.mubr.bf16.mxu0 0
    %2938 = vmatmul.mubr.bf16.gmra.mrb[0].mxu0 %v1715
    %v2939 = vpop.f32.mrb[0].mxu0
    %v2940 = vadd.f32 %v599, %v2939
    %v2941 = vpop.f32.mrb[0].mxu0
    %v2942 = vpop.f32.mrb[0].mxu0
    %v2943 = vadd.f32 %v599, %v2942
    %v2944 = vpop.f32.mrb[0].mxu0
    %2945 = vmatprep.mubr.bf16.mxu0 0
    %2946 = vmatmul.mubr.bf16.gmra.mrb[0].mxu0 %v1716
    %v2947 = vpop.f32.mrb[0].mxu0
    %v2948 = vadd.f32 %v599, %v2947
    %v2949 = vpop.f32.mrb[0].mxu0
    %v2950 = vpop.f32.mrb[0].mxu0
    %v2951 = vadd.f32 %v599, %v2950
    %v2952 = vpop.f32.mrb[0].mxu0
    %2953 = vmatprep.mubr.bf16.mxu0 0
    %2954 = vmatmul.mubr.bf16.gmra.mrb[0].mxu0 %v1717
    %v2955 = vpop.f32.mrb[0].mxu0
    %v2956 = vadd.f32 %v599, %v2955
    %v2957 = vpop.f32.mrb[0].mxu0
    %v2958 = vpop.f32.mrb[0].mxu0
    %v2959 = vadd.f32 %v599, %v2958
    %v2960 = vpop.f32.mrb[0].mxu0
    %2961 = vmatprep.mubr.bf16.mxu0 0
    %2962 = vmatmul.mubr.bf16.gmra.mrb[0].mxu0 %v1718
    %v2963 = vpop.f32.mrb[0].mxu0
    %v2964 = vadd.f32 %v599, %v2963
    %v2965 = vpop.f32.mrb[0].mxu0
    %v2966 = vpop.f32.mrb[0].mxu0
    %v2967 = vadd.f32 %v599, %v2966
    %v2968 = vpop.f32.mrb[0].mxu0
    %2969 = vmatprep.mubr.bf16.mxu0 0
    %2970 = vmatmul.mubr.bf16.gmra.mrb[0].mxu0 %v1719
    %v2971 = vpop.f32.mrb[0].mxu0
    %v2972 = vadd.f32 %v599, %v2971
    %v2973 = vpop.f32.mrb[0].mxu0
    %v2974 = vpop.f32.mrb[0].mxu0
    %v2975 = vadd.f32 %v599, %v2974
    %v2976 = vpop.f32.mrb[0].mxu0
    %2977 = vmatprep.mubr.bf16.mxu0 0
    %2978 = vmatmul.mubr.bf16.gmra.mrb[0].mxu0 %v1720
    %v2979 = vpop.f32.mrb[0].mxu0
    %v2980 = vadd.f32 %v599, %v2979
    %v2981 = vpop.f32.mrb[0].mxu0
    %v2982 = vpop.f32.mrb[0].mxu0
    %v2983 = vadd.f32 %v599, %v2982
    %v2984 = vpop.f32.mrb[0].mxu0
    %2985 = vmatprep.mubr.bf16.mxu0 0
    %2986 = vmatmul.mubr.bf16.gmra.mrb[0].mxu0 %v1721
    %v2987 = vpop.f32.mrb[0].mxu0
    %v2988 = vadd.f32 %v599, %v2987
    %v2989 = vpop.f32.mrb[0].mxu0
    %v2990 = vpop.f32.mrb[0].mxu0
    %v2991 = vadd.f32 %v599, %v2990
    %v2992 = vpop.f32.mrb[0].mxu0
    %2993 = vmatprep.mubr.bf16.mxu0 0
    %2994 = vmatmul.mubr.bf16.gmra.mrb[0].mxu0 %v1722
    %v2995 = vpop.f32.mrb[0].mxu0
    %v2996 = vadd.f32 %v599, %v2995
    %v2997 = vpop.f32.mrb[0].mxu0
    %v2998 = vpop.f32.mrb[0].mxu0
    %v2999 = vadd.f32 %v599, %v2998
    %v3000 = vpop.f32.mrb[0].mxu0
    %3001 = vmatprep.mubr.bf16.mxu0 0
    %3002 = vmatmul.mubr.bf16.gmra.mrb[0].mxu0 %v1723
    %v3003 = vpop.f32.mrb[0].mxu0
    %v3004 = vadd.f32 %v599, %v3003
    %v3005 = vpop.f32.mrb[0].mxu0
    %v3006 = vpop.f32.mrb[0].mxu0
    %v3007 = vadd.f32 %v599, %v3006
    %v3008 = vpop.f32.mrb[0].mxu0
    %3009 = vmatprep.mubr.bf16.mxu0 0
    %3010 = vmatmul.mubr.bf16.gmra.mrb[0].mxu0 %v1724
    %v3011 = vpop.f32.mrb[0].mxu0
    %v3012 = vadd.f32 %v599, %v3011
    %v3013 = vpop.f32.mrb[0].mxu0
    %v3014 = vpop.f32.mrb[0].mxu0
    %v3015 = vadd.f32 %v599, %v3014
    %v3016 = vpop.f32.mrb[0].mxu0
    %3017 = vmatprep.mubr.bf16.mxu0 0
    %3018 = vmatmul.mubr.bf16.gmra.mrb[0].mxu0 %v1725
    %v3019 = vpop.f32.mrb[0].mxu0
    %v3020 = vadd.f32 %v599, %v3019
    %v3021 = vpop.f32.mrb[0].mxu0
    %v3022 = vpop.f32.mrb[0].mxu0
    %v3023 = vadd.f32 %v599, %v3022
    %v3024 = vpop.f32.mrb[0].mxu0
    %3025 = vmatprep.mubr.bf16.mxu0 0
    %3026 = vmatmul.mubr.bf16.gmra.mrb[0].mxu0 %v1726
    %v3027 = vpop.f32.mrb[0].mxu0
    %v3028 = vadd.f32 %v599, %v3027
    %v3029 = vpop.f32.mrb[0].mxu0
    %v3030 = vpop.f32.mrb[0].mxu0
    %v3031 = vadd.f32 %v599, %v3030
    %v3032 = vpop.f32.mrb[0].mxu0
    %3033 = vmatprep.mubr.bf16.mxu0 0
    %3034 = vmatmul.mubr.bf16.gmra.mrb[0].mxu0 %v1727
    %v3035 = vpop.f32.mrb[0].mxu0
    %v3036 = vadd.f32 %v599, %v3035
    %v3037 = vpop.f32.mrb[0].mxu0
    %v3038 = vpop.f32.mrb[0].mxu0
    %v3039 = vadd.f32 %v599, %v3038
    %v3040 = vpop.f32.mrb[0].mxu0
    %3041 = vmatprep.mubr.bf16.mxu0 0
    %3042 = vmatmul.mubr.bf16.gmra.mrb[0].mxu0 %v1728
    %v3043 = vpop.f32.mrb[0].mxu0
    %v3044 = vadd.f32 %v599, %v3043
    %v3045 = vpop.f32.mrb[0].mxu0
    %v3046 = vpop.f32.mrb[0].mxu0
    %v3047 = vadd.f32 %v599, %v3046
    %v3048 = vpop.f32.mrb[0].mxu0
    %3049 = vmatprep.mubr.bf16.mxu0 0
    %3050 = vmatmul.mubr.bf16.gmra.mrb[0].mxu0 %v1729
    %v3051 = vpop.f32.mrb[0].mxu0
    %v3052 = vadd.f32 %v599, %v3051
    %v3053 = vpop.f32.mrb[0].mxu0
    %v3054 = vpop.f32.mrb[0].mxu0
    %v3055 = vadd.f32 %v599, %v3054
    %v3056 = vpop.f32.mrb[0].mxu0
    %3057 = vmatprep.mubr.bf16.mxu0 0
    %3058 = vmatmul.mubr.bf16.gmra.mrb[0].mxu0 %v1730
    %v3059 = vpop.f32.mrb[0].mxu0
    %v3060 = vadd.f32 %v599, %v3059
    %v3061 = vpop.f32.mrb[0].mxu0
    %v3062 = vpop.f32.mrb[0].mxu0
    %v3063 = vadd.f32 %v599, %v3062
    %v3064 = vpop.f32.mrb[0].mxu0
    %3065 = vmatprep.mubr.bf16.mxu0 0
    %3066 = vmatmul.mubr.bf16.gmra.mrb[0].mxu0 %v1731
    %v3067 = vpop.f32.mrb[0].mxu0
    %v3068 = vadd.f32 %v599, %v3067
    %v3069 = vpop.f32.mrb[0].mxu0
    %v3070 = vpop.f32.mrb[0].mxu0
    %v3071 = vadd.f32 %v599, %v3070
    %v3072 = vpop.f32.mrb[0].mxu0
    %3073 = vmatprep.mubr.bf16.mxu0 0
    %3074 = vmatmul.mubr.bf16.gmra.mrb[0].mxu0 %v1732
    %v3075 = vpop.f32.mrb[0].mxu0
    %v3076 = vadd.f32 %v599, %v3075
    %v3077 = vpop.f32.mrb[0].mxu0
    %v3078 = vpop.f32.mrb[0].mxu0
    %v3079 = vadd.f32 %v599, %v3078
    %v3080 = vpop.f32.mrb[0].mxu0
    %3081 = vmatprep.mubr.bf16.mxu0 0
    %3082 = vmatmul.mubr.bf16.gmra.mrb[0].mxu0 %v1733
    %v3083 = vpop.f32.mrb[0].mxu0
    %v3084 = vadd.f32 %v599, %v3083
    %v3085 = vpop.f32.mrb[0].mxu0
    %v3086 = vpop.f32.mrb[0].mxu0
    %v3087 = vadd.f32 %v599, %v3086
    %v3088 = vpop.f32.mrb[0].mxu0
    %3089 = vmatprep.mubr.bf16.mxu0 0
    %3090 = vmatmul.mubr.bf16.gmra.mrb[0].mxu0 %v1734
    %v3091 = vpop.f32.mrb[0].mxu0
    %v3092 = vadd.f32 %v599, %v3091
    %v3093 = vpop.f32.mrb[0].mxu0
    %v3094 = vpop.f32.mrb[0].mxu0
    %v3095 = vadd.f32 %v599, %v3094
    %v3096 = vpop.f32.mrb[0].mxu0
    %3097 = vmatprep.mubr.bf16.mxu0 0
    %3098 = vmatmul.mubr.bf16.gmra.mrb[0].mxu0 %v1735
    %v3099 = vpop.f32.mrb[0].mxu0
    %v3100 = vadd.f32 %v599, %v3099
    %v3101 = vpop.f32.mrb[0].mxu0
    %v3102 = vpop.f32.mrb[0].mxu0
    %v3103 = vadd.f32 %v599, %v3102
    %v3104 = vpop.f32.mrb[0].mxu0
    %3105 = vmatprep.mubr.bf16.mxu0 0
    %3106 = vmatmul.mubr.bf16.gmra.mrb[0].mxu0 %v1736
    %v3107 = vpop.f32.mrb[0].mxu0
    %v3108 = vadd.f32 %v599, %v3107
    %v3109 = vpop.f32.mrb[0].mxu0
    %v3110 = vpop.f32.mrb[0].mxu0
    %v3111 = vadd.f32 %v599, %v3110
    %v3112 = vpop.f32.mrb[0].mxu0
    %3113 = vmatprep.mubr.bf16.mxu0 0
    %3114 = vmatmul.mubr.bf16.gmra.mrb[0].mxu0 %v1737
    %v3115 = vpop.f32.mrb[0].mxu0
    %v3116 = vadd.f32 %v599, %v3115
    %v3117 = vpop.f32.mrb[0].mxu0
    %v3118 = vpop.f32.mrb[0].mxu0
    %v3119 = vadd.f32 %v599, %v3118
    %v3120 = vpop.f32.mrb[0].mxu0
    %3121 = vmatprep.mubr.bf16.mxu0 0
    %3122 = vmatmul.mubr.bf16.gmra.mrb[0].mxu0 %v1738
    %v3123 = vpop.f32.mrb[0].mxu0
    %v3124 = vadd.f32 %v599, %v3123
    %v3125 = vpop.f32.mrb[0].mxu0
    %v3126 = vpop.f32.mrb[0].mxu0
    %v3127 = vadd.f32 %v599, %v3126
    %v3128 = vpop.f32.mrb[0].mxu0
    %3129 = vmatprep.mubr.bf16.mxu0 0
    %3130 = vmatmul.mubr.bf16.gmra.mrb[0].mxu0 %v1739
    %v3131 = vpop.f32.mrb[0].mxu0
    %v3132 = vadd.f32 %v599, %v3131
    %v3133 = vpop.f32.mrb[0].mxu0
    %v3134 = vpop.f32.mrb[0].mxu0
    %v3135 = vadd.f32 %v599, %v3134
    %v3136 = vpop.f32.mrb[0].mxu0
    %3137 = vmatprep.mubr.bf16.mxu0 0
    %3138 = vmatmul.mubr.bf16.gmra.mrb[0].mxu0 %v1740
    %v3139 = vpop.f32.mrb[0].mxu0
    %v3140 = vadd.f32 %v599, %v3139
    %v3141 = vpop.f32.mrb[0].mxu0
    %v3142 = vpop.f32.mrb[0].mxu0
    %v3143 = vadd.f32 %v599, %v3142
    %v3144 = vpop.f32.mrb[0].mxu0
    %3145 = vmatprep.mubr.bf16.mxu0 0
    %3146 = vmatmul.mubr.bf16.gmra.mrb[0].mxu0 %v1741
    %v3147 = vpop.f32.mrb[0].mxu0
    %v3148 = vadd.f32 %v599, %v3147
    %v3149 = vpop.f32.mrb[0].mxu0
    %v3150 = vpop.f32.mrb[0].mxu0
    %v3151 = vadd.f32 %v599, %v3150
    %v3152 = vpop.f32.mrb[0].mxu0
    %3153 = vmatprep.mubr.bf16.mxu0 0
    %3154 = vmatmul.mubr.bf16.gmra.mrb[0].mxu0 %v1742
    %v3155 = vpop.f32.mrb[0].mxu0
    %v3156 = vadd.f32 %v599, %v3155
    %v3157 = vpop.f32.mrb[0].mxu0
    %v3158 = vpop.f32.mrb[0].mxu0
    %v3159 = vadd.f32 %v599, %v3158
    %v3160 = vpop.f32.mrb[0].mxu0
    %3161 = vmatprep.mubr.bf16.mxu0 0
    %3162 = vmatmul.mubr.bf16.gmra.mrb[0].mxu0 %v1743
    %v3163 = vpop.f32.mrb[0].mxu0
    %v3164 = vadd.f32 %v599, %v3163
    %v3165 = vpop.f32.mrb[0].mxu0
    %v3166 = vpop.f32.mrb[0].mxu0
    %v3167 = vadd.f32 %v599, %v3166
    %v3168 = vpop.f32.mrb[0].mxu0
    %3169 = vmatprep.mubr.bf16.mxu0 0
    %3170 = vmatmul.mubr.bf16.gmra.mrb[0].mxu0 %v1744
    %v3171 = vpop.f32.mrb[0].mxu0
    %v3172 = vadd.f32 %v599, %v3171
    %v3173 = vpop.f32.mrb[0].mxu0
    %v3174 = vpop.f32.mrb[0].mxu0
    %v3175 = vadd.f32 %v599, %v3174
    %v3176 = vpop.f32.mrb[0].mxu0
    %3177 = vmatprep.mubr.bf16.mxu0 0
    %3178 = vmatmul.mubr.bf16.gmra.mrb[0].mxu0 %v1745
    %v3179 = vpop.f32.mrb[0].mxu0
    %v3180 = vadd.f32 %v599, %v3179
    %v3181 = vpop.f32.mrb[0].mxu0
    %v3182 = vpop.f32.mrb[0].mxu0
    %v3183 = vadd.f32 %v599, %v3182
    %v3184 = vpop.f32.mrb[0].mxu0
    %3185 = vmatprep.mubr.bf16.mxu0 0
    %3186 = vmatmul.mubr.bf16.gmra.mrb[0].mxu0 %v1746
    %v3187 = vpop.f32.mrb[0].mxu0
    %v3188 = vadd.f32 %v599, %v3187
    %v3189 = vpop.f32.mrb[0].mxu0
    %v3190 = vpop.f32.mrb[0].mxu0
    %v3191 = vadd.f32 %v599, %v3190
    %v3192 = vpop.f32.mrb[0].mxu0
    %3193 = vmatprep.mubr.bf16.mxu0 0
    %3194 = vmatmul.mubr.bf16.gmra.mrb[0].mxu0 %v1747
    %v3195 = vpop.f32.mrb[0].mxu0
    %v3196 = vadd.f32 %v599, %v3195
    %v3197 = vpop.f32.mrb[0].mxu0
    %v3198 = vpop.f32.mrb[0].mxu0
    %v3199 = vadd.f32 %v599, %v3198
    %v3200 = vpop.f32.mrb[0].mxu0
    %3201 = vmatprep.mubr.bf16.mxu0 0
    %3202 = vmatmul.mubr.bf16.gmra.mrb[0].mxu0 %v1748
    %v3203 = vpop.f32.mrb[0].mxu0
    %v3204 = vadd.f32 %v599, %v3203
    %v3205 = vpop.f32.mrb[0].mxu0
    %v3206 = vpop.f32.mrb[0].mxu0
    %v3207 = vadd.f32 %v599, %v3206
    %v3208 = vpop.f32.mrb[0].mxu0
    %3209 = vmatprep.mubr.bf16.mxu0 0
    %3210 = vmatmul.mubr.bf16.gmra.mrb[0].mxu0 %v1749
    %v3211 = vpop.f32.mrb[0].mxu0
    %v3212 = vadd.f32 %v599, %v3211
    %v3213 = vpop.f32.mrb[0].mxu0
    %v3214 = vpop.f32.mrb[0].mxu0
    %v3215 = vadd.f32 %v599, %v3214
    %v3216 = vpop.f32.mrb[0].mxu0
    %3217 = vmatprep.mubr.bf16.mxu0 0
    %3218 = vmatmul.mubr.bf16.gmra.mrb[0].mxu0 %v1750
    %v3219 = vpop.f32.mrb[0].mxu0
    %v3220 = vadd.f32 %v599, %v3219
    %v3221 = vpop.f32.mrb[0].mxu0
    %v3222 = vpop.f32.mrb[0].mxu0
    %v3223 = vadd.f32 %v599, %v3222
    %v3224 = vpop.f32.mrb[0].mxu0
    %3225 = vmatprep.mubr.bf16.mxu0 0
    %3226 = vmatmul.mubr.bf16.gmra.mrb[0].mxu0 %v1751
    %v3227 = vpop.f32.mrb[0].mxu0
    %v3228 = vadd.f32 %v599, %v3227
    %v3229 = vpop.f32.mrb[0].mxu0
    %v3230 = vpop.f32.mrb[0].mxu0
    %v3231 = vadd.f32 %v599, %v3230
    %v3232 = vpop.f32.mrb[0].mxu0
    %3233 = vmatprep.mubr.bf16.mxu0 0
    %3234 = vmatmul.mubr.bf16.gmra.mrb[0].mxu0 %v1752
    %v3235 = vpop.f32.mrb[0].mxu0
    %v3236 = vadd.f32 %v599, %v3235
    %v3237 = vpop.f32.mrb[0].mxu0
    %v3238 = vpop.f32.mrb[0].mxu0
    %v3239 = vadd.f32 %v599, %v3238
    %v3240 = vpop.f32.mrb[0].mxu0
    %3241 = vmatprep.mubr.bf16.mxu0 0
    %3242 = vmatmul.mubr.bf16.gmra.mrb[0].mxu0 %v1753
    %v3243 = vpop.f32.mrb[0].mxu0
    %v3244 = vadd.f32 %v599, %v3243
    %v3245 = vpop.f32.mrb[0].mxu0
    %v3246 = vpop.f32.mrb[0].mxu0
    %v3247 = vadd.f32 %v599, %v3246
    %v3248 = vpop.f32.mrb[0].mxu0
    %3249 = vmatprep.mubr.bf16.mxu0 0
    %3250 = vmatmul.mubr.bf16.gmra.mrb[0].mxu0 %v1754
    %v3251 = vpop.f32.mrb[0].mxu0
    %v3252 = vadd.f32 %v599, %v3251
    %v3253 = vpop.f32.mrb[0].mxu0
    %v3254 = vpop.f32.mrb[0].mxu0
    %v3255 = vadd.f32 %v599, %v3254
    %v3256 = vpop.f32.mrb[0].mxu0
    %3257 = vmatprep.mubr.bf16.mxu0 0
    %3258 = vmatmul.mubr.bf16.gmra.mrb[0].mxu0 %v1755
    %v3259 = vpop.f32.mrb[0].mxu0
    %v3260 = vadd.f32 %v599, %v3259
    %v3261 = vpop.f32.mrb[0].mxu0
    %v3262 = vpop.f32.mrb[0].mxu0
    %v3263 = vadd.f32 %v599, %v3262
    %v3264 = vpop.f32.mrb[0].mxu0
    %3265 = vmatprep.mubr.bf16.mxu0 0
    %3266 = vmatmul.mubr.bf16.gmra.mrb[0].mxu0 %v1756
    %v3267 = vpop.f32.mrb[0].mxu0
    %v3268 = vadd.f32 %v599, %v3267
    %v3269 = vpop.f32.mrb[0].mxu0
    %v3270 = vpop.f32.mrb[0].mxu0
    %v3271 = vadd.f32 %v599, %v3270
    %v3272 = vpop.f32.mrb[0].mxu0
    %3273 = vmatprep.mubr.bf16.mxu0 0
    %3274 = vmatmul.mubr.bf16.gmra.mrb[0].mxu0 %v1757
    %v3275 = vpop.f32.mrb[0].mxu0
    %v3276 = vadd.f32 %v599, %v3275
    %v3277 = vpop.f32.mrb[0].mxu0
    %v3278 = vpop.f32.mrb[0].mxu0
    %v3279 = vadd.f32 %v599, %v3278
    %v3280 = vpop.f32.mrb[0].mxu0
    %3281 = vmatprep.mubr.bf16.mxu0 0
    %3282 = vmatmul.mubr.bf16.gmra.mrb[0].mxu0 %v1758
    %v3283 = vpop.f32.mrb[0].mxu0
    %v3284 = vadd.f32 %v599, %v3283
    %v3285 = vpop.f32.mrb[0].mxu0
    %v3286 = vpop.f32.mrb[0].mxu0
    %v3287 = vadd.f32 %v599, %v3286
    %v3288 = vpop.f32.mrb[0].mxu0
    %3289 = vmatprep.mubr.bf16.mxu0 0
    %3290 = vmatmul.mubr.bf16.gmra.mrb[0].mxu0 %v1759
    %v3291 = vpop.f32.mrb[0].mxu0
    %v3292 = vadd.f32 %v599, %v3291
    %v3293 = vpop.f32.mrb[0].mxu0
    %v3294 = vpop.f32.mrb[0].mxu0
    %v3295 = vadd.f32 %v599, %v3294
    %v3296 = vpop.f32.mrb[0].mxu0
    %3297 = vmatprep.mubr.bf16.mxu0 0
    %3298 = vmatmul.mubr.bf16.gmra.mrb[0].mxu0 %v1760
    %v3299 = vpop.f32.mrb[0].mxu0
    %v3300 = vadd.f32 %v599, %v3299
    %v3301 = vpop.f32.mrb[0].mxu0
    %v3302 = vpop.f32.mrb[0].mxu0
    %v3303 = vadd.f32 %v599, %v3302
    %v3304 = vpop.f32.mrb[0].mxu0
    %3305 = vmatprep.mubr.bf16.mxu0 0
    %3306 = vmatmul.mubr.bf16.gmra.mrb[0].mxu0 %v1761
    %v3307 = vpop.f32.mrb[0].mxu0
    %v3308 = vadd.f32 %v599, %v3307
    %v3309 = vpop.f32.mrb[0].mxu0
    %v3310 = vpop.f32.mrb[0].mxu0
    %v3311 = vadd.f32 %v599, %v3310
    %v3312 = vpop.f32.mrb[0].mxu0
    %3313 = vmatprep.mubr.bf16.mxu0 0
    %3314 = vmatmul.mubr.bf16.gmra.mrb[0].mxu0 %v1762
    %v3315 = vpop.f32.mrb[0].mxu0
    %v3316 = vadd.f32 %v599, %v3315
    %v3317 = vpop.f32.mrb[0].mxu0
    %v3318 = vpop.f32.mrb[0].mxu0
    %v3319 = vadd.f32 %v599, %v3318
    %v3320 = vpop.f32.mrb[0].mxu0
    %3321 = vmatprep.mubr.bf16.mxu0 0
    %3322 = vmatmul.mubr.bf16.gmra.mrb[0].mxu0 %v1763
    %v3323 = vpop.f32.mrb[0].mxu0
    %v3324 = vadd.f32 %v599, %v3323
    %v3325 = vpop.f32.mrb[0].mxu0
    %v3326 = vpop.f32.mrb[0].mxu0
    %v3327 = vadd.f32 %v599, %v3326
    %v3328 = vpop.f32.mrb[0].mxu0
    %3329 = vmatprep.mubr.bf16.mxu0 0
    %3330 = vmatmul.mubr.bf16.gmra.mrb[0].mxu0 %v1764
    %v3331 = vpop.f32.mrb[0].mxu0
    %v3332 = vadd.f32 %v599, %v3331
    %v3333 = vpop.f32.mrb[0].mxu0
    %v3334 = vpop.f32.mrb[0].mxu0
    %v3335 = vadd.f32 %v599, %v3334
    %v3336 = vpop.f32.mrb[0].mxu0
    %3337 = vmatprep.mubr.bf16.mxu0 0
    %3338 = vmatmul.mubr.bf16.gmra.mrb[0].mxu0 %v1765
    %v3339 = vpop.f32.mrb[0].mxu0
    %v3340 = vadd.f32 %v599, %v3339
    %v3341 = vpop.f32.mrb[0].mxu0
    %v3342 = vpop.f32.mrb[0].mxu0
    %v3343 = vadd.f32 %v599, %v3342
    %v3344 = vpop.f32.mrb[0].mxu0
    %3345 = vmatprep.mubr.bf16.mxu0 0
    %3346 = vmatmul.mubr.bf16.gmra.mrb[0].mxu0 %v1766
    %v3347 = vpop.f32.mrb[0].mxu0
    %v3348 = vadd.f32 %v599, %v3347
    %v3349 = vpop.f32.mrb[0].mxu0
    %v3350 = vpop.f32.mrb[0].mxu0
    %v3351 = vadd.f32 %v599, %v3350
    %v3352 = vpop.f32.mrb[0].mxu0
    %3353 = vmatprep.mubr.bf16.mxu0 0
    %3354 = vmatmul.mubr.bf16.gmra.mrb[0].mxu0 %v1767
    %v3355 = vpop.f32.mrb[0].mxu0
    %v3356 = vadd.f32 %v599, %v3355
    %v3357 = vpop.f32.mrb[0].mxu0
    %v3358 = vpop.f32.mrb[0].mxu0
    %v3359 = vadd.f32 %v599, %v3358
    %v3360 = vpop.f32.mrb[0].mxu0
    %3361 = vmatprep.mubr.bf16.mxu0 0
    %3362 = vmatmul.mubr.bf16.gmra.mrb[0].mxu0 %v1768
    %v3363 = vpop.f32.mrb[0].mxu0
    %v3364 = vadd.f32 %v599, %v3363
    %v3365 = vpop.f32.mrb[0].mxu0
    %v3366 = vpop.f32.mrb[0].mxu0
    %v3367 = vadd.f32 %v599, %v3366
    %v3368 = vpop.f32.mrb[0].mxu0
    %3369 = vmatprep.mubr.bf16.mxu0 0
    %3370 = vmatmul.mubr.bf16.gmra.mrb[0].mxu0 %v1769
    %v3371 = vpop.f32.mrb[0].mxu0
    %v3372 = vadd.f32 %v599, %v3371
    %v3373 = vpop.f32.mrb[0].mxu0
    %v3374 = vpop.f32.mrb[0].mxu0
    %v3375 = vadd.f32 %v599, %v3374
    %v3376 = vpop.f32.mrb[0].mxu0
    %3377 = vmatprep.mubr.bf16.mxu0 0
    %3378 = vmatmul.mubr.bf16.gmra.mrb[0].mxu0 %v1770
    %v3379 = vpop.f32.mrb[0].mxu0
    %v3380 = vadd.f32 %v599, %v3379
    %v3381 = vpop.f32.mrb[0].mxu0
    %v3382 = vpop.f32.mrb[0].mxu0
    %v3383 = vadd.f32 %v599, %v3382
    %v3384 = vpop.f32.mrb[0].mxu0
    %3385 = vmatprep.mubr.bf16.mxu0 0
    %3386 = vmatmul.mubr.bf16.gmra.mrb[0].mxu0 %v1771
    %v3387 = vpop.f32.mrb[0].mxu0
    %v3388 = vadd.f32 %v599, %v3387
    %v3389 = vpop.f32.mrb[0].mxu0
    %v3390 = vpop.f32.mrb[0].mxu0
    %v3391 = vadd.f32 %v599, %v3390
    %v3392 = vpop.f32.mrb[0].mxu0
    %3393 = vmatprep.mubr.bf16.mxu0 0
    %3394 = vmatmul.mubr.bf16.gmra.mrb[0].mxu0 %v1772
    %v3395 = vpop.f32.mrb[0].mxu0
    %v3396 = vadd.f32 %v599, %v3395
    %v3397 = vpop.f32.mrb[0].mxu0
    %v3398 = vpop.f32.mrb[0].mxu0
    %v3399 = vadd.f32 %v599, %v3398
    %v3400 = vpop.f32.mrb[0].mxu0
    %3401 = vmatprep.mubr.bf16.mxu0 0
    %3402 = vmatmul.mubr.bf16.gmra.mrb[0].mxu0 %v1773
    %v3403 = vpop.f32.mrb[0].mxu0
    %v3404 = vadd.f32 %v599, %v3403
    %v3405 = vpop.f32.mrb[0].mxu0
    %v3406 = vpop.f32.mrb[0].mxu0
    %v3407 = vadd.f32 %v599, %v3406
    %v3408 = vpop.f32.mrb[0].mxu0
    %3409 = vmatprep.mubr.bf16.mxu0 0
    %3410 = vmatmul.mubr.bf16.gmra.mrb[0].mxu0 %v1774
    %v3411 = vpop.f32.mrb[0].mxu0
    %v3412 = vadd.f32 %v599, %v3411
    %v3413 = vpop.f32.mrb[0].mxu0
    %v3414 = vpop.f32.mrb[0].mxu0
    %v3415 = vadd.f32 %v599, %v3414
    %v3416 = vpop.f32.mrb[0].mxu0
    %3417 = vmatprep.mubr.bf16.mxu0 0
    %3418 = vmatmul.mubr.bf16.gmra.mrb[0].mxu0 %v1775
    %v3419 = vpop.f32.mrb[0].mxu0
    %v3420 = vadd.f32 %v599, %v3419
    %v3421 = vpop.f32.mrb[0].mxu0
    %v3422 = vpop.f32.mrb[0].mxu0
    %v3423 = vadd.f32 %v599, %v3422
    %v3424 = vpop.f32.mrb[0].mxu0
    %3425 = vmatprep.mubr.bf16.mxu0 0
    %3426 = vmatmul.mubr.bf16.gmra.mrb[0].mxu0 %v1776
    %v3427 = vpop.f32.mrb[0].mxu0
    %v3428 = vadd.f32 %v599, %v3427
    %v3429 = vpop.f32.mrb[0].mxu0
    %v3430 = vpop.f32.mrb[0].mxu0
    %v3431 = vadd.f32 %v599, %v3430
    %v3432 = vpop.f32.mrb[0].mxu0
    %3433 = vmatprep.mubr.bf16.mxu0 0
    %3434 = vmatmul.mubr.bf16.gmra.mrb[0].mxu0 %v1777
    %v3435 = vpop.f32.mrb[0].mxu0
    %v3436 = vadd.f32 %v599, %v3435
    %v3437 = vpop.f32.mrb[0].mxu0
    %v3438 = vpop.f32.mrb[0].mxu0
    %v3439 = vadd.f32 %v599, %v3438
    %v3440 = vpop.f32.mrb[0].mxu0
    %3441 = vmatprep.mubr.bf16.mxu0 0
    %3442 = vmatmul.mubr.bf16.gmra.mrb[0].mxu0 %v1778
    %v3443 = vpop.f32.mrb[0].mxu0
    %v3444 = vadd.f32 %v599, %v3443
    %v3445 = vpop.f32.mrb[0].mxu0
    %v3446 = vpop.f32.mrb[0].mxu0
    %v3447 = vadd.f32 %v599, %v3446
    %v3448 = vpop.f32.mrb[0].mxu0
    %3449 = vmatprep.mubr.bf16.mxu0 0
    %3450 = vmatmul.mubr.bf16.gmra.mrb[0].mxu0 %v1779
    %v3451 = vpop.f32.mrb[0].mxu0
    %v3452 = vadd.f32 %v599, %v3451
    %v3453 = vpop.f32.mrb[0].mxu0
    %v3454 = vpop.f32.mrb[0].mxu0
    %v3455 = vadd.f32 %v599, %v3454
    %v3456 = vpop.f32.mrb[0].mxu0
    %3457 = vmatprep.mubr.bf16.mxu0 0
    %3458 = vmatmul.mubr.bf16.gmra.mrb[0].mxu0 %v1780
    %v3459 = vpop.f32.mrb[0].mxu0
    %v3460 = vadd.f32 %v599, %v3459
    %v3461 = vpop.f32.mrb[0].mxu0
    %v3462 = vpop.f32.mrb[0].mxu0
    %v3463 = vadd.f32 %v599, %v3462
    %v3464 = vpop.f32.mrb[0].mxu0
    %3465 = vmatprep.mubr.bf16.mxu0 0
    %3466 = vmatmul.mubr.bf16.gmra.mrb[0].mxu0 %v1781
    %v3467 = vpop.f32.mrb[0].mxu0
    %v3468 = vadd.f32 %v599, %v3467
    %v3469 = vpop.f32.mrb[0].mxu0
    %v3470 = vpop.f32.mrb[0].mxu0
    %v3471 = vadd.f32 %v599, %v3470
    %v3472 = vpop.f32.mrb[0].mxu0
    %3473 = vmatprep.mubr.bf16.mxu0 0
    %3474 = vmatmul.mubr.bf16.gmra.mrb[0].mxu0 %v1782
    %v3475 = vpop.f32.mrb[0].mxu0
    %v3476 = vadd.f32 %v599, %v3475
    %v3477 = vpop.f32.mrb[0].mxu0
    %v3478 = vpop.f32.mrb[0].mxu0
    %v3479 = vadd.f32 %v599, %v3478
    %v3480 = vpop.f32.mrb[0].mxu0
    %3481 = vmatprep.mubr.bf16.mxu0 0
    %3482 = vmatmul.mubr.bf16.gmra.mrb[0].mxu0 %v1783
    %v3483 = vpop.f32.mrb[0].mxu0
    %v3484 = vadd.f32 %v599, %v3483
    %v3485 = vpop.f32.mrb[0].mxu0
    %v3486 = vpop.f32.mrb[0].mxu0
    %v3487 = vadd.f32 %v599, %v3486
    %v3488 = vpop.f32.mrb[0].mxu0
    %3489 = vmatprep.mubr.bf16.mxu0 0
    %3490 = vmatmul.mubr.bf16.gmra.mrb[0].mxu0 %v1784
    %v3491 = vpop.f32.mrb[0].mxu0
    %v3492 = vadd.f32 %v599, %v3491
    %v3493 = vpop.f32.mrb[0].mxu0
    %v3494 = vpop.f32.mrb[0].mxu0
    %v3495 = vadd.f32 %v599, %v3494
    %v3496 = vpop.f32.mrb[0].mxu0
    %3497 = vmatprep.mubr.bf16.mxu0 0
    %3498 = vmatmul.mubr.bf16.gmra.mrb[0].mxu0 %v1785
    %v3499 = vpop.f32.mrb[0].mxu0
    %v3500 = vadd.f32 %v599, %v3499
    %v3501 = vpop.f32.mrb[0].mxu0
    %v3502 = vpop.f32.mrb[0].mxu0
    %v3503 = vadd.f32 %v599, %v3502
    %v3504 = vpop.f32.mrb[0].mxu0
    %3505 = vmatprep.mubr.bf16.mxu0 0
    %3506 = vmatmul.mubr.bf16.gmra.mrb[0].mxu0 %v1786
    %v3507 = vpop.f32.mrb[0].mxu0
    %v3508 = vadd.f32 %v599, %v3507
    %v3509 = vpop.f32.mrb[0].mxu0
    %v3510 = vpop.f32.mrb[0].mxu0
    %v3511 = vadd.f32 %v599, %v3510
    %v3512 = vpop.f32.mrb[0].mxu0
    %3513 = vmatprep.mubr.bf16.mxu0 0
    %3514 = vmatmul.mubr.bf16.gmra.mrb[0].mxu0 %v1787
    %v3515 = vpop.f32.mrb[0].mxu0
    %v3516 = vadd.f32 %v599, %v3515
    %v3517 = vpop.f32.mrb[0].mxu0
    %v3518 = vpop.f32.mrb[0].mxu0
    %v3519 = vadd.f32 %v599, %v3518
    %v3520 = vpop.f32.mrb[0].mxu0
    %3521 = vmatprep.mubr.bf16.mxu0 0
    %3522 = vmatmul.mubr.bf16.gmra.mrb[0].mxu0 %v1788
    %v3523 = vpop.f32.mrb[0].mxu0
    %v3524 = vadd.f32 %v599, %v3523
    %v3525 = vpop.f32.mrb[0].mxu0
    %v3526 = vpop.f32.mrb[0].mxu0
    %v3527 = vadd.f32 %v599, %v3526
    %v3528 = vpop.f32.mrb[0].mxu0
    %3529 = vmatprep.mubr.bf16.mxu0 0
    %3530 = vmatmul.mubr.bf16.gmra.mrb[0].mxu0 %v1789
    %v3531 = vpop.f32.mrb[0].mxu0
    %v3532 = vadd.f32 %v599, %v3531
    %v3533 = vpop.f32.mrb[0].mxu0
    %v3534 = vpop.f32.mrb[0].mxu0
    %v3535 = vadd.f32 %v599, %v3534
    %v3536 = vpop.f32.mrb[0].mxu0
    %3537 = vmatprep.mubr.bf16.mxu0 0
    %3538 = vmatmul.mubr.bf16.gmra.mrb[0].mxu0 %v1790
    %v3539 = vpop.f32.mrb[0].mxu0
    %v3540 = vadd.f32 %v599, %v3539
    %v3541 = vpop.f32.mrb[0].mxu0
    %v3542 = vpop.f32.mrb[0].mxu0
    %v3543 = vadd.f32 %v599, %v3542
    %v3544 = vpop.f32.mrb[0].mxu0
    %3545 = vmatprep.mubr.bf16.mxu0 0
    %3546 = vmatmul.mubr.bf16.gmra.mrb[0].mxu0 %v1791
    %v3547 = vpop.f32.mrb[0].mxu0
    %v3548 = vadd.f32 %v599, %v3547
    %v3549 = vpop.f32.mrb[0].mxu0
    %v3550 = vpop.f32.mrb[0].mxu0
    %v3551 = vadd.f32 %v599, %v3550
    %v3552 = vpop.f32.mrb[0].mxu0
    %3553 = vmatprep.mubr.bf16.mxu0 0
    %3554 = vmatmul.mubr.bf16.gmra.mrb[0].mxu0 %v1792
    %v3555 = vpop.f32.mrb[0].mxu0
    %v3556 = vadd.f32 %v599, %v3555
    %v3557 = vpop.f32.mrb[0].mxu0
    %v3558 = vpop.f32.mrb[0].mxu0
    %v3559 = vadd.f32 %v599, %v3558
    %v3560 = vpop.f32.mrb[0].mxu0
    %3561 = vmatprep.mubr.bf16.mxu0 0
    %3562 = vmatmul.mubr.bf16.gmra.mrb[0].mxu0 %v1793
    %v3563 = vpop.f32.mrb[0].mxu0
    %v3564 = vadd.f32 %v599, %v3563
    %v3565 = vpop.f32.mrb[0].mxu0
    %v3566 = vpop.f32.mrb[0].mxu0
    %v3567 = vadd.f32 %v599, %v3566
    %v3568 = vpop.f32.mrb[0].mxu0
    %3569 = vmatprep.mubr.bf16.mxu0 0
    %3570 = vmatmul.mubr.bf16.gmra.mrb[0].mxu0 %v1794
    %v3571 = vpop.f32.mrb[0].mxu0
    %v3572 = vadd.f32 %v599, %v3571
    %v3573 = vpop.f32.mrb[0].mxu0
    %v3574 = vpop.f32.mrb[0].mxu0
    %v3575 = vadd.f32 %v599, %v3574
    %v3576 = vpop.f32.mrb[0].mxu0
    %3577 = vmatprep.mubr.bf16.mxu0 0
    %3578 = vmatmul.mubr.bf16.gmra.mrb[0].mxu0 %v1795
    %v3579 = vpop.f32.mrb[0].mxu0
    %v3580 = vadd.f32 %v599, %v3579
    %v3581 = vpop.f32.mrb[0].mxu0
    %v3582 = vpop.f32.mrb[0].mxu0
    %v3583 = vadd.f32 %v599, %v3582
    %v3584 = vpop.f32.mrb[0].mxu0
    %3585 = vmatprep.mubr.bf16.mxu0 0
    %3586 = vmatmul.mubr.bf16.gmra.mrb[0].mxu0 %v1796
    %v3587 = vpop.f32.mrb[0].mxu0
    %v3588 = vadd.f32 %v599, %v3587
    %v3589 = vpop.f32.mrb[0].mxu0
    %v3590 = vpop.f32.mrb[0].mxu0
    %v3591 = vadd.f32 %v599, %v3590
    %v3592 = vpop.f32.mrb[0].mxu0
    %3593 = vmatprep.mubr.bf16.mxu0 0
    %3594 = vmatmul.mubr.bf16.gmra.mrb[0].mxu0 %v1797
    %v3595 = vpop.f32.mrb[0].mxu0
    %v3596 = vadd.f32 %v599, %v3595
    %v3597 = vpop.f32.mrb[0].mxu0
    %v3598 = vpop.f32.mrb[0].mxu0
    %v3599 = vadd.f32 %v599, %v3598
    %v3600 = vpop.f32.mrb[0].mxu0
    %3601 = vmatprep.mubr.bf16.mxu0 0
    %3602 = vmatmul.mubr.bf16.gmra.mrb[0].mxu0 %v1798
    %v3603 = vpop.f32.mrb[0].mxu0
    %v3604 = vadd.f32 %v599, %v3603
    %v3605 = vpop.f32.mrb[0].mxu0
    %v3606 = vpop.f32.mrb[0].mxu0
    %v3607 = vadd.f32 %v599, %v3606
    %v3608 = vpop.f32.mrb[0].mxu0
    %3609 = vmatprep.mubr.bf16.mxu0 0
    %3610 = vmatmul.mubr.bf16.gmra.mrb[0].mxu0 %v1799
    %v3611 = vpop.f32.mrb[0].mxu0
    %v3612 = vadd.f32 %v599, %v3611
    %v3613 = vpop.f32.mrb[0].mxu0
    %v3614 = vpop.f32.mrb[0].mxu0
    %v3615 = vadd.f32 %v599, %v3614
    %v3616 = vpop.f32.mrb[0].mxu0
    %3617 = vmatprep.mubr.bf16.mxu0 0
    %3618 = vmatmul.mubr.bf16.gmra.mrb[0].mxu0 %v1800
    %v3619 = vpop.f32.mrb[0].mxu0
    %v3620 = vadd.f32 %v599, %v3619
    %v3621 = vpop.f32.mrb[0].mxu0
    %v3622 = vpop.f32.mrb[0].mxu0
    %v3623 = vadd.f32 %v599, %v3622
    %v3624 = vpop.f32.mrb[0].mxu0
    %3625 = vmatprep.mubr.bf16.mxu0 0
    %3626 = vmatmul.mubr.bf16.gmra.mrb[0].mxu0 %v1801
    %v3627 = vpop.f32.mrb[0].mxu0
    %v3628 = vadd.f32 %v599, %v3627
    %v3629 = vpop.f32.mrb[0].mxu0
    %v3630 = vpop.f32.mrb[0].mxu0
    %v3631 = vadd.f32 %v599, %v3630
    %v3632 = vpop.f32.mrb[0].mxu0
    %3633 = vmatprep.mubr.bf16.mxu0 0
    %3634 = vmatmul.mubr.bf16.gmra.mrb[0].mxu0 %v1802
    %v3635 = vpop.f32.mrb[0].mxu0
    %v3636 = vadd.f32 %v599, %v3635
    %v3637 = vpop.f32.mrb[0].mxu0
    %v3638 = vpop.f32.mrb[0].mxu0
    %v3639 = vadd.f32 %v599, %v3638
    %v3640 = vpop.f32.mrb[0].mxu0
    %3641 = vmatprep.mubr.bf16.mxu0 0
    %3642 = vmatmul.mubr.bf16.gmra.mrb[0].mxu0 %v1803
    %v3643 = vpop.f32.mrb[0].mxu0
    %v3644 = vadd.f32 %v599, %v3643
    %v3645 = vpop.f32.mrb[0].mxu0
    %v3646 = vpop.f32.mrb[0].mxu0
    %v3647 = vadd.f32 %v599, %v3646
    %v3648 = vpop.f32.mrb[0].mxu0
    %3649 = vmatprep.mubr.bf16.mxu0 0
    %3650 = vmatmul.mubr.bf16.gmra.mrb[0].mxu0 %v1804
    %v3651 = vpop.f32.mrb[0].mxu0
    %v3652 = vadd.f32 %v599, %v3651
    %v3653 = vpop.f32.mrb[0].mxu0
    %v3654 = vpop.f32.mrb[0].mxu0
    %v3655 = vadd.f32 %v599, %v3654
    %v3656 = vpop.f32.mrb[0].mxu0
    %3657 = vmatprep.mubr.bf16.mxu0 0
    %3658 = vmatmul.mubr.bf16.gmra.mrb[0].mxu0 %v1805
    %v3659 = vpop.f32.mrb[0].mxu0
    %v3660 = vadd.f32 %v599, %v3659
    %v3661 = vpop.f32.mrb[0].mxu0
    %v3662 = vpop.f32.mrb[0].mxu0
    %v3663 = vadd.f32 %v599, %v3662
    %v3664 = vpop.f32.mrb[0].mxu0
    %3665 = vmatprep.mubr.bf16.mxu0 0
    %3666 = vmatmul.mubr.bf16.gmra.mrb[0].mxu0 %v1806
    %v3667 = vpop.f32.mrb[0].mxu0
    %v3668 = vadd.f32 %v599, %v3667
    %v3669 = vpop.f32.mrb[0].mxu0
    %v3670 = vpop.f32.mrb[0].mxu0
    %v3671 = vadd.f32 %v599, %v3670
    %v3672 = vpop.f32.mrb[0].mxu0
    %3673 = vmatprep.mubr.bf16.mxu0 0
    %3674 = vmatmul.mubr.bf16.gmra.mrb[0].mxu0 %v1807
    %v3675 = vpop.f32.mrb[0].mxu0
    %v3676 = vadd.f32 %v599, %v3675
    %v3677 = vpop.f32.mrb[0].mxu0
    %v3678 = vpop.f32.mrb[0].mxu0
    %v3679 = vadd.f32 %v599, %v3678
    %v3680 = vpop.f32.mrb[0].mxu0
    %3681 = vmatprep.mubr.bf16.mxu0 0
    %3682 = vmatmul.mubr.bf16.gmra.mrb[0].mxu0 %v1808
    %v3683 = vpop.f32.mrb[0].mxu0
    %v3684 = vadd.f32 %v599, %v3683
    %v3685 = vpop.f32.mrb[0].mxu0
    %v3686 = vpop.f32.mrb[0].mxu0
    %v3687 = vadd.f32 %v599, %v3686
    %v3688 = vpop.f32.mrb[0].mxu0
    %3689 = vmatprep.mubr.bf16.mxu0 0
    %3690 = vmatmul.mubr.bf16.gmra.mrb[0].mxu0 %v1809
    %v3691 = vpop.f32.mrb[0].mxu0
    %v3692 = vadd.f32 %v599, %v3691
    %v3693 = vpop.f32.mrb[0].mxu0
    %v3694 = vpop.f32.mrb[0].mxu0
    %v3695 = vadd.f32 %v599, %v3694
    %v3696 = vpop.f32.mrb[0].mxu0
    %3697 = vmatprep.mubr.bf16.mxu0 0
    %3698 = vmatmul.mubr.bf16.gmra.mrb[0].mxu0 %v1810
    %v3699 = vpop.f32.mrb[0].mxu0
    %v3700 = vadd.f32 %v599, %v3699
    %v3701 = vpop.f32.mrb[0].mxu0
    %v3702 = vpop.f32.mrb[0].mxu0
    %v3703 = vadd.f32 %v599, %v3702
    %v3704 = vpop.f32.mrb[0].mxu0
    %3705 = vmatprep.mubr.bf16.mxu0 0
    %3706 = vmatmul.mubr.bf16.gmra.mrb[0].mxu0 %v1811
    %v3707 = vpop.f32.mrb[0].mxu0
    %v3708 = vadd.f32 %v599, %v3707
    %v3709 = vpop.f32.mrb[0].mxu0
    %v3710 = vpop.f32.mrb[0].mxu0
    %v3711 = vadd.f32 %v599, %v3710
    %v3712 = vpop.f32.mrb[0].mxu0
    %3713 = vmatprep.mubr.bf16.mxu0 0
    %3714 = vmatmul.mubr.bf16.gmra.mrb[0].mxu0 %v1812
    %v3715 = vpop.f32.mrb[0].mxu0
    %v3716 = vadd.f32 %v599, %v3715
    %v3717 = vpop.f32.mrb[0].mxu0
    %v3718 = vpop.f32.mrb[0].mxu0
    %v3719 = vadd.f32 %v599, %v3718
    %v3720 = vpop.f32.mrb[0].mxu0
    %3721 = vmatprep.mubr.bf16.mxu0 0
    %3722 = vmatmul.mubr.bf16.gmra.mrb[0].mxu0 %v1813
    %v3723 = vpop.f32.mrb[0].mxu0
    %v3724 = vadd.f32 %v599, %v3723
    %v3725 = vpop.f32.mrb[0].mxu0
    %v3726 = vpop.f32.mrb[0].mxu0
    %v3727 = vadd.f32 %v599, %v3726
    %v3728 = vpop.f32.mrb[0].mxu0
    %3729 = vmatprep.mubr.bf16.mxu0 0
    %3730 = vmatmul.mubr.bf16.gmra.mrb[0].mxu0 %v1814
    %v3731 = vpop.f32.mrb[0].mxu0
    %v3732 = vadd.f32 %v599, %v3731
    %v3733 = vpop.f32.mrb[0].mxu0
    %v3734 = vpop.f32.mrb[0].mxu0
    %v3735 = vadd.f32 %v599, %v3734
    %v3736 = vpop.f32.mrb[0].mxu0
    %3737 = vmatprep.mubr.bf16.mxu0 0
    %3738 = vmatmul.mubr.bf16.gmra.mrb[0].mxu0 %v1815
    %v3739 = vpop.f32.mrb[0].mxu0
    %v3740 = vadd.f32 %v599, %v3739
    %v3741 = vpop.f32.mrb[0].mxu0
    %v3742 = vpop.f32.mrb[0].mxu0
    %v3743 = vadd.f32 %v599, %v3742
    %v3744 = vpop.f32.mrb[0].mxu0
    %3745 = vmatprep.mubr.bf16.mxu0 0
    %3746 = vmatmul.mubr.bf16.gmra.mrb[0].mxu0 %v1816
    %v3747 = vpop.f32.mrb[0].mxu0
    %v3748 = vadd.f32 %v599, %v3747
    %v3749 = vpop.f32.mrb[0].mxu0
    %v3750 = vpop.f32.mrb[0].mxu0
    %v3751 = vadd.f32 %v599, %v3750
    %v3752 = vpop.f32.mrb[0].mxu0
    %3753 = vmatprep.mubr.bf16.mxu0 0
    %3754 = vmatmul.mubr.bf16.gmra.mrb[0].mxu0 %v1817
    %v3755 = vpop.f32.mrb[0].mxu0
    %v3756 = vadd.f32 %v599, %v3755
    %v3757 = vpop.f32.mrb[0].mxu0
    %v3758 = vpop.f32.mrb[0].mxu0
    %v3759 = vadd.f32 %v599, %v3758
    %v3760 = vpop.f32.mrb[0].mxu0
    %3761 = vmatprep.mubr.bf16.mxu0 0
    %3762 = vmatmul.mubr.bf16.gmra.mrb[0].mxu0 %v1818
    %v3763 = vpop.f32.mrb[0].mxu0
    %v3764 = vadd.f32 %v599, %v3763
    %v3765 = vpop.f32.mrb[0].mxu0
    %v3766 = vpop.f32.mrb[0].mxu0
    %v3767 = vadd.f32 %v599, %v3766
    %v3768 = vpop.f32.mrb[0].mxu0
    %3769 = vmatprep.mubr.bf16.mxu0 0
    %3770 = vmatmul.mubr.bf16.gmra.mrb[0].mxu0 %v1819
    %v3771 = vpop.f32.mrb[0].mxu0
    %v3772 = vadd.f32 %v599, %v3771
    %v3773 = vpop.f32.mrb[0].mxu0
    %v3774 = vpop.f32.mrb[0].mxu0
    %v3775 = vadd.f32 %v599, %v3774
    %v3776 = vpop.f32.mrb[0].mxu0
    %3777 = vmatprep.mubr.bf16.mxu0 0
    %3778 = vmatmul.mubr.bf16.gmra.mrb[0].mxu0 %v1820
    %v3779 = vpop.f32.mrb[0].mxu0
    %v3780 = vadd.f32 %v599, %v3779
    %v3781 = vpop.f32.mrb[0].mxu0
    %v3782 = vpop.f32.mrb[0].mxu0
    %v3783 = vadd.f32 %v599, %v3782
    %v3784 = vpop.f32.mrb[0].mxu0
    %3785 = vmatprep.mubr.bf16.mxu0 0
    %3786 = vmatmul.mubr.bf16.gmra.mrb[0].mxu0 %v1821
    %v3787 = vpop.f32.mrb[0].mxu0
    %v3788 = vadd.f32 %v599, %v3787
    %v3789 = vpop.f32.mrb[0].mxu0
    %v3790 = vpop.f32.mrb[0].mxu0
    %v3791 = vadd.f32 %v599, %v3790
    %v3792 = vpop.f32.mrb[0].mxu0
    %3793 = vmatprep.mubr.bf16.mxu0 0
    %3794 = vmatmul.mubr.bf16.gmra.mrb[0].mxu0 %v1822
    %v3795 = vpop.f32.mrb[0].mxu0
    %v3796 = vadd.f32 %v599, %v3795
    %v3797 = vpop.f32.mrb[0].mxu0
    %v3798 = vpop.f32.mrb[0].mxu0
    %v3799 = vadd.f32 %v599, %v3798
    %v3800 = vpop.f32.mrb[0].mxu0
    %3801 = vmatprep.mubr.bf16.mxu0 0
    %3802 = vmatmul.mubr.bf16.gmra.mrb[0].mxu0 %v1823
    %v3803 = vpop.f32.mrb[0].mxu0
    %v3804 = vadd.f32 %v599, %v3803
    %v3805 = vpop.f32.mrb[0].mxu0
    %v3806 = vpop.f32.mrb[0].mxu0
    %v3807 = vadd.f32 %v599, %v3806
    %v3808 = vpop.f32.mrb[0].mxu0
    %3809 = vmatprep.mubr.bf16.mxu0 0
    %3810 = vmatmul.mubr.bf16.gmra.mrb[0].mxu0 %v1824
    %v3811 = vpop.f32.mrb[0].mxu0
    %v3812 = vadd.f32 %v599, %v3811
    %v3813 = vpop.f32.mrb[0].mxu0
    %v3814 = vpop.f32.mrb[0].mxu0
    %v3815 = vadd.f32 %v599, %v3814
    %v3816 = vpop.f32.mrb[0].mxu0
    %3817 = vmatprep.mubr.bf16.mxu0 0
    %3818 = vmatmul.mubr.bf16.gmra.mrb[0].mxu0 %v1825
    %v3819 = vpop.f32.mrb[0].mxu0
    %v3820 = vadd.f32 %v599, %v3819
    %v3821 = vpop.f32.mrb[0].mxu0
    %v3822 = vpop.f32.mrb[0].mxu0
    %v3823 = vadd.f32 %v599, %v3822
    %v3824 = vpop.f32.mrb[0].mxu0
    %3825 = vmatprep.mubr.bf16.mxu0 0
    %3826 = vmatmul.mubr.bf16.gmra.mrb[0].mxu0 %v1826
    %v3827 = vpop.f32.mrb[0].mxu0
    %v3828 = vadd.f32 %v599, %v3827
    %v3829 = vpop.f32.mrb[0].mxu0
    %v3830 = vpop.f32.mrb[0].mxu0
    %v3831 = vadd.f32 %v599, %v3830
    %v3832 = vpop.f32.mrb[0].mxu0
    %3833 = vmatprep.mubr.bf16.mxu0 0
    %3834 = vmatmul.mubr.bf16.gmra.mrb[0].mxu0 %v1827
    %v3835 = vpop.f32.mrb[0].mxu0
    %v3836 = vadd.f32 %v599, %v3835
    %v3837 = vpop.f32.mrb[0].mxu0
    %v3838 = vpop.f32.mrb[0].mxu0
    %v3839 = vadd.f32 %v599, %v3838
    %v3840 = vpop.f32.mrb[0].mxu0
    %3841 = vmatprep.mubr.bf16.mxu0 0
    %3842 = vmatmul.mubr.bf16.gmra.mrb[0].mxu0 %v1828
    %v3843 = vpop.f32.mrb[0].mxu0
    %v3844 = vadd.f32 %v599, %v3843
    %v3845 = vpop.f32.mrb[0].mxu0
    %v3846 = vpop.f32.mrb[0].mxu0
    %v3847 = vadd.f32 %v599, %v3846
    %v3848 = vpop.f32.mrb[0].mxu0
    %3849 = vmatprep.mubr.bf16.mxu0 0
    %3850 = vmatmul.mubr.bf16.gmra.mrb[0].mxu0 %v1829
    %v3851 = vpop.f32.mrb[0].mxu0
    %v3852 = vadd.f32 %v599, %v3851
    %v3853 = vpop.f32.mrb[0].mxu0
    %v3854 = vpop.f32.mrb[0].mxu0
    %v3855 = vadd.f32 %v599, %v3854
    %v3856 = vpop.f32.mrb[0].mxu0
    %3857 = vmatprep.mubr.bf16.mxu0 0
    %3858 = vmatmul.mubr.bf16.gmra.mrb[0].mxu0 %v1830
    %v3859 = vpop.f32.mrb[0].mxu0
    %v3860 = vadd.f32 %v599, %v3859
    %v3861 = vpop.f32.mrb[0].mxu0
    %v3862 = vpop.f32.mrb[0].mxu0
    %v3863 = vadd.f32 %v599, %v3862
    %v3864 = vpop.f32.mrb[0].mxu0
    %3865 = vmatprep.mubr.bf16.mxu0 0
    %3866 = vmatmul.mubr.bf16.gmra.mrb[0].mxu0 %v1831
    %v3867 = vpop.f32.mrb[0].mxu0
    %v3868 = vadd.f32 %v599, %v3867
    %v3869 = vpop.f32.mrb[0].mxu0
    %v3870 = vpop.f32.mrb[0].mxu0
    %v3871 = vadd.f32 %v599, %v3870
    %v3872 = vpop.f32.mrb[0].mxu0
    %3873 = vmatprep.mubr.bf16.mxu0 0
    %3874 = vmatmul.mubr.bf16.gmra.mrb[0].mxu0 %v1832
    %v3875 = vpop.f32.mrb[0].mxu0
    %v3876 = vadd.f32 %v599, %v3875
    %v3877 = vpop.f32.mrb[0].mxu0
    %v3878 = vpop.f32.mrb[0].mxu0
    %v3879 = vadd.f32 %v599, %v3878
    %v3880 = vpop.f32.mrb[0].mxu0
    %3881 = vmatprep.mubr.bf16.mxu0 0
    %3882 = vmatmul.mubr.bf16.gmra.mrb[0].mxu0 %v1833
    %v3883 = vpop.f32.mrb[0].mxu0
    %v3884 = vadd.f32 %v599, %v3883
    %v3885 = vpop.f32.mrb[0].mxu0
    %v3886 = vpop.f32.mrb[0].mxu0
    %v3887 = vadd.f32 %v599, %v3886
    %v3888 = vpop.f32.mrb[0].mxu0
    %3889 = vmatprep.mubr.bf16.mxu0 0
    %3890 = vmatmul.mubr.bf16.gmra.mrb[0].mxu0 %v1834
    %v3891 = vpop.f32.mrb[0].mxu0
    %v3892 = vadd.f32 %v599, %v3891
    %v3893 = vpop.f32.mrb[0].mxu0
    %v3894 = vpop.f32.mrb[0].mxu0
    %v3895 = vadd.f32 %v599, %v3894
    %v3896 = vpop.f32.mrb[0].mxu0
    %3897 = vmatprep.mubr.bf16.mxu0 0
    %3898 = vmatmul.mubr.bf16.gmra.mrb[0].mxu0 %v1835
    %v3899 = vpop.f32.mrb[0].mxu0
    %v3900 = vadd.f32 %v599, %v3899
    %v3901 = vpop.f32.mrb[0].mxu0
    %v3902 = vpop.f32.mrb[0].mxu0
    %v3903 = vadd.f32 %v599, %v3902
    %v3904 = vpop.f32.mrb[0].mxu0
    %3905 = vmatprep.mubr.bf16.mxu0 0
    %3906 = vmatmul.mubr.bf16.gmra.mrb[0].mxu0 %v1836
    %v3907 = vpop.f32.mrb[0].mxu0
    %v3908 = vadd.f32 %v599, %v3907
    %v3909 = vpop.f32.mrb[0].mxu0
    %v3910 = vpop.f32.mrb[0].mxu0
    %v3911 = vadd.f32 %v599, %v3910
    %v3912 = vpop.f32.mrb[0].mxu0
    %3913 = vmatprep.mubr.bf16.mxu0 0
    %3914 = vmatmul.mubr.bf16.gmra.mrb[0].mxu0 %v1837
    %v3915 = vpop.f32.mrb[0].mxu0
    %v3916 = vadd.f32 %v599, %v3915
    %v3917 = vpop.f32.mrb[0].mxu0
    %v3918 = vpop.f32.mrb[0].mxu0
    %v3919 = vadd.f32 %v599, %v3918
    %v3920 = vpop.f32.mrb[0].mxu0
    %3921 = vmatprep.mubr.bf16.mxu0 0
    %3922 = vmatmul.mubr.bf16.gmra.mrb[0].mxu0 %v1838
    %v3923 = vpop.f32.mrb[0].mxu0
    %v3924 = vadd.f32 %v599, %v3923
    %v3925 = vpop.f32.mrb[0].mxu0
    %v3926 = vpop.f32.mrb[0].mxu0
    %v3927 = vadd.f32 %v599, %v3926
    %v3928 = vpop.f32.mrb[0].mxu0
    %3929 = vmatprep.mubr.bf16.mxu0 0
    %3930 = vmatmul.mubr.bf16.gmra.mrb[0].mxu0 %v1839
    %v3931 = vpop.f32.mrb[0].mxu0
    %v3932 = vadd.f32 %v599, %v3931
    %v3933 = vpop.f32.mrb[0].mxu0
    %v3934 = vpop.f32.mrb[0].mxu0
    %v3935 = vadd.f32 %v599, %v3934
    %v3936 = vpop.f32.mrb[0].mxu0
    %3937 = vmatprep.mubr.bf16.mxu0 0
    %3938 = vmatmul.mubr.bf16.gmra.mrb[0].mxu0 %v1840
    %v3939 = vpop.f32.mrb[0].mxu0
    %v3940 = vadd.f32 %v599, %v3939
    %v3941 = vpop.f32.mrb[0].mxu0
    %v3942 = vpop.f32.mrb[0].mxu0
    %v3943 = vadd.f32 %v599, %v3942
    %v3944 = vpop.f32.mrb[0].mxu0
    %3945 = vmatprep.mubr.bf16.mxu0 0
    %3946 = vmatmul.mubr.bf16.gmra.mrb[0].mxu0 %v1841
    %v3947 = vpop.f32.mrb[0].mxu0
    %v3948 = vadd.f32 %v599, %v3947
    %v3949 = vpop.f32.mrb[0].mxu0
    %v3950 = vpop.f32.mrb[0].mxu0
    %v3951 = vadd.f32 %v599, %v3950
    %v3952 = vpop.f32.mrb[0].mxu0
    %3953 = vmatprep.mubr.bf16.mxu0 0
    %3954 = vmatmul.mubr.bf16.gmra.mrb[0].mxu0 %v1842
    %v3955 = vpop.f32.mrb[0].mxu0
    %v3956 = vadd.f32 %v599, %v3955
    %v3957 = vpop.f32.mrb[0].mxu0
    %v3958 = vpop.f32.mrb[0].mxu0
    %v3959 = vadd.f32 %v599, %v3958
    %v3960 = vpop.f32.mrb[0].mxu0
    %3961 = vmatprep.mubr.bf16.mxu0 0
    %3962 = vmatmul.mubr.bf16.gmra.mrb[0].mxu0 %v1843
    %v3963 = vpop.f32.mrb[0].mxu0
    %v3964 = vadd.f32 %v599, %v3963
    %v3965 = vpop.f32.mrb[0].mxu0
    %v3966 = vpop.f32.mrb[0].mxu0
    %v3967 = vadd.f32 %v599, %v3966
    %v3968 = vpop.f32.mrb[0].mxu0
    %3969 = vmatprep.mubr.bf16.mxu0 0
    %3970 = vmatmul.mubr.bf16.gmra.mrb[0].mxu0 %v1844
    %v3971 = vpop.f32.mrb[0].mxu0
    %v3972 = vadd.f32 %v599, %v3971
    %v3973 = vpop.f32.mrb[0].mxu0
    %v3974 = vpop.f32.mrb[0].mxu0
    %v3975 = vadd.f32 %v599, %v3974
    %v3976 = vpop.f32.mrb[0].mxu0
    %3977 = vmatprep.mubr.bf16.mxu0 0
    %3978 = vmatmul.mubr.bf16.gmra.mrb[0].mxu0 %v1845
    %v3979 = vpop.f32.mrb[0].mxu0
    %v3980 = vadd.f32 %v599, %v3979
    %v3981 = vpop.f32.mrb[0].mxu0
    %v3982 = vpop.f32.mrb[0].mxu0
    %v3983 = vadd.f32 %v599, %v3982
    %v3984 = vpop.f32.mrb[0].mxu0
    %3985 = vmatprep.mubr.bf16.mxu0 0
    %3986 = vmatmul.mubr.bf16.gmra.mrb[0].mxu0 %v1846
    %v3987 = vpop.f32.mrb[0].mxu0
    %v3988 = vadd.f32 %v599, %v3987
    %v3989 = vpop.f32.mrb[0].mxu0
    %v3990 = vpop.f32.mrb[0].mxu0
    %v3991 = vadd.f32 %v599, %v3990
    %v3992 = vpop.f32.mrb[0].mxu0
    %3993 = vmatprep.mubr.bf16.mxu0 0
    %3994 = vmatmul.mubr.bf16.gmra.mrb[0].mxu0 %v1847
    %v3995 = vpop.f32.mrb[0].mxu0
    %v3996 = vadd.f32 %v599, %v3995
    %v3997 = vpop.f32.mrb[0].mxu0
    %v3998 = vpop.f32.mrb[0].mxu0
    %v3999 = vadd.f32 %v599, %v3998
    %v4000 = vpop.f32.mrb[0].mxu0
    %4001 = vmatprep.mubr.bf16.mxu0 0
    %4002 = vmatmul.mubr.bf16.gmra.mrb[0].mxu0 %v1848
    %v4003 = vpop.f32.mrb[0].mxu0
    %v4004 = vadd.f32 %v599, %v4003
    %v4005 = vpop.f32.mrb[0].mxu0
    %v4006 = vpop.f32.mrb[0].mxu0
    %v4007 = vadd.f32 %v599, %v4006
    %v4008 = vpop.f32.mrb[0].mxu0
    %4009 = vmatprep.mubr.bf16.mxu0 0
    %4010 = vmatmul.mubr.bf16.gmra.mrb[0].mxu0 %v1849
    %v4011 = vpop.f32.mrb[0].mxu0
    %v4012 = vadd.f32 %v599, %v4011
    %v4013 = vpop.f32.mrb[0].mxu0
    %v4014 = vpop.f32.mrb[0].mxu0
    %v4015 = vadd.f32 %v599, %v4014
    %v4016 = vpop.f32.mrb[0].mxu0
    %4017 = vmatprep.mubr.bf16.mxu0 0
    %4018 = vmatmul.mubr.bf16.gmra.mrb[0].mxu0 %v1850
    %v4019 = vpop.f32.mrb[0].mxu0
    %v4020 = vadd.f32 %v599, %v4019
    %v4021 = vpop.f32.mrb[0].mxu0
    %v4022 = vpop.f32.mrb[0].mxu0
    %v4023 = vadd.f32 %v599, %v4022
    %v4024 = vpop.f32.mrb[0].mxu0
    %4025 = vmatprep.mubr.bf16.mxu0 0
    %4026 = vmatmul.mubr.bf16.gmra.mrb[0].mxu0 %v1851
    %v4027 = vpop.f32.mrb[0].mxu0
    %v4028 = vadd.f32 %v599, %v4027
    %v4029 = vpop.f32.mrb[0].mxu0
    %v4030 = vpop.f32.mrb[0].mxu0
    %v4031 = vadd.f32 %v599, %v4030
    %v4032 = vpop.f32.mrb[0].mxu0
    %4033 = vmatprep.mubr.bf16.mxu0 0
    %4034 = vmatmul.mubr.bf16.gmra.mrb[0].mxu0 %v1852
    %v4035 = vpop.f32.mrb[0].mxu0
    %v4036 = vadd.f32 %v599, %v4035
    %v4037 = vpop.f32.mrb[0].mxu0
    %v4038 = vpop.f32.mrb[0].mxu0
    %v4039 = vadd.f32 %v599, %v4038
    %v4040 = vpop.f32.mrb[0].mxu0
    %4041 = vmatprep.mubr.bf16.mxu0 0
    %4042 = vmatmul.mubr.bf16.gmra.mrb[0].mxu0 %v1853
    %v4043 = vpop.f32.mrb[0].mxu0
    %v4044 = vadd.f32 %v599, %v4043
    %v4045 = vpop.f32.mrb[0].mxu0
    %v4046 = vpop.f32.mrb[0].mxu0
    %v4047 = vadd.f32 %v599, %v4046
    %v4048 = vpop.f32.mrb[0].mxu0
    %4049 = vmatprep.mubr.bf16.mxu0 0
    %4050 = vmatmul.mubr.bf16.gmra.mrb[0].mxu0 %v1854
    %v4051 = vpop.f32.mrb[0].mxu0
    %v4052 = vadd.f32 %v599, %v4051
    %v4053 = vpop.f32.mrb[0].mxu0
    %v4054 = vpop.f32.mrb[0].mxu0
    %v4055 = vadd.f32 %v599, %v4054
    %v4056 = vpop.f32.mrb[0].mxu0
    %4057 = vmatprep.mubr.bf16.mxu0 0
    %4058 = vmatmul.mubr.bf16.gmra.mrb[0].mxu0 %v1855
    %v4059 = vpop.f32.mrb[0].mxu0
    %v4060 = vadd.f32 %v599, %v4059
    %v4061 = vpop.f32.mrb[0].mxu0
    %v4062 = vpop.f32.mrb[0].mxu0
    %v4063 = vadd.f32 %v599, %v4062
    %v4064 = vpop.f32.mrb[0].mxu0
    %4065 = vmatprep.mubr.bf16.mxu0 0
    %4066 = vmatmul.mubr.bf16.gmra.mrb[0].mxu0 %v1856
    %v4067 = vpop.f32.mrb[0].mxu0
    %v4068 = vadd.f32 %v599, %v4067
    %v4069 = vpop.f32.mrb[0].mxu0
    %v4070 = vpop.f32.mrb[0].mxu0
    %v4071 = vadd.f32 %v599, %v4070
    %v4072 = vpop.f32.mrb[0].mxu0
    %4073 = vmatprep.mubr.bf16.mxu0 0
    %4074 = vmatmul.mubr.bf16.gmra.mrb[0].mxu0 %v1857
    %v4075 = vpop.f32.mrb[0].mxu0
    %v4076 = vadd.f32 %v599, %v4075
    %v4077 = vpop.f32.mrb[0].mxu0
    %v4078 = vpop.f32.mrb[0].mxu0
    %v4079 = vadd.f32 %v599, %v4078
    %v4080 = vpop.f32.mrb[0].mxu0
    %4081 = vmatprep.mubr.bf16.mxu0 0
    %4082 = vmatmul.mubr.bf16.gmra.mrb[0].mxu0 %v1858
    %v4083 = vpop.f32.mrb[0].mxu0
    %v4084 = vadd.f32 %v599, %v4083
    %v4085 = vpop.f32.mrb[0].mxu0
    %v4086 = vpop.f32.mrb[0].mxu0
    %v4087 = vadd.f32 %v599, %v4086
    %v4088 = vpop.f32.mrb[0].mxu0
    %4089 = vmatprep.mubr.bf16.mxu0 0
    %4090 = vmatmul.mubr.bf16.gmra.mrb[0].mxu0 %v1859
    %v4091 = vpop.f32.mrb[0].mxu0
    %v4092 = vadd.f32 %v599, %v4091
    %v4093 = vpop.f32.mrb[0].mxu0
    %v4094 = vpop.f32.mrb[0].mxu0
    %v4095 = vadd.f32 %v599, %v4094
    %v4096 = vpop.f32.mrb[0].mxu0
    %4097 = vmatprep.mubr.bf16.mxu0 0
    %4098 = vmatmul.mubr.bf16.gmra.mrb[0].mxu0 %v1860
    %v4099 = vpop.f32.mrb[0].mxu0
    %v4100 = vadd.f32 %v599, %v4099
    %v4101 = vpop.f32.mrb[0].mxu0
    %v4102 = vpop.f32.mrb[0].mxu0
    %v4103 = vadd.f32 %v599, %v4102
    %v4104 = vpop.f32.mrb[0].mxu0
    %4105 = vmatprep.mubr.bf16.mxu0 0
    %4106 = vmatmul.mubr.bf16.gmra.mrb[0].mxu0 %v1861
    %v4107 = vpop.f32.mrb[0].mxu0
    %v4108 = vadd.f32 %v599, %v4107
    %v4109 = vpop.f32.mrb[0].mxu0
    %v4110 = vpop.f32.mrb[0].mxu0
    %v4111 = vadd.f32 %v599, %v4110
    %v4112 = vpop.f32.mrb[0].mxu0
    %4113 = vmatprep.mubr.bf16.mxu0 0
    %4114 = vmatmul.mubr.bf16.gmra.mrb[0].mxu0 %v1862
    %v4115 = vpop.f32.mrb[0].mxu0
    %v4116 = vadd.f32 %v599, %v4115
    %v4117 = vpop.f32.mrb[0].mxu0
    %v4118 = vpop.f32.mrb[0].mxu0
    %v4119 = vadd.f32 %v599, %v4118
    %v4120 = vpop.f32.mrb[0].mxu0
    %4121 = vmatprep.mubr.bf16.mxu0 0
    %4122 = vmatmul.mubr.bf16.gmra.mrb[0].mxu0 %v1863
    %v4123 = vpop.f32.mrb[0].mxu0
    %v4124 = vadd.f32 %v599, %v4123
    %v4125 = vpop.f32.mrb[0].mxu0
    %v4126 = vpop.f32.mrb[0].mxu0
    %v4127 = vadd.f32 %v599, %v4126
    %v4128 = vpop.f32.mrb[0].mxu0
    %4129 = vmatprep.mubr.bf16.mxu0 0
    %4130 = vmatmul.mubr.bf16.gmra.mrb[0].mxu0 %v1864
    %v4131 = vpop.f32.mrb[0].mxu0
    %v4132 = vadd.f32 %v599, %v4131
    %v4133 = vpop.f32.mrb[0].mxu0
    %v4134 = vpop.f32.mrb[0].mxu0
    %v4135 = vadd.f32 %v599, %v4134
    %v4136 = vpop.f32.mrb[0].mxu0
    %4137 = vmatprep.mubr.bf16.mxu0 0
    %4138 = vmatmul.mubr.bf16.gmra.mrb[0].mxu0 %v1865
    %v4139 = vpop.f32.mrb[0].mxu0
    %v4140 = vadd.f32 %v599, %v4139
    %v4141 = vpop.f32.mrb[0].mxu0
    %v4142 = vpop.f32.mrb[0].mxu0
    %v4143 = vadd.f32 %v599, %v4142
    %v4144 = vpop.f32.mrb[0].mxu0
    %4145 = vmatprep.mubr.bf16.mxu0 0
    %4146 = vmatmul.mubr.bf16.gmra.mrb[0].mxu0 %v1866
    %v4147 = vpop.f32.mrb[0].mxu0
    %v4148 = vadd.f32 %v599, %v4147
    %v4149 = vpop.f32.mrb[0].mxu0
    %v4150 = vpop.f32.mrb[0].mxu0
    %v4151 = vadd.f32 %v599, %v4150
    %v4152 = vpop.f32.mrb[0].mxu0
    %4153 = vmatprep.mubr.bf16.mxu0 0
    %4154 = vmatmul.mubr.bf16.gmra.mrb[0].mxu0 %v1867
    %v4155 = vpop.f32.mrb[0].mxu0
    %v4156 = vadd.f32 %v599, %v4155
    %v4157 = vpop.f32.mrb[0].mxu0
    %v4158 = vpop.f32.mrb[0].mxu0
    %v4159 = vadd.f32 %v599, %v4158
    %v4160 = vpop.f32.mrb[0].mxu0
    %4161 = vmatprep.mubr.bf16.mxu0 0
    %4162 = vmatmul.mubr.bf16.gmra.mrb[0].mxu0 %v1868
    %v4163 = vpop.f32.mrb[0].mxu0
    %v4164 = vadd.f32 %v599, %v4163
    %v4165 = vpop.f32.mrb[0].mxu0
    %v4166 = vpop.f32.mrb[0].mxu0
    %v4167 = vadd.f32 %v599, %v4166
    %v4168 = vpop.f32.mrb[0].mxu0
    %4169 = vmatprep.mubr.bf16.mxu0 0
    %4170 = vmatmul.mubr.bf16.gmra.mrb[0].mxu0 %v1869
    %v4171 = vpop.f32.mrb[0].mxu0
    %v4172 = vadd.f32 %v599, %v4171
    %v4173 = vpop.f32.mrb[0].mxu0
    %v4174 = vpop.f32.mrb[0].mxu0
    %v4175 = vadd.f32 %v599, %v4174
    %v4176 = vpop.f32.mrb[0].mxu0
    %4177 = vmatprep.mubr.bf16.mxu0 0
    %4178 = vmatmul.mubr.bf16.gmra.mrb[0].mxu0 %v1870
    %v4179 = vpop.f32.mrb[0].mxu0
    %v4180 = vadd.f32 %v599, %v4179
    %v4181 = vpop.f32.mrb[0].mxu0
    %v4182 = vpop.f32.mrb[0].mxu0
    %v4183 = vadd.f32 %v599, %v4182
    %v4184 = vpop.f32.mrb[0].mxu0
    %4185 = vmatprep.mubr.bf16.mxu0 0
    %4186 = vmatmul.mubr.bf16.gmra.mrb[0].mxu0 %v1871
    %v4187 = vpop.f32.mrb[0].mxu0
    %v4188 = vadd.f32 %v599, %v4187
    %v4189 = vpop.f32.mrb[0].mxu0
    %v4190 = vpop.f32.mrb[0].mxu0
    %v4191 = vadd.f32 %v599, %v4190
    %v4192 = vpop.f32.mrb[0].mxu0
    %4193 = vmatprep.mubr.bf16.mxu0 0
    %4194 = vmatmul.mubr.bf16.gmra.mrb[0].mxu0 %v1872
    %v4195 = vpop.f32.mrb[0].mxu0
    %v4196 = vadd.f32 %v599, %v4195
    %v4197 = vpop.f32.mrb[0].mxu0
    %v4198 = vpop.f32.mrb[0].mxu0
    %v4199 = vadd.f32 %v599, %v4198
    %v4200 = vpop.f32.mrb[0].mxu0
    %4201 = vmatprep.mubr.bf16.mxu0 0
    %4202 = vmatmul.mubr.bf16.gmra.mrb[0].mxu0 %v1873
    %v4203 = vpop.f32.mrb[0].mxu0
    %v4204 = vadd.f32 %v599, %v4203
    %v4205 = vpop.f32.mrb[0].mxu0
    %v4206 = vpop.f32.mrb[0].mxu0
    %v4207 = vadd.f32 %v599, %v4206
    %v4208 = vpop.f32.mrb[0].mxu0
    %4209 = vmatprep.mubr.bf16.mxu0 0
    %4210 = vmatmul.mubr.bf16.gmra.mrb[0].mxu0 %v1874
    %v4211 = vpop.f32.mrb[0].mxu0
    %v4212 = vadd.f32 %v599, %v4211
    %v4213 = vpop.f32.mrb[0].mxu0
    %v4214 = vpop.f32.mrb[0].mxu0
    %v4215 = vadd.f32 %v599, %v4214
    %v4216 = vpop.f32.mrb[0].mxu0
    %4217 = vmatprep.mubr.bf16.mxu0 0
    %4218 = vmatmul.mubr.bf16.gmra.mrb[0].mxu0 %v1875
    %v4219 = vpop.f32.mrb[0].mxu0
    %v4220 = vadd.f32 %v599, %v4219
    %v4221 = vpop.f32.mrb[0].mxu0
    %v4222 = vpop.f32.mrb[0].mxu0
    %v4223 = vadd.f32 %v599, %v4222
    %v4224 = vpop.f32.mrb[0].mxu0
    %4225 = vmatprep.mubr.bf16.mxu0 0
    %4226 = vmatmul.mubr.bf16.gmra.mrb[0].mxu0 %v1876
    %v4227 = vpop.f32.mrb[0].mxu0
    %v4228 = vadd.f32 %v599, %v4227
    %v4229 = vpop.f32.mrb[0].mxu0
    %v4230 = vpop.f32.mrb[0].mxu0
    %v4231 = vadd.f32 %v599, %v4230
    %v4232 = vpop.f32.mrb[0].mxu0
    %4233 = vmatprep.mubr.bf16.mxu0 0
    %4234 = vmatmul.mubr.bf16.gmra.mrb[0].mxu0 %v1877
    %v4235 = vpop.f32.mrb[0].mxu0
    %v4236 = vadd.f32 %v599, %v4235
    %v4237 = vpop.f32.mrb[0].mxu0
    %v4238 = vpop.f32.mrb[0].mxu0
    %v4239 = vadd.f32 %v599, %v4238
    %v4240 = vpop.f32.mrb[0].mxu0
    %4241 = vmatprep.mubr.bf16.mxu0 0
    %4242 = vmatmul.mubr.bf16.gmra.mrb[0].mxu0 %v1878
    %v4243 = vpop.f32.mrb[0].mxu0
    %v4244 = vadd.f32 %v599, %v4243
    %v4245 = vpop.f32.mrb[0].mxu0
    %v4246 = vpop.f32.mrb[0].mxu0
    %v4247 = vadd.f32 %v599, %v4246
    %v4248 = vpop.f32.mrb[0].mxu0
    %4249 = vmatprep.mubr.bf16.mxu0 0
    %4250 = vmatmul.mubr.bf16.gmra.mrb[0].mxu0 %v1879
    %v4251 = vpop.f32.mrb[0].mxu0
    %v4252 = vadd.f32 %v599, %v4251
    %v4253 = vpop.f32.mrb[0].mxu0
    %v4254 = vpop.f32.mrb[0].mxu0
    %v4255 = vadd.f32 %v599, %v4254
    %v4256 = vpop.f32.mrb[0].mxu0
    %4257 = vmatprep.mubr.bf16.mxu0 0
    %4258 = vmatmul.mubr.bf16.gmra.mrb[0].mxu0 %v1880
    %v4259 = vpop.f32.mrb[0].mxu0
    %v4260 = vadd.f32 %v599, %v4259
    %v4261 = vpop.f32.mrb[0].mxu0
    %v4262 = vpop.f32.mrb[0].mxu0
    %v4263 = vadd.f32 %v599, %v4262
    %v4264 = vpop.f32.mrb[0].mxu0
    %4265 = vdwg.mxu0
    %v4266 = vmax.f32 %v2220, 0.0
    %v4267 = vmax.f32 %v2223, 0.0
    %v4268 = vmax.f32 %v2228, 0.0
    %v4269 = vmax.f32 %v2231, 0.0
    %v4270 = vmax.f32 %v2236, 0.0
    %v4271 = vmax.f32 %v2239, 0.0
    %v4272 = vmax.f32 %v2244, 0.0
    %v4273 = vmax.f32 %v2247, 0.0
    %v4274 = vmax.f32 %v2252, 0.0
    %v4275 = vmax.f32 %v2255, 0.0
    %v4276 = vmax.f32 %v2260, 0.0
    %v4277 = vmax.f32 %v2263, 0.0
    %v4278 = vmax.f32 %v2268, 0.0
    %v4279 = vmax.f32 %v2271, 0.0
    %v4280 = vmax.f32 %v2276, 0.0
    %v4281 = vmax.f32 %v2279, 0.0
    %v4282 = vmax.f32 %v2284, 0.0
    %v4283 = vmax.f32 %v2287, 0.0
    %v4284 = vmax.f32 %v2292, 0.0
    %v4285 = vmax.f32 %v2295, 0.0
    %v4286 = vmax.f32 %v2300, 0.0
    %v4287 = vmax.f32 %v2303, 0.0
    %v4288 = vmax.f32 %v2308, 0.0
    %v4289 = vmax.f32 %v2311, 0.0
    %v4290 = vmax.f32 %v2316, 0.0
    %v4291 = vmax.f32 %v2319, 0.0
    %v4292 = vmax.f32 %v2324, 0.0
    %v4293 = vmax.f32 %v2327, 0.0
    %v4294 = vmax.f32 %v2332, 0.0
    %v4295 = vmax.f32 %v2335, 0.0
    %v4296 = vmax.f32 %v2340, 0.0
    %v4297 = vmax.f32 %v2343, 0.0
    %v4298 = vmax.f32 %v2348, 0.0
    %v4299 = vmax.f32 %v2351, 0.0
    %v4300 = vmax.f32 %v2356, 0.0
    %v4301 = vmax.f32 %v2359, 0.0
    %v4302 = vmax.f32 %v2364, 0.0
    %v4303 = vmax.f32 %v2367, 0.0
    %v4304 = vmax.f32 %v2372, 0.0
    %v4305 = vmax.f32 %v2375, 0.0
    %v4306 = vmax.f32 %v2380, 0.0
    %v4307 = vmax.f32 %v2383, 0.0
    %v4308 = vmax.f32 %v2388, 0.0
    %v4309 = vmax.f32 %v2391, 0.0
    %v4310 = vmax.f32 %v2396, 0.0
    %v4311 = vmax.f32 %v2399, 0.0
    %v4312 = vmax.f32 %v2404, 0.0
    %v4313 = vmax.f32 %v2407, 0.0
    %v4314 = vmax.f32 %v2412, 0.0
    %v4315 = vmax.f32 %v2415, 0.0
    %v4316 = vmax.f32 %v2420, 0.0
    %v4317 = vmax.f32 %v2423, 0.0
    %v4318 = vmax.f32 %v2428, 0.0
    %v4319 = vmax.f32 %v2431, 0.0
    %v4320 = vmax.f32 %v2436, 0.0
    %v4321 = vmax.f32 %v2439, 0.0
    %v4322 = vmax.f32 %v2444, 0.0
    %v4323 = vmax.f32 %v2447, 0.0
    %v4324 = vmax.f32 %v2452, 0.0
    %v4325 = vmax.f32 %v2455, 0.0
    %v4326 = vmax.f32 %v2460, 0.0
    %v4327 = vmax.f32 %v2463, 0.0
    %v4328 = vmax.f32 %v2468, 0.0
    %v4329 = vmax.f32 %v2471, 0.0
    %v4330 = vmax.f32 %v2476, 0.0
    %v4331 = vmax.f32 %v2479, 0.0
    %v4332 = vmax.f32 %v2484, 0.0
    %v4333 = vmax.f32 %v2487, 0.0
    %v4334 = vmax.f32 %v2492, 0.0
    %v4335 = vmax.f32 %v2495, 0.0
    %v4336 = vmax.f32 %v2500, 0.0
    %v4337 = vmax.f32 %v2503, 0.0
    %v4338 = vmax.f32 %v2508, 0.0
    %v4339 = vmax.f32 %v2511, 0.0
    %v4340 = vmax.f32 %v2516, 0.0
    %v4341 = vmax.f32 %v2519, 0.0
    %v4342 = vmax.f32 %v2524, 0.0
    %v4343 = vmax.f32 %v2527, 0.0
    %v4344 = vmax.f32 %v2532, 0.0
    %v4345 = vmax.f32 %v2535, 0.0
    %v4346 = vmax.f32 %v2540, 0.0
    %v4347 = vmax.f32 %v2543, 0.0
    %v4348 = vmax.f32 %v2548, 0.0
    %v4349 = vmax.f32 %v2551, 0.0
    %v4350 = vmax.f32 %v2556, 0.0
    %v4351 = vmax.f32 %v2559, 0.0
    %v4352 = vmax.f32 %v2564, 0.0
    %v4353 = vmax.f32 %v2567, 0.0
    %v4354 = vmax.f32 %v2572, 0.0
    %v4355 = vmax.f32 %v2575, 0.0
    %v4356 = vmax.f32 %v2580, 0.0
    %v4357 = vmax.f32 %v2583, 0.0
    %v4358 = vmax.f32 %v2588, 0.0
    %v4359 = vmax.f32 %v2591, 0.0
    %v4360 = vmax.f32 %v2596, 0.0
    %v4361 = vmax.f32 %v2599, 0.0
    %v4362 = vmax.f32 %v2604, 0.0
    %v4363 = vmax.f32 %v2607, 0.0
    %v4364 = vmax.f32 %v2612, 0.0
    %v4365 = vmax.f32 %v2615, 0.0
    %v4366 = vmax.f32 %v2620, 0.0
    %v4367 = vmax.f32 %v2623, 0.0
    %v4368 = vmax.f32 %v2628, 0.0
    %v4369 = vmax.f32 %v2631, 0.0
    %v4370 = vmax.f32 %v2636, 0.0
    %v4371 = vmax.f32 %v2639, 0.0
    %v4372 = vmax.f32 %v2644, 0.0
    %v4373 = vmax.f32 %v2647, 0.0
    %v4374 = vmax.f32 %v2652, 0.0
    %v4375 = vmax.f32 %v2655, 0.0
    %v4376 = vmax.f32 %v2660, 0.0
    %v4377 = vmax.f32 %v2663, 0.0
    %v4378 = vmax.f32 %v2668, 0.0
    %v4379 = vmax.f32 %v2671, 0.0
    %v4380 = vmax.f32 %v2676, 0.0
    %v4381 = vmax.f32 %v2679, 0.0
    %v4382 = vmax.f32 %v2684, 0.0
    %v4383 = vmax.f32 %v2687, 0.0
    %v4384 = vmax.f32 %v2692, 0.0
    %v4385 = vmax.f32 %v2695, 0.0
    %v4386 = vmax.f32 %v2700, 0.0
    %v4387 = vmax.f32 %v2703, 0.0
    %v4388 = vmax.f32 %v2708, 0.0
    %v4389 = vmax.f32 %v2711, 0.0
    %v4390 = vmax.f32 %v2716, 0.0
    %v4391 = vmax.f32 %v2719, 0.0
    %v4392 = vmax.f32 %v2724, 0.0
    %v4393 = vmax.f32 %v2727, 0.0
    %v4394 = vmax.f32 %v2732, 0.0
    %v4395 = vmax.f32 %v2735, 0.0
    %v4396 = vmax.f32 %v2740, 0.0
    %v4397 = vmax.f32 %v2743, 0.0
    %v4398 = vmax.f32 %v2748, 0.0
    %v4399 = vmax.f32 %v2751, 0.0
    %v4400 = vmax.f32 %v2756, 0.0
    %v4401 = vmax.f32 %v2759, 0.0
    %v4402 = vmax.f32 %v2764, 0.0
    %v4403 = vmax.f32 %v2767, 0.0
    %v4404 = vmax.f32 %v2772, 0.0
    %v4405 = vmax.f32 %v2775, 0.0
    %v4406 = vmax.f32 %v2780, 0.0
    %v4407 = vmax.f32 %v2783, 0.0
    %v4408 = vmax.f32 %v2788, 0.0
    %v4409 = vmax.f32 %v2791, 0.0
    %v4410 = vmax.f32 %v2796, 0.0
    %v4411 = vmax.f32 %v2799, 0.0
    %v4412 = vmax.f32 %v2804, 0.0
    %v4413 = vmax.f32 %v2807, 0.0
    %v4414 = vmax.f32 %v2812, 0.0
    %v4415 = vmax.f32 %v2815, 0.0
    %v4416 = vmax.f32 %v2820, 0.0
    %v4417 = vmax.f32 %v2823, 0.0
    %v4418 = vmax.f32 %v2828, 0.0
    %v4419 = vmax.f32 %v2831, 0.0
    %v4420 = vmax.f32 %v2836, 0.0
    %v4421 = vmax.f32 %v2839, 0.0
    %v4422 = vmax.f32 %v2844, 0.0
    %v4423 = vmax.f32 %v2847, 0.0
    %v4424 = vmax.f32 %v2852, 0.0
    %v4425 = vmax.f32 %v2855, 0.0
    %v4426 = vmax.f32 %v2860, 0.0
    %v4427 = vmax.f32 %v2863, 0.0
    %v4428 = vmax.f32 %v2868, 0.0
    %v4429 = vmax.f32 %v2871, 0.0
    %v4430 = vmax.f32 %v2876, 0.0
    %v4431 = vmax.f32 %v2879, 0.0
    %v4432 = vmax.f32 %v2884, 0.0
    %v4433 = vmax.f32 %v2887, 0.0
    %v4434 = vmax.f32 %v2892, 0.0
    %v4435 = vmax.f32 %v2895, 0.0
    %v4436 = vmax.f32 %v2900, 0.0
    %v4437 = vmax.f32 %v2903, 0.0
    %v4438 = vmax.f32 %v2908, 0.0
    %v4439 = vmax.f32 %v2911, 0.0
    %v4440 = vmax.f32 %v2916, 0.0
    %v4441 = vmax.f32 %v2919, 0.0
    %v4442 = vmax.f32 %v2924, 0.0
    %v4443 = vmax.f32 %v2927, 0.0
    %v4444 = vmax.f32 %v2932, 0.0
    %v4445 = vmax.f32 %v2935, 0.0
    %v4446 = vmax.f32 %v2940, 0.0
    %v4447 = vmax.f32 %v2943, 0.0
    %v4448 = vmax.f32 %v2948, 0.0
    %v4449 = vmax.f32 %v2951, 0.0
    %v4450 = vmax.f32 %v2956, 0.0
    %v4451 = vmax.f32 %v2959, 0.0
    %v4452 = vmax.f32 %v2964, 0.0
    %v4453 = vmax.f32 %v2967, 0.0
    %v4454 = vmax.f32 %v2972, 0.0
    %v4455 = vmax.f32 %v2975, 0.0
    %v4456 = vmax.f32 %v2980, 0.0
    %v4457 = vmax.f32 %v2983, 0.0
    %v4458 = vmax.f32 %v2988, 0.0
    %v4459 = vmax.f32 %v2991, 0.0
    %v4460 = vmax.f32 %v2996, 0.0
    %v4461 = vmax.f32 %v2999, 0.0
    %v4462 = vmax.f32 %v3004, 0.0
    %v4463 = vmax.f32 %v3007, 0.0
    %v4464 = vmax.f32 %v3012, 0.0
    %v4465 = vmax.f32 %v3015, 0.0
    %v4466 = vmax.f32 %v3020, 0.0
    %v4467 = vmax.f32 %v3023, 0.0
    %v4468 = vmax.f32 %v3028, 0.0
    %v4469 = vmax.f32 %v3031, 0.0
    %v4470 = vmax.f32 %v3036, 0.0
    %v4471 = vmax.f32 %v3039, 0.0
    %v4472 = vmax.f32 %v3044, 0.0
    %v4473 = vmax.f32 %v3047, 0.0
    %v4474 = vmax.f32 %v3052, 0.0
    %v4475 = vmax.f32 %v3055, 0.0
    %v4476 = vmax.f32 %v3060, 0.0
    %v4477 = vmax.f32 %v3063, 0.0
    %v4478 = vmax.f32 %v3068, 0.0
    %v4479 = vmax.f32 %v3071, 0.0
    %v4480 = vmax.f32 %v3076, 0.0
    %v4481 = vmax.f32 %v3079, 0.0
    %v4482 = vmax.f32 %v3084, 0.0
    %v4483 = vmax.f32 %v3087, 0.0
    %v4484 = vmax.f32 %v3092, 0.0
    %v4485 = vmax.f32 %v3095, 0.0
    %v4486 = vmax.f32 %v3100, 0.0
    %v4487 = vmax.f32 %v3103, 0.0
    %v4488 = vmax.f32 %v3108, 0.0
    %v4489 = vmax.f32 %v3111, 0.0
    %v4490 = vmax.f32 %v3116, 0.0
    %v4491 = vmax.f32 %v3119, 0.0
    %v4492 = vmax.f32 %v3124, 0.0
    %v4493 = vmax.f32 %v3127, 0.0
    %v4494 = vmax.f32 %v3132, 0.0
    %v4495 = vmax.f32 %v3135, 0.0
    %v4496 = vmax.f32 %v3140, 0.0
    %v4497 = vmax.f32 %v3143, 0.0
    %v4498 = vmax.f32 %v3148, 0.0
    %v4499 = vmax.f32 %v3151, 0.0
    %v4500 = vmax.f32 %v3156, 0.0
    %v4501 = vmax.f32 %v3159, 0.0
    %v4502 = vmax.f32 %v3164, 0.0
    %v4503 = vmax.f32 %v3167, 0.0
    %v4504 = vmax.f32 %v3172, 0.0
    %v4505 = vmax.f32 %v3175, 0.0
    %v4506 = vmax.f32 %v3180, 0.0
    %v4507 = vmax.f32 %v3183, 0.0
    %v4508 = vmax.f32 %v3188, 0.0
    %v4509 = vmax.f32 %v3191, 0.0
    %v4510 = vmax.f32 %v3196, 0.0
    %v4511 = vmax.f32 %v3199, 0.0
    %v4512 = vmax.f32 %v3204, 0.0
    %v4513 = vmax.f32 %v3207, 0.0
    %v4514 = vmax.f32 %v3212, 0.0
    %v4515 = vmax.f32 %v3215, 0.0
    %v4516 = vmax.f32 %v3220, 0.0
    %v4517 = vmax.f32 %v3223, 0.0
    %v4518 = vmax.f32 %v3228, 0.0
    %v4519 = vmax.f32 %v3231, 0.0
    %v4520 = vmax.f32 %v3236, 0.0
    %v4521 = vmax.f32 %v3239, 0.0
    %v4522 = vmax.f32 %v3244, 0.0
    %v4523 = vmax.f32 %v3247, 0.0
    %v4524 = vmax.f32 %v3252, 0.0
    %v4525 = vmax.f32 %v3255, 0.0
    %v4526 = vmax.f32 %v3260, 0.0
    %v4527 = vmax.f32 %v3263, 0.0
    %v4528 = vmax.f32 %v3268, 0.0
    %v4529 = vmax.f32 %v3271, 0.0
    %v4530 = vmax.f32 %v3276, 0.0
    %v4531 = vmax.f32 %v3279, 0.0
    %v4532 = vmax.f32 %v3284, 0.0
    %v4533 = vmax.f32 %v3287, 0.0
    %v4534 = vmax.f32 %v3292, 0.0
    %v4535 = vmax.f32 %v3295, 0.0
    %v4536 = vmax.f32 %v3300, 0.0
    %v4537 = vmax.f32 %v3303, 0.0
    %v4538 = vmax.f32 %v3308, 0.0
    %v4539 = vmax.f32 %v3311, 0.0
    %v4540 = vmax.f32 %v3316, 0.0
    %v4541 = vmax.f32 %v3319, 0.0
    %v4542 = vmax.f32 %v3324, 0.0
    %v4543 = vmax.f32 %v3327, 0.0
    %v4544 = vmax.f32 %v3332, 0.0
    %v4545 = vmax.f32 %v3335, 0.0
    %v4546 = vmax.f32 %v3340, 0.0
    %v4547 = vmax.f32 %v3343, 0.0
    %v4548 = vmax.f32 %v3348, 0.0
    %v4549 = vmax.f32 %v3351, 0.0
    %v4550 = vmax.f32 %v3356, 0.0
    %v4551 = vmax.f32 %v3359, 0.0
    %v4552 = vmax.f32 %v3364, 0.0
    %v4553 = vmax.f32 %v3367, 0.0
    %v4554 = vmax.f32 %v3372, 0.0
    %v4555 = vmax.f32 %v3375, 0.0
    %v4556 = vmax.f32 %v3380, 0.0
    %v4557 = vmax.f32 %v3383, 0.0
    %v4558 = vmax.f32 %v3388, 0.0
    %v4559 = vmax.f32 %v3391, 0.0
    %v4560 = vmax.f32 %v3396, 0.0
    %v4561 = vmax.f32 %v3399, 0.0
    %v4562 = vmax.f32 %v3404, 0.0
    %v4563 = vmax.f32 %v3407, 0.0
    %v4564 = vmax.f32 %v3412, 0.0
    %v4565 = vmax.f32 %v3415, 0.0
    %v4566 = vmax.f32 %v3420, 0.0
    %v4567 = vmax.f32 %v3423, 0.0
    %v4568 = vmax.f32 %v3428, 0.0
    %v4569 = vmax.f32 %v3431, 0.0
    %v4570 = vmax.f32 %v3436, 0.0
    %v4571 = vmax.f32 %v3439, 0.0
    %v4572 = vmax.f32 %v3444, 0.0
    %v4573 = vmax.f32 %v3447, 0.0
    %v4574 = vmax.f32 %v3452, 0.0
    %v4575 = vmax.f32 %v3455, 0.0
    %v4576 = vmax.f32 %v3460, 0.0
    %v4577 = vmax.f32 %v3463, 0.0
    %v4578 = vmax.f32 %v3468, 0.0
    %v4579 = vmax.f32 %v3471, 0.0
    %v4580 = vmax.f32 %v3476, 0.0
    %v4581 = vmax.f32 %v3479, 0.0
    %v4582 = vmax.f32 %v3484, 0.0
    %v4583 = vmax.f32 %v3487, 0.0
    %v4584 = vmax.f32 %v3492, 0.0
    %v4585 = vmax.f32 %v3495, 0.0
    %v4586 = vmax.f32 %v3500, 0.0
    %v4587 = vmax.f32 %v3503, 0.0
    %v4588 = vmax.f32 %v3508, 0.0
    %v4589 = vmax.f32 %v3511, 0.0
    %v4590 = vmax.f32 %v3516, 0.0
    %v4591 = vmax.f32 %v3519, 0.0
    %v4592 = vmax.f32 %v3524, 0.0
    %v4593 = vmax.f32 %v3527, 0.0
    %v4594 = vmax.f32 %v3532, 0.0
    %v4595 = vmax.f32 %v3535, 0.0
    %v4596 = vmax.f32 %v3540, 0.0
    %v4597 = vmax.f32 %v3543, 0.0
    %v4598 = vmax.f32 %v3548, 0.0
    %v4599 = vmax.f32 %v3551, 0.0
    %v4600 = vmax.f32 %v3556, 0.0
    %v4601 = vmax.f32 %v3559, 0.0
    %v4602 = vmax.f32 %v3564, 0.0
    %v4603 = vmax.f32 %v3567, 0.0
    %v4604 = vmax.f32 %v3572, 0.0
    %v4605 = vmax.f32 %v3575, 0.0
    %v4606 = vmax.f32 %v3580, 0.0
    %v4607 = vmax.f32 %v3583, 0.0
    %v4608 = vmax.f32 %v3588, 0.0
    %v4609 = vmax.f32 %v3591, 0.0
    %v4610 = vmax.f32 %v3596, 0.0
    %v4611 = vmax.f32 %v3599, 0.0
    %v4612 = vmax.f32 %v3604, 0.0
    %v4613 = vmax.f32 %v3607, 0.0
    %v4614 = vmax.f32 %v3612, 0.0
    %v4615 = vmax.f32 %v3615, 0.0
    %v4616 = vmax.f32 %v3620, 0.0
    %v4617 = vmax.f32 %v3623, 0.0
    %v4618 = vmax.f32 %v3628, 0.0
    %v4619 = vmax.f32 %v3631, 0.0
    %v4620 = vmax.f32 %v3636, 0.0
    %v4621 = vmax.f32 %v3639, 0.0
    %v4622 = vmax.f32 %v3644, 0.0
    %v4623 = vmax.f32 %v3647, 0.0
    %v4624 = vmax.f32 %v3652, 0.0
    %v4625 = vmax.f32 %v3655, 0.0
    %v4626 = vmax.f32 %v3660, 0.0
    %v4627 = vmax.f32 %v3663, 0.0
    %v4628 = vmax.f32 %v3668, 0.0
    %v4629 = vmax.f32 %v3671, 0.0
    %v4630 = vmax.f32 %v3676, 0.0
    %v4631 = vmax.f32 %v3679, 0.0
    %v4632 = vmax.f32 %v3684, 0.0
    %v4633 = vmax.f32 %v3687, 0.0
    %v4634 = vmax.f32 %v3692, 0.0
    %v4635 = vmax.f32 %v3695, 0.0
    %v4636 = vmax.f32 %v3700, 0.0
    %v4637 = vmax.f32 %v3703, 0.0
    %v4638 = vmax.f32 %v3708, 0.0
    %v4639 = vmax.f32 %v3711, 0.0
    %v4640 = vmax.f32 %v3716, 0.0
    %v4641 = vmax.f32 %v3719, 0.0
    %v4642 = vmax.f32 %v3724, 0.0
    %v4643 = vmax.f32 %v3727, 0.0
    %v4644 = vmax.f32 %v3732, 0.0
    %v4645 = vmax.f32 %v3735, 0.0
    %v4646 = vmax.f32 %v3740, 0.0
    %v4647 = vmax.f32 %v3743, 0.0
    %v4648 = vmax.f32 %v3748, 0.0
    %v4649 = vmax.f32 %v3751, 0.0
    %v4650 = vmax.f32 %v3756, 0.0
    %v4651 = vmax.f32 %v3759, 0.0
    %v4652 = vmax.f32 %v3764, 0.0
    %v4653 = vmax.f32 %v3767, 0.0
    %v4654 = vmax.f32 %v3772, 0.0
    %v4655 = vmax.f32 %v3775, 0.0
    %v4656 = vmax.f32 %v3780, 0.0
    %v4657 = vmax.f32 %v3783, 0.0
    %v4658 = vmax.f32 %v3788, 0.0
    %v4659 = vmax.f32 %v3791, 0.0
    %v4660 = vmax.f32 %v3796, 0.0
    %v4661 = vmax.f32 %v3799, 0.0
    %v4662 = vmax.f32 %v3804, 0.0
    %v4663 = vmax.f32 %v3807, 0.0
    %v4664 = vmax.f32 %v3812, 0.0
    %v4665 = vmax.f32 %v3815, 0.0
    %v4666 = vmax.f32 %v3820, 0.0
    %v4667 = vmax.f32 %v3823, 0.0
    %v4668 = vmax.f32 %v3828, 0.0
    %v4669 = vmax.f32 %v3831, 0.0
    %v4670 = vmax.f32 %v3836, 0.0
    %v4671 = vmax.f32 %v3839, 0.0
    %v4672 = vmax.f32 %v3844, 0.0
    %v4673 = vmax.f32 %v3847, 0.0
    %v4674 = vmax.f32 %v3852, 0.0
    %v4675 = vmax.f32 %v3855, 0.0
    %v4676 = vmax.f32 %v3860, 0.0
    %v4677 = vmax.f32 %v3863, 0.0
    %v4678 = vmax.f32 %v3868, 0.0
    %v4679 = vmax.f32 %v3871, 0.0
    %v4680 = vmax.f32 %v3876, 0.0
    %v4681 = vmax.f32 %v3879, 0.0
    %v4682 = vmax.f32 %v3884, 0.0
    %v4683 = vmax.f32 %v3887, 0.0
    %v4684 = vmax.f32 %v3892, 0.0
    %v4685 = vmax.f32 %v3895, 0.0
    %v4686 = vmax.f32 %v3900, 0.0
    %v4687 = vmax.f32 %v3903, 0.0
    %v4688 = vmax.f32 %v3908, 0.0
    %v4689 = vmax.f32 %v3911, 0.0
    %v4690 = vmax.f32 %v3916, 0.0
    %v4691 = vmax.f32 %v3919, 0.0
    %v4692 = vmax.f32 %v3924, 0.0
    %v4693 = vmax.f32 %v3927, 0.0
    %v4694 = vmax.f32 %v3932, 0.0
    %v4695 = vmax.f32 %v3935, 0.0
    %v4696 = vmax.f32 %v3940, 0.0
    %v4697 = vmax.f32 %v3943, 0.0
    %v4698 = vmax.f32 %v3948, 0.0
    %v4699 = vmax.f32 %v3951, 0.0
    %v4700 = vmax.f32 %v3956, 0.0
    %v4701 = vmax.f32 %v3959, 0.0
    %v4702 = vmax.f32 %v3964, 0.0
    %v4703 = vmax.f32 %v3967, 0.0
    %v4704 = vmax.f32 %v3972, 0.0
    %v4705 = vmax.f32 %v3975, 0.0
    %v4706 = vmax.f32 %v3980, 0.0
    %v4707 = vmax.f32 %v3983, 0.0
    %v4708 = vmax.f32 %v3988, 0.0
    %v4709 = vmax.f32 %v3991, 0.0
    %v4710 = vmax.f32 %v3996, 0.0
    %v4711 = vmax.f32 %v3999, 0.0
    %v4712 = vmax.f32 %v4004, 0.0
    %v4713 = vmax.f32 %v4007, 0.0
    %v4714 = vmax.f32 %v4012, 0.0
    %v4715 = vmax.f32 %v4015, 0.0
    %v4716 = vmax.f32 %v4020, 0.0
    %v4717 = vmax.f32 %v4023, 0.0
    %v4718 = vmax.f32 %v4028, 0.0
    %v4719 = vmax.f32 %v4031, 0.0
    %v4720 = vmax.f32 %v4036, 0.0
    %v4721 = vmax.f32 %v4039, 0.0
    %v4722 = vmax.f32 %v4044, 0.0
    %v4723 = vmax.f32 %v4047, 0.0
    %v4724 = vmax.f32 %v4052, 0.0
    %v4725 = vmax.f32 %v4055, 0.0
    %v4726 = vmax.f32 %v4060, 0.0
    %v4727 = vmax.f32 %v4063, 0.0
    %v4728 = vmax.f32 %v4068, 0.0
    %v4729 = vmax.f32 %v4071, 0.0
    %v4730 = vmax.f32 %v4076, 0.0
    %v4731 = vmax.f32 %v4079, 0.0
    %v4732 = vmax.f32 %v4084, 0.0
    %v4733 = vmax.f32 %v4087, 0.0
    %v4734 = vmax.f32 %v4092, 0.0
    %v4735 = vmax.f32 %v4095, 0.0
    %v4736 = vmax.f32 %v4100, 0.0
    %v4737 = vmax.f32 %v4103, 0.0
    %v4738 = vmax.f32 %v4108, 0.0
    %v4739 = vmax.f32 %v4111, 0.0
    %v4740 = vmax.f32 %v4116, 0.0
    %v4741 = vmax.f32 %v4119, 0.0
    %v4742 = vmax.f32 %v4124, 0.0
    %v4743 = vmax.f32 %v4127, 0.0
    %v4744 = vmax.f32 %v4132, 0.0
    %v4745 = vmax.f32 %v4135, 0.0
    %v4746 = vmax.f32 %v4140, 0.0
    %v4747 = vmax.f32 %v4143, 0.0
    %v4748 = vmax.f32 %v4148, 0.0
    %v4749 = vmax.f32 %v4151, 0.0
    %v4750 = vmax.f32 %v4156, 0.0
    %v4751 = vmax.f32 %v4159, 0.0
    %v4752 = vmax.f32 %v4164, 0.0
    %v4753 = vmax.f32 %v4167, 0.0
    %v4754 = vmax.f32 %v4172, 0.0
    %v4755 = vmax.f32 %v4175, 0.0
    %v4756 = vmax.f32 %v4180, 0.0
    %v4757 = vmax.f32 %v4183, 0.0
    %v4758 = vmax.f32 %v4188, 0.0
    %v4759 = vmax.f32 %v4191, 0.0
    %v4760 = vmax.f32 %v4196, 0.0
    %v4761 = vmax.f32 %v4199, 0.0
    %v4762 = vmax.f32 %v4204, 0.0
    %v4763 = vmax.f32 %v4207, 0.0
    %v4764 = vmax.f32 %v4212, 0.0
    %v4765 = vmax.f32 %v4215, 0.0
    %v4766 = vmax.f32 %v4220, 0.0
    %v4767 = vmax.f32 %v4223, 0.0
    %v4768 = vmax.f32 %v4228, 0.0
    %v4769 = vmax.f32 %v4231, 0.0
    %v4770 = vmax.f32 %v4236, 0.0
    %v4771 = vmax.f32 %v4239, 0.0
    %v4772 = vmax.f32 %v4244, 0.0
    %v4773 = vmax.f32 %v4247, 0.0
    %v4774 = vmax.f32 %v4252, 0.0
    %v4775 = vmax.f32 %v4255, 0.0
    %v4776 = vmax.f32 %v4260, 0.0
    %v4777 = vmax.f32 %v4263, 0.0
    %v4778 = vadd.f32 %v4266, %v4267
    %v4779 = vadd.f32 %v4778, %v4268
    %v4780 = vadd.f32 %v4779, %v4269
    %v4781 = vadd.f32 %v4780, %v4270
    %v4782 = vadd.f32 %v4781, %v4271
    %v4783 = vadd.f32 %v4782, %v4272
    %v4784 = vadd.f32 %v4783, %v4273
    %v4785 = vadd.f32 %v4784, %v4274
    %v4786 = vadd.f32 %v4785, %v4275
    %v4787 = vadd.f32 %v4786, %v4276
    %v4788 = vadd.f32 %v4787, %v4277
    %v4789 = vadd.f32 %v4788, %v4278
    %v4790 = vadd.f32 %v4789, %v4279
    %v4791 = vadd.f32 %v4790, %v4280
    %v4792 = vadd.f32 %v4791, %v4281
    %v4793 = vadd.f32 %v4792, %v4282
    %v4794 = vadd.f32 %v4793, %v4283
    %v4795 = vadd.f32 %v4794, %v4284
    %v4796 = vadd.f32 %v4795, %v4285
    %v4797 = vadd.f32 %v4796, %v4286
    %v4798 = vadd.f32 %v4797, %v4287
    %v4799 = vadd.f32 %v4798, %v4288
    %v4800 = vadd.f32 %v4799, %v4289
    %v4801 = vadd.f32 %v4800, %v4290
    %v4802 = vadd.f32 %v4801, %v4291
    %v4803 = vadd.f32 %v4802, %v4292
    %v4804 = vadd.f32 %v4803, %v4293
    %v4805 = vadd.f32 %v4804, %v4294
    %v4806 = vadd.f32 %v4805, %v4295
    %v4807 = vadd.f32 %v4806, %v4296
    %v4808 = vadd.f32 %v4807, %v4297
    %v4809 = vrot.slane %v4808, 4
    %v4810 = vadd.f32 %v4808, %v4809
    %v4811 = vrot.slane %v4810, 2
    %v4812 = vadd.f32 %v4810, %v4811
    %v4813 = vrot.slane %v4812, 1
    %v4814 = vadd.f32 %v4812, %v4813
    %v4815 = vadd.f32 %v4298, %v4299
    %v4816 = vadd.f32 %v4815, %v4300
    %v4817 = vadd.f32 %v4816, %v4301
    %v4818 = vadd.f32 %v4817, %v4302
    %v4819 = vadd.f32 %v4818, %v4303
    %v4820 = vadd.f32 %v4819, %v4304
    %v4821 = vadd.f32 %v4820, %v4305
    %v4822 = vadd.f32 %v4821, %v4306
    %v4823 = vadd.f32 %v4822, %v4307
    %v4824 = vadd.f32 %v4823, %v4308
    %v4825 = vadd.f32 %v4824, %v4309
    %v4826 = vadd.f32 %v4825, %v4310
    %v4827 = vadd.f32 %v4826, %v4311
    %v4828 = vadd.f32 %v4827, %v4312
    %v4829 = vadd.f32 %v4828, %v4313
    %v4830 = vadd.f32 %v4829, %v4314
    %v4831 = vadd.f32 %v4830, %v4315
    %v4832 = vadd.f32 %v4831, %v4316
    %v4833 = vadd.f32 %v4832, %v4317
    %v4834 = vadd.f32 %v4833, %v4318
    %v4835 = vadd.f32 %v4834, %v4319
    %v4836 = vadd.f32 %v4835, %v4320
    %v4837 = vadd.f32 %v4836, %v4321
    %v4838 = vadd.f32 %v4837, %v4322
    %v4839 = vadd.f32 %v4838, %v4323
    %v4840 = vadd.f32 %v4839, %v4324
    %v4841 = vadd.f32 %v4840, %v4325
    %v4842 = vadd.f32 %v4841, %v4326
    %v4843 = vadd.f32 %v4842, %v4327
    %v4844 = vadd.f32 %v4843, %v4328
    %v4845 = vadd.f32 %v4844, %v4329
    %v4846 = vrot.slane %v4845, 4
    %v4847 = vadd.f32 %v4845, %v4846
    %v4848 = vrot.slane %v4847, 2
    %v4849 = vadd.f32 %v4847, %v4848
    %v4850 = vrot.slane %v4849, 1
    %v4851 = vadd.f32 %v4849, %v4850
    %v4852 = vadd.f32 %v4330, %v4331
    %v4853 = vadd.f32 %v4852, %v4332
    %v4854 = vadd.f32 %v4853, %v4333
    %v4855 = vadd.f32 %v4854, %v4334
    %v4856 = vadd.f32 %v4855, %v4335
    %v4857 = vadd.f32 %v4856, %v4336
    %v4858 = vadd.f32 %v4857, %v4337
    %v4859 = vadd.f32 %v4858, %v4338
    %v4860 = vadd.f32 %v4859, %v4339
    %v4861 = vadd.f32 %v4860, %v4340
    %v4862 = vadd.f32 %v4861, %v4341
    %v4863 = vadd.f32 %v4862, %v4342
    %v4864 = vadd.f32 %v4863, %v4343
    %v4865 = vadd.f32 %v4864, %v4344
    %v4866 = vadd.f32 %v4865, %v4345
    %v4867 = vadd.f32 %v4866, %v4346
    %v4868 = vadd.f32 %v4867, %v4347
    %v4869 = vadd.f32 %v4868, %v4348
    %v4870 = vadd.f32 %v4869, %v4349
    %v4871 = vadd.f32 %v4870, %v4350
    %v4872 = vadd.f32 %v4871, %v4351
    %v4873 = vadd.f32 %v4872, %v4352
    %v4874 = vadd.f32 %v4873, %v4353
    %v4875 = vadd.f32 %v4874, %v4354
    %v4876 = vadd.f32 %v4875, %v4355
    %v4877 = vadd.f32 %v4876, %v4356
    %v4878 = vadd.f32 %v4877, %v4357
    %v4879 = vadd.f32 %v4878, %v4358
    %v4880 = vadd.f32 %v4879, %v4359
    %v4881 = vadd.f32 %v4880, %v4360
    %v4882 = vadd.f32 %v4881, %v4361
    %v4883 = vrot.slane %v4882, 4
    %v4884 = vadd.f32 %v4882, %v4883
    %v4885 = vrot.slane %v4884, 2
    %v4886 = vadd.f32 %v4884, %v4885
    %v4887 = vrot.slane %v4886, 1
    %v4888 = vadd.f32 %v4886, %v4887
    %v4889 = vadd.f32 %v4362, %v4363
    %v4890 = vadd.f32 %v4889, %v4364
    %v4891 = vadd.f32 %v4890, %v4365
    %v4892 = vadd.f32 %v4891, %v4366
    %v4893 = vadd.f32 %v4892, %v4367
    %v4894 = vadd.f32 %v4893, %v4368
    %v4895 = vadd.f32 %v4894, %v4369
    %v4896 = vadd.f32 %v4895, %v4370
    %v4897 = vadd.f32 %v4896, %v4371
    %v4898 = vadd.f32 %v4897, %v4372
    %v4899 = vadd.f32 %v4898, %v4373
    %v4900 = vadd.f32 %v4899, %v4374
    %v4901 = vadd.f32 %v4900, %v4375
    %v4902 = vadd.f32 %v4901, %v4376
    %v4903 = vadd.f32 %v4902, %v4377
    %v4904 = vadd.f32 %v4903, %v4378
    %v4905 = vadd.f32 %v4904, %v4379
    %v4906 = vadd.f32 %v4905, %v4380
    %v4907 = vadd.f32 %v4906, %v4381
    %v4908 = vadd.f32 %v4907, %v4382
    %v4909 = vadd.f32 %v4908, %v4383
    %v4910 = vadd.f32 %v4909, %v4384
    %v4911 = vadd.f32 %v4910, %v4385
    %v4912 = vadd.f32 %v4911, %v4386
    %v4913 = vadd.f32 %v4912, %v4387
    %v4914 = vadd.f32 %v4913, %v4388
    %v4915 = vadd.f32 %v4914, %v4389
    %v4916 = vadd.f32 %v4915, %v4390
    %v4917 = vadd.f32 %v4916, %v4391
    %v4918 = vadd.f32 %v4917, %v4392
    %v4919 = vadd.f32 %v4918, %v4393
    %v4920 = vrot.slane %v4919, 4
    %v4921 = vadd.f32 %v4919, %v4920
    %v4922 = vrot.slane %v4921, 2
    %v4923 = vadd.f32 %v4921, %v4922
    %v4924 = vrot.slane %v4923, 1
    %v4925 = vadd.f32 %v4923, %v4924
    %v4926 = vadd.f32 %v4394, %v4395
    %v4927 = vadd.f32 %v4926, %v4396
    %v4928 = vadd.f32 %v4927, %v4397
    %v4929 = vadd.f32 %v4928, %v4398
    %v4930 = vadd.f32 %v4929, %v4399
    %v4931 = vadd.f32 %v4930, %v4400
    %v4932 = vadd.f32 %v4931, %v4401
    %v4933 = vadd.f32 %v4932, %v4402
    %v4934 = vadd.f32 %v4933, %v4403
    %v4935 = vadd.f32 %v4934, %v4404
    %v4936 = vadd.f32 %v4935, %v4405
    %v4937 = vadd.f32 %v4936, %v4406
    %v4938 = vadd.f32 %v4937, %v4407
    %v4939 = vadd.f32 %v4938, %v4408
    %v4940 = vadd.f32 %v4939, %v4409
    %v4941 = vadd.f32 %v4940, %v4410
    %v4942 = vadd.f32 %v4941, %v4411
    %v4943 = vadd.f32 %v4942, %v4412
    %v4944 = vadd.f32 %v4943, %v4413
    %v4945 = vadd.f32 %v4944, %v4414
    %v4946 = vadd.f32 %v4945, %v4415
    %v4947 = vadd.f32 %v4946, %v4416
    %v4948 = vadd.f32 %v4947, %v4417
    %v4949 = vadd.f32 %v4948, %v4418
    %v4950 = vadd.f32 %v4949, %v4419
    %v4951 = vadd.f32 %v4950, %v4420
    %v4952 = vadd.f32 %v4951, %v4421
    %v4953 = vadd.f32 %v4952, %v4422
    %v4954 = vadd.f32 %v4953, %v4423
    %v4955 = vadd.f32 %v4954, %v4424
    %v4956 = vadd.f32 %v4955, %v4425
    %v4957 = vrot.slane %v4956, 4
    %v4958 = vadd.f32 %v4956, %v4957
    %v4959 = vrot.slane %v4958, 2
    %v4960 = vadd.f32 %v4958, %v4959
    %v4961 = vrot.slane %v4960, 1
    %v4962 = vadd.f32 %v4960, %v4961
    %v4963 = vadd.f32 %v4426, %v4427
    %v4964 = vadd.f32 %v4963, %v4428
    %v4965 = vadd.f32 %v4964, %v4429
    %v4966 = vadd.f32 %v4965, %v4430
    %v4967 = vadd.f32 %v4966, %v4431
    %v4968 = vadd.f32 %v4967, %v4432
    %v4969 = vadd.f32 %v4968, %v4433
    %v4970 = vadd.f32 %v4969, %v4434
    %v4971 = vadd.f32 %v4970, %v4435
    %v4972 = vadd.f32 %v4971, %v4436
    %v4973 = vadd.f32 %v4972, %v4437
    %v4974 = vadd.f32 %v4973, %v4438
    %v4975 = vadd.f32 %v4974, %v4439
    %v4976 = vadd.f32 %v4975, %v4440
    %v4977 = vadd.f32 %v4976, %v4441
    %v4978 = vadd.f32 %v4977, %v4442
    %v4979 = vadd.f32 %v4978, %v4443
    %v4980 = vadd.f32 %v4979, %v4444
    %v4981 = vadd.f32 %v4980, %v4445
    %v4982 = vadd.f32 %v4981, %v4446
    %v4983 = vadd.f32 %v4982, %v4447
    %v4984 = vadd.f32 %v4983, %v4448
    %v4985 = vadd.f32 %v4984, %v4449
    %v4986 = vadd.f32 %v4985, %v4450
    %v4987 = vadd.f32 %v4986, %v4451
    %v4988 = vadd.f32 %v4987, %v4452
    %v4989 = vadd.f32 %v4988, %v4453
    %v4990 = vadd.f32 %v4989, %v4454
    %v4991 = vadd.f32 %v4990, %v4455
    %v4992 = vadd.f32 %v4991, %v4456
    %v4993 = vadd.f32 %v4992, %v4457
    %v4994 = vrot.slane %v4993, 4
    %v4995 = vadd.f32 %v4993, %v4994
    %v4996 = vrot.slane %v4995, 2
    %v4997 = vadd.f32 %v4995, %v4996
    %v4998 = vrot.slane %v4997, 1
    %v4999 = vadd.f32 %v4997, %v4998
    %v5000 = vadd.f32 %v4458, %v4459
    %v5001 = vadd.f32 %v5000, %v4460
    %v5002 = vadd.f32 %v5001, %v4461
    %v5003 = vadd.f32 %v5002, %v4462
    %v5004 = vadd.f32 %v5003, %v4463
    %v5005 = vadd.f32 %v5004, %v4464
    %v5006 = vadd.f32 %v5005, %v4465
    %v5007 = vadd.f32 %v5006, %v4466
    %v5008 = vadd.f32 %v5007, %v4467
    %v5009 = vadd.f32 %v5008, %v4468
    %v5010 = vadd.f32 %v5009, %v4469
    %v5011 = vadd.f32 %v5010, %v4470
    %v5012 = vadd.f32 %v5011, %v4471
    %v5013 = vadd.f32 %v5012, %v4472
    %v5014 = vadd.f32 %v5013, %v4473
    %v5015 = vadd.f32 %v5014, %v4474
    %v5016 = vadd.f32 %v5015, %v4475
    %v5017 = vadd.f32 %v5016, %v4476
    %v5018 = vadd.f32 %v5017, %v4477
    %v5019 = vadd.f32 %v5018, %v4478
    %v5020 = vadd.f32 %v5019, %v4479
    %v5021 = vadd.f32 %v5020, %v4480
    %v5022 = vadd.f32 %v5021, %v4481
    %v5023 = vadd.f32 %v5022, %v4482
    %v5024 = vadd.f32 %v5023, %v4483
    %v5025 = vadd.f32 %v5024, %v4484
    %v5026 = vadd.f32 %v5025, %v4485
    %v5027 = vadd.f32 %v5026, %v4486
    %v5028 = vadd.f32 %v5027, %v4487
    %v5029 = vadd.f32 %v5028, %v4488
    %v5030 = vadd.f32 %v5029, %v4489
    %v5031 = vrot.slane %v5030, 4
    %v5032 = vadd.f32 %v5030, %v5031
    %v5033 = vrot.slane %v5032, 2
    %v5034 = vadd.f32 %v5032, %v5033
    %v5035 = vrot.slane %v5034, 1
    %v5036 = vadd.f32 %v5034, %v5035
    %v5037 = vadd.f32 %v4490, %v4491
    %v5038 = vadd.f32 %v5037, %v4492
    %v5039 = vadd.f32 %v5038, %v4493
    %v5040 = vadd.f32 %v5039, %v4494
    %v5041 = vadd.f32 %v5040, %v4495
    %v5042 = vadd.f32 %v5041, %v4496
    %v5043 = vadd.f32 %v5042, %v4497
    %v5044 = vadd.f32 %v5043, %v4498
    %v5045 = vadd.f32 %v5044, %v4499
    %v5046 = vadd.f32 %v5045, %v4500
    %v5047 = vadd.f32 %v5046, %v4501
    %v5048 = vadd.f32 %v5047, %v4502
    %v5049 = vadd.f32 %v5048, %v4503
    %v5050 = vadd.f32 %v5049, %v4504
    %v5051 = vadd.f32 %v5050, %v4505
    %v5052 = vadd.f32 %v5051, %v4506
    %v5053 = vadd.f32 %v5052, %v4507
    %v5054 = vadd.f32 %v5053, %v4508
    %v5055 = vadd.f32 %v5054, %v4509
    %v5056 = vadd.f32 %v5055, %v4510
    %v5057 = vadd.f32 %v5056, %v4511
    %v5058 = vadd.f32 %v5057, %v4512
    %v5059 = vadd.f32 %v5058, %v4513
    %v5060 = vadd.f32 %v5059, %v4514
    %v5061 = vadd.f32 %v5060, %v4515
    %v5062 = vadd.f32 %v5061, %v4516
    %v5063 = vadd.f32 %v5062, %v4517
    %v5064 = vadd.f32 %v5063, %v4518
    %v5065 = vadd.f32 %v5064, %v4519
    %v5066 = vadd.f32 %v5065, %v4520
    %v5067 = vadd.f32 %v5066, %v4521
    %v5068 = vrot.slane %v5067, 4
    %v5069 = vadd.f32 %v5067, %v5068
    %v5070 = vrot.slane %v5069, 2
    %v5071 = vadd.f32 %v5069, %v5070
    %v5072 = vrot.slane %v5071, 1
    %v5073 = vadd.f32 %v5071, %v5072
    %v5074 = vadd.f32 %v4522, %v4523
    %v5075 = vadd.f32 %v5074, %v4524
    %v5076 = vadd.f32 %v5075, %v4525
    %v5077 = vadd.f32 %v5076, %v4526
    %v5078 = vadd.f32 %v5077, %v4527
    %v5079 = vadd.f32 %v5078, %v4528
    %v5080 = vadd.f32 %v5079, %v4529
    %v5081 = vadd.f32 %v5080, %v4530
    %v5082 = vadd.f32 %v5081, %v4531
    %v5083 = vadd.f32 %v5082, %v4532
    %v5084 = vadd.f32 %v5083, %v4533
    %v5085 = vadd.f32 %v5084, %v4534
    %v5086 = vadd.f32 %v5085, %v4535
    %v5087 = vadd.f32 %v5086, %v4536
    %v5088 = vadd.f32 %v5087, %v4537
    %v5089 = vadd.f32 %v5088, %v4538
    %v5090 = vadd.f32 %v5089, %v4539
    %v5091 = vadd.f32 %v5090, %v4540
    %v5092 = vadd.f32 %v5091, %v4541
    %v5093 = vadd.f32 %v5092, %v4542
    %v5094 = vadd.f32 %v5093, %v4543
    %v5095 = vadd.f32 %v5094, %v4544
    %v5096 = vadd.f32 %v5095, %v4545
    %v5097 = vadd.f32 %v5096, %v4546
    %v5098 = vadd.f32 %v5097, %v4547
    %v5099 = vadd.f32 %v5098, %v4548
    %v5100 = vadd.f32 %v5099, %v4549
    %v5101 = vadd.f32 %v5100, %v4550
    %v5102 = vadd.f32 %v5101, %v4551
    %v5103 = vadd.f32 %v5102, %v4552
    %v5104 = vadd.f32 %v5103, %v4553
    %v5105 = vrot.slane %v5104, 4
    %v5106 = vadd.f32 %v5104, %v5105
    %v5107 = vrot.slane %v5106, 2
    %v5108 = vadd.f32 %v5106, %v5107
    %v5109 = vrot.slane %v5108, 1
    %v5110 = vadd.f32 %v5108, %v5109
    %v5111 = vadd.f32 %v4554, %v4555
    %v5112 = vadd.f32 %v5111, %v4556
    %v5113 = vadd.f32 %v5112, %v4557
    %v5114 = vadd.f32 %v5113, %v4558
    %v5115 = vadd.f32 %v5114, %v4559
    %v5116 = vadd.f32 %v5115, %v4560
    %v5117 = vadd.f32 %v5116, %v4561
    %v5118 = vadd.f32 %v5117, %v4562
    %v5119 = vadd.f32 %v5118, %v4563
    %v5120 = vadd.f32 %v5119, %v4564
    %v5121 = vadd.f32 %v5120, %v4565
    %v5122 = vadd.f32 %v5121, %v4566
    %v5123 = vadd.f32 %v5122, %v4567
    %v5124 = vadd.f32 %v5123, %v4568
    %v5125 = vadd.f32 %v5124, %v4569
    %v5126 = vadd.f32 %v5125, %v4570
    %v5127 = vadd.f32 %v5126, %v4571
    %v5128 = vadd.f32 %v5127, %v4572
    %v5129 = vadd.f32 %v5128, %v4573
    %v5130 = vadd.f32 %v5129, %v4574
    %v5131 = vadd.f32 %v5130, %v4575
    %v5132 = vadd.f32 %v5131, %v4576
    %v5133 = vadd.f32 %v5132, %v4577
    %v5134 = vadd.f32 %v5133, %v4578
    %v5135 = vadd.f32 %v5134, %v4579
    %v5136 = vadd.f32 %v5135, %v4580
    %v5137 = vadd.f32 %v5136, %v4581
    %v5138 = vadd.f32 %v5137, %v4582
    %v5139 = vadd.f32 %v5138, %v4583
    %v5140 = vadd.f32 %v5139, %v4584
    %v5141 = vadd.f32 %v5140, %v4585
    %v5142 = vrot.slane %v5141, 4
    %v5143 = vadd.f32 %v5141, %v5142
    %v5144 = vrot.slane %v5143, 2
    %v5145 = vadd.f32 %v5143, %v5144
    %v5146 = vrot.slane %v5145, 1
    %v5147 = vadd.f32 %v5145, %v5146
    %v5148 = vadd.f32 %v4586, %v4587
    %v5149 = vadd.f32 %v5148, %v4588
    %v5150 = vadd.f32 %v5149, %v4589
    %v5151 = vadd.f32 %v5150, %v4590
    %v5152 = vadd.f32 %v5151, %v4591
    %v5153 = vadd.f32 %v5152, %v4592
    %v5154 = vadd.f32 %v5153, %v4593
    %v5155 = vadd.f32 %v5154, %v4594
    %v5156 = vadd.f32 %v5155, %v4595
    %v5157 = vadd.f32 %v5156, %v4596
    %v5158 = vadd.f32 %v5157, %v4597
    %v5159 = vadd.f32 %v5158, %v4598
    %v5160 = vadd.f32 %v5159, %v4599
    %v5161 = vadd.f32 %v5160, %v4600
    %v5162 = vadd.f32 %v5161, %v4601
    %v5163 = vadd.f32 %v5162, %v4602
    %v5164 = vadd.f32 %v5163, %v4603
    %v5165 = vadd.f32 %v5164, %v4604
    %v5166 = vadd.f32 %v5165, %v4605
    %v5167 = vadd.f32 %v5166, %v4606
    %v5168 = vadd.f32 %v5167, %v4607
    %v5169 = vadd.f32 %v5168, %v4608
    %v5170 = vadd.f32 %v5169, %v4609
    %v5171 = vadd.f32 %v5170, %v4610
    %v5172 = vadd.f32 %v5171, %v4611
    %v5173 = vadd.f32 %v5172, %v4612
    %v5174 = vadd.f32 %v5173, %v4613
    %v5175 = vadd.f32 %v5174, %v4614
    %v5176 = vadd.f32 %v5175, %v4615
    %v5177 = vadd.f32 %v5176, %v4616
    %v5178 = vadd.f32 %v5177, %v4617
    %v5179 = vrot.slane %v5178, 4
    %v5180 = vadd.f32 %v5178, %v5179
    %v5181 = vrot.slane %v5180, 2
    %v5182 = vadd.f32 %v5180, %v5181
    %v5183 = vrot.slane %v5182, 1
    %v5184 = vadd.f32 %v5182, %v5183
    %v5185 = vadd.f32 %v4618, %v4619
    %v5186 = vadd.f32 %v5185, %v4620
    %v5187 = vadd.f32 %v5186, %v4621
    %v5188 = vadd.f32 %v5187, %v4622
    %v5189 = vadd.f32 %v5188, %v4623
    %v5190 = vadd.f32 %v5189, %v4624
    %v5191 = vadd.f32 %v5190, %v4625
    %v5192 = vadd.f32 %v5191, %v4626
    %v5193 = vadd.f32 %v5192, %v4627
    %v5194 = vadd.f32 %v5193, %v4628
    %v5195 = vadd.f32 %v5194, %v4629
    %v5196 = vadd.f32 %v5195, %v4630
    %v5197 = vadd.f32 %v5196, %v4631
    %v5198 = vadd.f32 %v5197, %v4632
    %v5199 = vadd.f32 %v5198, %v4633
    %v5200 = vadd.f32 %v5199, %v4634
    %v5201 = vadd.f32 %v5200, %v4635
    %v5202 = vadd.f32 %v5201, %v4636
    %v5203 = vadd.f32 %v5202, %v4637
    %v5204 = vadd.f32 %v5203, %v4638
    %v5205 = vadd.f32 %v5204, %v4639
    %v5206 = vadd.f32 %v5205, %v4640
    %v5207 = vadd.f32 %v5206, %v4641
    %v5208 = vadd.f32 %v5207, %v4642
    %v5209 = vadd.f32 %v5208, %v4643
    %v5210 = vadd.f32 %v5209, %v4644
    %v5211 = vadd.f32 %v5210, %v4645
    %v5212 = vadd.f32 %v5211, %v4646
    %v5213 = vadd.f32 %v5212, %v4647
    %v5214 = vadd.f32 %v5213, %v4648
    %v5215 = vadd.f32 %v5214, %v4649
    %v5216 = vrot.slane %v5215, 4
    %v5217 = vadd.f32 %v5215, %v5216
    %v5218 = vrot.slane %v5217, 2
    %v5219 = vadd.f32 %v5217, %v5218
    %v5220 = vrot.slane %v5219, 1
    %v5221 = vadd.f32 %v5219, %v5220
    %v5222 = vadd.f32 %v4650, %v4651
    %v5223 = vadd.f32 %v5222, %v4652
    %v5224 = vadd.f32 %v5223, %v4653
    %v5225 = vadd.f32 %v5224, %v4654
    %v5226 = vadd.f32 %v5225, %v4655
    %v5227 = vadd.f32 %v5226, %v4656
    %v5228 = vadd.f32 %v5227, %v4657
    %v5229 = vadd.f32 %v5228, %v4658
    %v5230 = vadd.f32 %v5229, %v4659
    %v5231 = vadd.f32 %v5230, %v4660
    %v5232 = vadd.f32 %v5231, %v4661
    %v5233 = vadd.f32 %v5232, %v4662
    %v5234 = vadd.f32 %v5233, %v4663
    %v5235 = vadd.f32 %v5234, %v4664
    %v5236 = vadd.f32 %v5235, %v4665
    %v5237 = vadd.f32 %v5236, %v4666
    %v5238 = vadd.f32 %v5237, %v4667
    %v5239 = vadd.f32 %v5238, %v4668
    %v5240 = vadd.f32 %v5239, %v4669
    %v5241 = vadd.f32 %v5240, %v4670
    %v5242 = vadd.f32 %v5241, %v4671
    %v5243 = vadd.f32 %v5242, %v4672
    %v5244 = vadd.f32 %v5243, %v4673
    %v5245 = vadd.f32 %v5244, %v4674
    %v5246 = vadd.f32 %v5245, %v4675
    %v5247 = vadd.f32 %v5246, %v4676
    %v5248 = vadd.f32 %v5247, %v4677
    %v5249 = vadd.f32 %v5248, %v4678
    %v5250 = vadd.f32 %v5249, %v4679
    %v5251 = vadd.f32 %v5250, %v4680
    %v5252 = vadd.f32 %v5251, %v4681
    %v5253 = vrot.slane %v5252, 4
    %v5254 = vadd.f32 %v5252, %v5253
    %v5255 = vrot.slane %v5254, 2
    %v5256 = vadd.f32 %v5254, %v5255
    %v5257 = vrot.slane %v5256, 1
    %v5258 = vadd.f32 %v5256, %v5257
    %v5259 = vadd.f32 %v4682, %v4683
    %v5260 = vadd.f32 %v5259, %v4684
    %v5261 = vadd.f32 %v5260, %v4685
    %v5262 = vadd.f32 %v5261, %v4686
    %v5263 = vadd.f32 %v5262, %v4687
    %v5264 = vadd.f32 %v5263, %v4688
    %v5265 = vadd.f32 %v5264, %v4689
    %v5266 = vadd.f32 %v5265, %v4690
    %v5267 = vadd.f32 %v5266, %v4691
    %v5268 = vadd.f32 %v5267, %v4692
    %v5269 = vadd.f32 %v5268, %v4693
    %v5270 = vadd.f32 %v5269, %v4694
    %v5271 = vadd.f32 %v5270, %v4695
    %v5272 = vadd.f32 %v5271, %v4696
    %v5273 = vadd.f32 %v5272, %v4697
    %v5274 = vadd.f32 %v5273, %v4698
    %v5275 = vadd.f32 %v5274, %v4699
    %v5276 = vadd.f32 %v5275, %v4700
    %v5277 = vadd.f32 %v5276, %v4701
    %v5278 = vadd.f32 %v5277, %v4702
    %v5279 = vadd.f32 %v5278, %v4703
    %v5280 = vadd.f32 %v5279, %v4704
    %v5281 = vadd.f32 %v5280, %v4705
    %v5282 = vadd.f32 %v5281, %v4706
    %v5283 = vadd.f32 %v5282, %v4707
    %v5284 = vadd.f32 %v5283, %v4708
    %v5285 = vadd.f32 %v5284, %v4709
    %v5286 = vadd.f32 %v5285, %v4710
    %v5287 = vadd.f32 %v5286, %v4711
    %v5288 = vadd.f32 %v5287, %v4712
    %v5289 = vadd.f32 %v5288, %v4713
    %v5290 = vrot.slane %v5289, 4
    %v5291 = vadd.f32 %v5289, %v5290
    %v5292 = vrot.slane %v5291, 2
    %v5293 = vadd.f32 %v5291, %v5292
    %v5294 = vrot.slane %v5293, 1
    %v5295 = vadd.f32 %v5293, %v5294
    %v5296 = vadd.f32 %v4714, %v4715
    %v5297 = vadd.f32 %v5296, %v4716
    %v5298 = vadd.f32 %v5297, %v4717
    %v5299 = vadd.f32 %v5298, %v4718
    %v5300 = vadd.f32 %v5299, %v4719
    %v5301 = vadd.f32 %v5300, %v4720
    %v5302 = vadd.f32 %v5301, %v4721
    %v5303 = vadd.f32 %v5302, %v4722
    %v5304 = vadd.f32 %v5303, %v4723
    %v5305 = vadd.f32 %v5304, %v4724
    %v5306 = vadd.f32 %v5305, %v4725
    %v5307 = vadd.f32 %v5306, %v4726
    %v5308 = vadd.f32 %v5307, %v4727
    %v5309 = vadd.f32 %v5308, %v4728
    %v5310 = vadd.f32 %v5309, %v4729
    %v5311 = vadd.f32 %v5310, %v4730
    %v5312 = vadd.f32 %v5311, %v4731
    %v5313 = vadd.f32 %v5312, %v4732
    %v5314 = vadd.f32 %v5313, %v4733
    %v5315 = vadd.f32 %v5314, %v4734
    %v5316 = vadd.f32 %v5315, %v4735
    %v5317 = vadd.f32 %v5316, %v4736
    %v5318 = vadd.f32 %v5317, %v4737
    %v5319 = vadd.f32 %v5318, %v4738
    %v5320 = vadd.f32 %v5319, %v4739
    %v5321 = vadd.f32 %v5320, %v4740
    %v5322 = vadd.f32 %v5321, %v4741
    %v5323 = vadd.f32 %v5322, %v4742
    %v5324 = vadd.f32 %v5323, %v4743
    %v5325 = vadd.f32 %v5324, %v4744
    %v5326 = vadd.f32 %v5325, %v4745
    %v5327 = vrot.slane %v5326, 4
    %v5328 = vadd.f32 %v5326, %v5327
    %v5329 = vrot.slane %v5328, 2
    %v5330 = vadd.f32 %v5328, %v5329
    %v5331 = vrot.slane %v5330, 1
    %v5332 = vadd.f32 %v5330, %v5331
    %v5333 = vadd.f32 %v4746, %v4747
    %v5334 = vadd.f32 %v5333, %v4748
    %v5335 = vadd.f32 %v5334, %v4749
    %v5336 = vadd.f32 %v5335, %v4750
    %v5337 = vadd.f32 %v5336, %v4751
    %v5338 = vadd.f32 %v5337, %v4752
    %v5339 = vadd.f32 %v5338, %v4753
    %v5340 = vadd.f32 %v5339, %v4754
    %v5341 = vadd.f32 %v5340, %v4755
    %v5342 = vadd.f32 %v5341, %v4756
    %v5343 = vadd.f32 %v5342, %v4757
    %v5344 = vadd.f32 %v5343, %v4758
    %v5345 = vadd.f32 %v5344, %v4759
    %v5346 = vadd.f32 %v5345, %v4760
    %v5347 = vadd.f32 %v5346, %v4761
    %v5348 = vadd.f32 %v5347, %v4762
    %v5349 = vadd.f32 %v5348, %v4763
    %v5350 = vadd.f32 %v5349, %v4764
    %v5351 = vadd.f32 %v5350, %v4765
    %v5352 = vadd.f32 %v5351, %v4766
    %v5353 = vadd.f32 %v5352, %v4767
    %v5354 = vadd.f32 %v5353, %v4768
    %v5355 = vadd.f32 %v5354, %v4769
    %v5356 = vadd.f32 %v5355, %v4770
    %v5357 = vadd.f32 %v5356, %v4771
    %v5358 = vadd.f32 %v5357, %v4772
    %v5359 = vadd.f32 %v5358, %v4773
    %v5360 = vadd.f32 %v5359, %v4774
    %v5361 = vadd.f32 %v5360, %v4775
    %v5362 = vadd.f32 %v5361, %v4776
    %v5363 = vadd.f32 %v5362, %v4777
    %v5364 = vrot.slane %v5363, 4
    %v5365 = vadd.f32 %v5363, %v5364
    %v5366 = vrot.slane %v5365, 2
    %v5367 = vadd.f32 %v5365, %v5366
    %v5368 = vrot.slane %v5367, 1
    %v5369 = vadd.f32 %v5367, %v5368
    %v5370 = vmul.f32 %v4814, 0.00390625
    %v5371 = vmul.f32 %v4851, 0.00390625
    %v5372 = vmul.f32 %v4888, 0.00390625
    %v5373 = vmul.f32 %v4925, 0.00390625
    %v5374 = vmul.f32 %v4962, 0.00390625
    %v5375 = vmul.f32 %v4999, 0.00390625
    %v5376 = vmul.f32 %v5036, 0.00390625
    %v5377 = vmul.f32 %v5073, 0.00390625
    %v5378 = vmul.f32 %v5110, 0.00390625
    %v5379 = vmul.f32 %v5147, 0.00390625
    %v5380 = vmul.f32 %v5184, 0.00390625
    %v5381 = vmul.f32 %v5221, 0.00390625
    %v5382 = vmul.f32 %v5258, 0.00390625
    %v5383 = vmul.f32 %v5295, 0.00390625
    %v5384 = vmul.f32 %v5332, 0.00390625
    %v5385 = vmul.f32 %v5369, 0.00390625
    %v5386 = vpack.c.bf16 %v5370, %v5370
    %v5387 = vpack.c.bf16 %v5371, %v5371
    %v5388 = vpack.c.bf16 %v5372, %v5372
    %v5389 = vpack.c.bf16 %v5373, %v5373
    %v5390 = vpack.c.bf16 %v5374, %v5374
    %v5391 = vpack.c.bf16 %v5375, %v5375
    %v5392 = vpack.c.bf16 %v5376, %v5376
    %v5393 = vpack.c.bf16 %v5377, %v5377
    %v5394 = vpack.c.bf16 %v5378, %v5378
    %v5395 = vpack.c.bf16 %v5379, %v5379
    %v5396 = vpack.c.bf16 %v5380, %v5380
    %v5397 = vpack.c.bf16 %v5381, %v5381
    %v5398 = vpack.c.bf16 %v5382, %v5382
    %v5399 = vpack.c.bf16 %v5383, %v5383
    %v5400 = vpack.c.bf16 %v5384, %v5384
    %v5401 = vpack.c.bf16 %v5385, %v5385
    %v5402 = vld [vmem:[#allocation7] sm:$0xf]
    %v5403 = vld [vmem:[#allocation7 + $0x4] sm:$0xf]
    %v5404 = vld [vmem:[#allocation7 + $0x8] sm:$0xf]
    %v5405 = vld [vmem:[#allocation7 + $0xc] sm:$0xf]
    %v5406 = vld [vmem:[#allocation7 + $0x10] sm:$0xf]
    %v5407 = vld [vmem:[#allocation7 + $0x14] sm:$0xf]
    %v5408 = vld [vmem:[#allocation7 + $0x18] sm:$0xf]
    %v5409 = vld [vmem:[#allocation7 + $0x1c] sm:$0xf]
    %v5410 = vld [vmem:[#allocation7 + $0x20] sm:$0xf]
    %v5411 = vld [vmem:[#allocation7 + $0x24] sm:$0xf]
    %v5412 = vld [vmem:[#allocation7 + $0x28] sm:$0xf]
    %v5413 = vld [vmem:[#allocation7 + $0x2c] sm:$0xf]
    %v5414 = vld [vmem:[#allocation7 + $0x30] sm:$0xf]
    %v5415 = vld [vmem:[#allocation7 + $0x34] sm:$0xf]
    %v5416 = vld [vmem:[#allocation7 + $0x38] sm:$0xf]
    %v5417 = vld [vmem:[#allocation7 + $0x3c] sm:$0xf]
    %v5418 = vld [vmem:[%s4] sm:$0x1]
    %v5420 = vlaneseq
    %v5421 = vshrl.u32 %v5420, 7
    %v5422 = vsub.s32 0, %v5421
    %v5423 = vrot.slane %v5418, %v5422
    %v5441 = vunpack.c.l.b16 %v5386
    %v5442 = vunpack.c.l.b16 %v5387
    %v5443 = vunpack.c.l.b16 %v5388
    %v5444 = vunpack.c.l.b16 %v5389
    %v5445 = vunpack.c.l.b16 %v5390
    %v5446 = vunpack.c.l.b16 %v5391
    %v5447 = vunpack.c.l.b16 %v5392
    %v5448 = vunpack.c.l.b16 %v5393
    %v5449 = vunpack.c.l.b16 %v5394
    %v5450 = vunpack.c.l.b16 %v5395
    %v5451 = vunpack.c.l.b16 %v5396
    %v5452 = vunpack.c.l.b16 %v5397
    %v5453 = vunpack.c.l.b16 %v5398
    %v5454 = vunpack.c.l.b16 %v5399
    %v5455 = vunpack.c.l.b16 %v5400
    %v5456 = vunpack.c.l.b16 %v5401
    %vm5457 = vcmask 1041409
    %v5458 = vsel %vm5457, %v5442, %v5441
    %vm5459 = vcmask 1042434
    %v5460 = vsel %vm5459, %v5443, %v5458
    %vm5461 = vcmask 1043459
    %v5462 = vsel %vm5461, %v5444, %v5460
    %vm5463 = vcmask 1044484
    %v5464 = vsel %vm5463, %v5445, %v5462
    %vm5465 = vcmask 1045509
    %v5466 = vsel %vm5465, %v5446, %v5464
    %vm5467 = vcmask 1046534
    %v5468 = vsel %vm5467, %v5447, %v5466
    %vm5469 = vcmask 1047559
    %v5470 = vsel %vm5469, %v5448, %v5468
    %v5471 = vsel %vm5457, %v5450, %v5449
    %v5472 = vsel %vm5459, %v5451, %v5471
    %v5473 = vsel %vm5461, %v5452, %v5472
    %v5474 = vsel %vm5463, %v5453, %v5473
    %v5475 = vsel %vm5465, %v5454, %v5474
    %v5476 = vsel %vm5467, %v5455, %v5475
    %v5477 = vsel %vm5469, %v5456, %v5476
    %v5478 = vpack.c.b16 %v5477, %v5470
    %v5496 = vunpack.c.l.b16 %v5402
    %v5497 = vunpack.c.l.b16 %v5403
    %v5498 = vunpack.c.l.b16 %v5404
    %v5499 = vunpack.c.l.b16 %v5405
    %v5500 = vunpack.c.l.b16 %v5406
    %v5501 = vunpack.c.l.b16 %v5407
    %v5502 = vunpack.c.l.b16 %v5408
    %v5503 = vunpack.c.l.b16 %v5409
    %v5504 = vunpack.c.l.b16 %v5410
    %v5505 = vunpack.c.l.b16 %v5411
    %v5506 = vunpack.c.l.b16 %v5412
    %v5507 = vunpack.c.l.b16 %v5413
    %v5508 = vunpack.c.l.b16 %v5414
    %v5509 = vunpack.c.l.b16 %v5415
    %v5510 = vunpack.c.l.b16 %v5416
    %v5511 = vunpack.c.l.b16 %v5417
    %v5512 = vpack.c.b16 %v5497, %v5496
    %v5513 = vpack.c.b16 %v5499, %v5498
    %v5514 = vpack.c.b16 %v5501, %v5500
    %v5515 = vpack.c.b16 %v5503, %v5502
    %v5516 = vpack.c.b16 %v5505, %v5504
    %v5517 = vpack.c.b16 %v5507, %v5506
    %v5518 = vpack.c.b16 %v5509, %v5508
    %v5519 = vpack.c.b16 %v5511, %v5510
    %5528 = vmatprep.subr.bf16.mxu0 0
    %5529 = vmatpush1.bf16.msra.mxu0 %v5512
    %5530 = vmatprep.subr.bf16.mxu0 0
    %5531 = vmatpush1.bf16.msra.mxu0 %v5513
    %5532 = vmatprep.subr.bf16.mxu0 0
    %5533 = vmatpush1.bf16.msra.mxu0 %v5514
    %5534 = vmatprep.subr.bf16.mxu0 0
    %5535 = vmatpush1.bf16.msra.mxu0 %v5515
    %5536 = vmatprep.subr.bf16.mxu0 0
    %5537 = vmatpush1.bf16.msra.mxu0 %v5516
    %5538 = vmatprep.subr.bf16.mxu0 0
    %5539 = vmatpush1.bf16.msra.mxu0 %v5517
    %5540 = vmatprep.subr.bf16.mxu0 0
    %5541 = vmatpush1.bf16.msra.mxu0 %v5518
    %5542 = vmatprep.subr.bf16.mxu0 0
    %5543 = vmatpush1.bf16.msra.mxu0 %v5519
    %5544 = vmatprep.subr.bf16.mxu0 0
    %5545 = vmatpush1.bf16.msra.mxu0 0
    %5546 = vmatprep.subr.bf16.mxu0 0
    %5547 = vmatpush1.bf16.msra.mxu0 0
    %5548 = vmatprep.subr.bf16.mxu0 0
    %5549 = vmatpush1.bf16.msra.mxu0 0
    %5550 = vmatprep.subr.bf16.mxu0 0
    %5551 = vmatpush1.bf16.msra.mxu0 0
    %5552 = vmatprep.subr.bf16.mxu0 0
    %5553 = vmatpush1.bf16.msra.mxu0 0
    %5554 = vmatprep.subr.bf16.mxu0 0
    %5555 = vmatpush1.bf16.msra.mxu0 0
    %5556 = vmatprep.subr.bf16.mxu0 0
    %5557 = vmatpush1.bf16.msra.mxu0 0
    %5558 = vmatprep.subr.bf16.mxu0 0
    %5559 = vmatpush1.bf16.msra.mxu0 0
    %5560 = vmatprep.mubr.bf16.mxu0 0
    %5561 = vmatmul.mubr.bf16.gmra.mrb[0].mxu0 %v5478
    %v5562 = vpop.f32.mrb[0].mxu0
    %v5563 = vadd.f32 %v5423, %v5562
    %v5564 = vpop.f32.mrb[0].mxu0
    %v5565 = vpop.f32.mrb[0].mxu0
    %v5566 = vadd.f32 %v5423, %v5565
    %v5567 = vpop.f32.mrb[0].mxu0
    %5568 = vdwg.mxu0
    %v5569 = vmax.f32 %v5563, 0.0
    %v5570 = vmax.f32 %v5566, 0.0
    %v5571 = vld [vmem:[%s5] sm:$0xff]
    %v5572 = vld [vmem:[%s5 + $0x8] sm:$0xff]
    %v5573 = vmul.f32 %v5569, %v5571
    %v5574 = vmul.f32 %v5570, %v5572
    %5575 = vst [vmem:[#allocation8] sm:$0xff] %v5573
    %5576 = vst [vmem:[#allocation8 + $0x8] sm:$0xff] %v5574
    // Predicated region
    $region38: #{tpu_custom_call.1} parent=1 // pred_check
      _
    $region39: #{tpu_custom_call.1} parent=1 // pred_check_branch
      %5578 = sbr.rel (0) target = $region41
    $region40: #{tpu_custom_call.1} parent=1 // pred_region
      %s5580 = ssub.s32 256, 256
      %5581 = vsyncadd [#allocation4], %s5580
      %s5582 = sshll.u32 [#allocation8], 4
      %s5583 = int_to_ptr.vmem [resolvable:$true] %s5582
      %5588 = dma.vmem_to_hbm [thread:$0]  %s5583, 256, %s6, [#allocation4], 128, 128, 8
    $region41: #{tpu_custom_call.1} parent=1 // pred_fallthru
      _
    // Predicated region
    $region42: #{tpu_custom_call.1} parent=1 // pred_check
      _
    $region43: #{tpu_custom_call.1} parent=1 // pred_check_branch
      %5590 = sbr.rel (0) target = $region45
    $region44: #{tpu_custom_call.1} parent=1 // pred_region
      %5591 = dma.done [#allocation4], 256
    $region45: #{tpu_custom_call.1} parent=1 // pred_fallthru
      _
    %5592 = vsyncpa [#allocation3], 1
    %5593 = vsyncpa [#allocation6], 1
    %5594 = vsyncpa [#allocation4], 1

</llo_original>
